<compile_context>
chip_gen: v6e
topology: v6e:2x2x1
jax: 0.10.0
libtpu: 0.0.40
codegen_flags: <defaults>
</compile_context>

<pallas_src>
import functools

import jax
import jax.numpy as jnp
from jax import lax
from jax.experimental import pallas as pl
from jax.experimental.pallas import tpu as pltpu


# ---------------------------------------------------------------------------
# Pallas kernel: fused depthwise blur + 3x3 conv for NI images per grid step.
#   x_ref : (NI, H, W, Cin)    bf16 NHWC activations (unpadded)
#   w_ref : (3, 3*Cin, Cout)   conv weight grouped by ki, rows ordered (kj, cin), bf16
#   b_ref : (1, Cout)          conv bias, f32
#   o_ref : (NI, W, H*Cout)    f32 lane-dense packing   (pack_output=True)
#           (NI, H*W, Cout)    f32 natural store        (pack_output=False)
# ---------------------------------------------------------------------------
def blurpool_conv_kernel(x_ref, w_ref, b_ref, o_ref, *, pack_output):
    ni, H, W, cin = x_ref.shape
    cout = w_ref.shape[-1]

    # --- load + upcast (blur arithmetic in f32: v5e has no bf16 VALU) ---------
    x = x_ref[...].astype(jnp.float32)                       # (NI, H, W, Cin)

    # --- zero-pad by 1 (blur padding) via zero-concat: exact zero ring, no
    # --- iota/where mask and no wrapper-side jnp.pad HBM pass. ----------------
    zc = jnp.zeros((ni, H, 1, cin), jnp.float32)
    zr = jnp.zeros((ni, 1, W + 2, cin), jnp.float32)
    xp = jnp.concatenate(
        [zr, jnp.concatenate([zc, x, zc], axis=2), zr], axis=1)   # (NI, H+2, W+2, Cin)

    # --- separable [1,2,1] x [1,2,1] / 16 binomial blur, "valid" over the pad-1
    # --- input -> exactly PyTorch's pad-1 depthwise blur output (H, W). -------
    th = xp[:, :, 0:W, :] + 2.0 * xp[:, :, 1:W + 1, :] + xp[:, :, 2:W + 2, :]
    blur = (th[:, 0:H] + 2.0 * th[:, 1:H + 1] + th[:, 2:H + 2]) * (1.0 / 16.0)
    blur = blur.astype(jnp.bfloat16)                          # MXU operand dtype

    # --- zero-pad the blurred map by 1 (conv padding), again via zero-concat. -
    zc = jnp.zeros((ni, H, 1, cin), jnp.bfloat16)
    zr = jnp.zeros((ni, 1, W + 2, cin), jnp.bfloat16)
    bp = jnp.concatenate(
        [zr, jnp.concatenate([zc, blur, zc], axis=2), zr], axis=1)  # (NI, H+2, W+2, Cin)

    # --- 3x3 conv as 3 accumulating matmuls grouped by ki (K = 3*Cin each).
    # --- The 3 kj column-shifts are concatenated along channels once, so no
    # --- (M, 9*Cin) im2col buffer / 9-way concat is ever materialized. --------
    cols = jnp.concatenate([bp[:, :, kj:kj + W, :] for kj in range(3)],
                           axis=-1)                           # (NI, H+2, W, 3*Cin)

    m = ni * H * W
    acc = None
    for ki in range(3):                                       # static unroll: 3 dots
        lhs = cols[:, ki:ki + H].reshape(m, 3 * cin)          # (M, 3*Cin) bf16
        part = jnp.dot(lhs, w_ref[ki], preferred_element_type=jnp.float32)
        acc = part if acc is None else acc + part
    acc = acc + b_ref[...]                                    # (M, Cout) f32, bias bcast

    if pack_output:
        # Lane-dense store: pack (h, c) onto the 128-lane axis so the store is a
        # full-width vst.  Single reshape -> transpose -> reshape (review item 2).
        y = acc.reshape(ni, H, W, cout)
        y = jnp.transpose(y, (0, 2, 1, 3)).reshape(ni, W, H * cout)
        o_ref[...] = y.astype(o_ref.dtype)
    else:
        # Natural store: already lane-dense whenever Cout >= 128.
        o_ref[...] = acc.reshape(ni, H * W, cout).astype(o_ref.dtype)


# ---------------------------------------------------------------------------
# Wrapper: layout conversion + pallas_call plumbing.
# ---------------------------------------------------------------------------
@functools.partial(jax.jit, static_argnames=("images_per_step",))
def blurpool_conv2d(x_nchw, conv_w_oihw, conv_b, *, images_per_step=None):
    """x_nchw: (N, Cin, H, W); conv_w_oihw: (Cout, Cin, 3, 3); conv_b: (Cout,)."""
    N, Cin, H, W = x_nchw.shape
    Cout = conv_w_oihw.shape[0]

    # Fold the whole (tiny) batch into one grid step by default: one tall matmul
    # (M = N*H*W) amortizes the per-step pipeline overhead.  For large batches a
    # caller can request several steps (>=2 keeps both v7x TensorCores busy).
    ni = N if images_per_step is None else int(images_per_step)
    assert N % ni == 0, (N, ni)
    steps = N // ni

    # NCHW -> NHWC (channels on the lane axis), bf16 to halve activation HBM bytes.
    # Zero-padding happens inside the kernel (no extra jnp.pad HBM pass).
    # TODO(synk): accept NHWC activations upstream to drop this transpose pass.
    x_nhwc = jnp.transpose(x_nchw, (0, 2, 3, 1)).astype(jnp.bfloat16)

    # (Cout, Cin, 3, 3) -> (ki, kj, cin, cout) -> (3, 3*Cin, Cout): one K=3*Cin
    # weight slab per ki tap; row order (kj, cin) matches the in-kernel packing.
    # TODO(synk): for realistic shapes pad K / Cout toward the MXU width (128/256).
    w3 = (jnp.transpose(conv_w_oihw, (2, 3, 1, 0))
          .reshape(3, 3 * Cin, Cout).astype(jnp.bfloat16))
    b2 = conv_b.reshape(1, Cout).astype(jnp.float32)

    # Lane-dense repack only pays off for narrow Cout; with Cout >= 128 the natural
    # (H*W, Cout) store is already a full-width vst (review item 3).
    pack_output = (Cout < 128) and (H * Cout) % 128 == 0 and W % 8 == 0

    if pack_output:
        out_shape = jax.ShapeDtypeStruct((N, W, H * Cout), jnp.float32)
        out_spec = pl.BlockSpec((ni, W, H * Cout), lambda g: (g, 0, 0))
    else:
        out_shape = jax.ShapeDtypeStruct((N, H * W, Cout), jnp.float32)
        out_spec = pl.BlockSpec((ni, H * W, Cout), lambda g: (g, 0, 0))

    flops = N * H * W * (2 * 9 * Cin * Cout + 10 * Cin)
    bytes_accessed = (x_nhwc.size * 2 + w3.size * 2 + b2.size * 4
                      + N * H * W * Cout * 4)

    out = pl.pallas_call(
        functools.partial(blurpool_conv_kernel, pack_output=pack_output),
        out_shape=out_shape,
        grid=(steps,),
        in_specs=[
            pl.BlockSpec((ni, H, W, Cin), lambda g: (g, 0, 0, 0)),
            pl.BlockSpec((3, 3 * Cin, Cout), lambda g: (0, 0, 0)),
            pl.BlockSpec((1, Cout), lambda g: (0, 0)),
        ],
        out_specs=out_spec,
        compiler_params=pltpu.CompilerParams(
            dimension_semantics=("parallel",)),
        # TODO(synk): at realistic shapes add H-strip tiling (4-row halo via the
        # index_map) and explicit vmem_limit_bytes so the footprint fits v7x 64 MiB.
        cost_estimate=pl.CostEstimate(
            flops=flops, transcendentals=0, bytes_accessed=bytes_accessed),
    )(x_nhwc, w3, b2)

    if pack_output:
        # Lane-dense packing [n, w, h*Cout + c] -> NCHW (reshape + transpose only).
        return jnp.transpose(out.reshape(N, W, H, Cout), (0, 3, 2, 1))
    return jnp.transpose(out.reshape(N, H, W, Cout), (0, 3, 1, 2))


# ---------------------------------------------------------------------------
# Pure-JAX reference (lax conv, all f32) matching the PyTorch module.
# ---------------------------------------------------------------------------
def reference(x_nchw, conv_w_oihw, conv_b):
    N, Cin, H, W = x_nchw.shape
    blur1 = jnp.array([[1.0, 2.0, 1.0],
                       [2.0, 4.0, 2.0],
                       [1.0, 2.0, 1.0]], jnp.float32) / 16.0
    blur_w = jnp.tile(blur1[None, None], (Cin, 1, 1, 1))          # (Cin, 1, 3, 3)
    blurred = lax.conv_general_dilated(
        x_nchw.astype(jnp.float32), blur_w, window_strides=(1, 1),
        padding=((1, 1), (1, 1)),
        dimension_numbers=("NCHW", "OIHW", "NCHW"),
        feature_group_count=Cin)
    out = lax.conv_general_dilated(
        blurred, conv_w_oihw.astype(jnp.float32), window_strides=(1, 1),
        padding=((1, 1), (1, 1)),
        dimension_numbers=("NCHW", "OIHW", "NCHW"))
    return out + conv_b.reshape(1, -1, 1, 1).astype(jnp.float32)


if __name__ == "__main__":
    # Synthetic deterministic setup: conv = nn.Conv2d(4, 8, 3, stride=1, padding=1)
    N, Cin, H, W, Cout = 2, 4, 16, 16, 8
    key = jax.random.PRNGKey(0)
    kx, kw, kb = jax.random.split(key, 3)

    x = jax.random.normal(kx, (N, Cin, H, W), jnp.float32)
    conv_w = jax.random.normal(kw, (Cout, Cin, 3, 3), jnp.float32) * 0.1
    conv_b = jax.random.normal(kb, (Cout,), jnp.float32) * 0.1

    out = jax.block_until_ready(blurpool_conv2d(x, conv_w, conv_b))
    assert out.shape == (N, Cout, H, W), out.shape

    ref = reference(x, conv_w, conv_b)
    # bf16 activations + bf16 MXU operands with f32 accumulation; tolerance sized
    # for bf16 input/operand rounding over a K=36 reduction.
    max_err = float(jnp.max(jnp.abs(out - ref)))
    assert jnp.allclose(out, ref, rtol=1e-2, atol=1e-2), max_err

    print("KERNEL_OK")
</pallas_src>

<mosaic_0001>
module attributes {stable_mosaic.version = 11 : i64} {
  func.func @blurpool_conv_kernel(%arg0: i32, %arg1: memref<2x16x16x4xbf16, #tpu.memory_space<vmem>>, %arg2: memref<3x12x8xbf16, #tpu.memory_space<vmem>>, %arg3: memref<1x8xf32, #tpu.memory_space<vmem>>, %arg4: memref<2x16x128xf32, #tpu.memory_space<vmem>>) attributes {dimension_semantics = [#tpu.dimension_semantics<parallel>], iteration_bounds = array<i64: 1>, scalar_prefetch = 0 : i64, scratch_operands = 0 : i64, tpu.core_type = #tpu.core_type<tc>, window_params = [{transform_indices = @transform_0, window_bounds = array<i64: 2, 16, 16, 4>}, {pipeline_mode = #tpu.pipeline_mode<synchronous>, transform_indices = @transform_1, window_bounds = array<i64: 3, 12, 8>}, {pipeline_mode = #tpu.pipeline_mode<synchronous>, transform_indices = @transform_2, window_bounds = array<i64: 1, 8>}, {transform_indices = @transform_3, window_bounds = array<i64: 2, 16, 128>}]} {
    %c0 = arith.constant 0 : index
    %c0_0 = arith.constant 0 : index
    %c0_1 = arith.constant 0 : index
    %c0_2 = arith.constant 0 : index
    %0 = vector.load %arg1[%c0, %c0_0, %c0_1, %c0_2] : memref<2x16x16x4xbf16, #tpu.memory_space<vmem>>, vector<2x16x16x4xbf16>
    %1 = arith.extf %0 : vector<2x16x16x4xbf16> to vector<2x16x16x4xf32>
    %cst = arith.constant 0.000000e+00 : f32
    %2 = vector.broadcast %cst : f32 to vector<2x16x1x4xf32>
    %cst_3 = arith.constant 0.000000e+00 : f32
    %3 = vector.broadcast %cst_3 : f32 to vector<2x1x18x4xf32>
    %4 = tpu.concatenate %2, %1, %2 in 2 : vector<2x16x1x4xf32>, vector<2x16x16x4xf32>, vector<2x16x1x4xf32> -> vector<2x16x18x4xf32>
    %5 = tpu.concatenate %3, %4, %3 in 1 : vector<2x1x18x4xf32>, vector<2x16x18x4xf32>, vector<2x1x18x4xf32> -> vector<2x18x18x4xf32>
    %6 = vector.extract_strided_slice %5 {offsets = [0, 0, 0, 0], sizes = [2, 18, 16, 4], strides = [1, 1, 1, 1]} : vector<2x18x18x4xf32> to vector<2x18x16x4xf32>
    %7 = vector.extract_strided_slice %5 {offsets = [0, 0, 1, 0], sizes = [2, 18, 16, 4], strides = [1, 1, 1, 1]} : vector<2x18x18x4xf32> to vector<2x18x16x4xf32>
    %cst_4 = arith.constant 2.000000e+00 : f32
    %8 = vector.broadcast %cst_4 : f32 to vector<2x18x16x4xf32>
    %9 = arith.mulf %8, %7 : vector<2x18x16x4xf32>
    %10 = arith.addf %6, %9 : vector<2x18x16x4xf32>
    %11 = vector.extract_strided_slice %5 {offsets = [0, 0, 2, 0], sizes = [2, 18, 16, 4], strides = [1, 1, 1, 1]} : vector<2x18x18x4xf32> to vector<2x18x16x4xf32>
    %12 = arith.addf %10, %11 : vector<2x18x16x4xf32>
    %13 = vector.extract_strided_slice %12 {offsets = [0, 0, 0, 0], sizes = [2, 16, 16, 4], strides = [1, 1, 1, 1]} : vector<2x18x16x4xf32> to vector<2x16x16x4xf32>
    %14 = vector.extract_strided_slice %12 {offsets = [0, 1, 0, 0], sizes = [2, 16, 16, 4], strides = [1, 1, 1, 1]} : vector<2x18x16x4xf32> to vector<2x16x16x4xf32>
    %cst_5 = arith.constant 2.000000e+00 : f32
    %15 = vector.broadcast %cst_5 : f32 to vector<2x16x16x4xf32>
    %16 = arith.mulf %15, %14 : vector<2x16x16x4xf32>
    %17 = arith.addf %13, %16 : vector<2x16x16x4xf32>
    %18 = vector.extract_strided_slice %12 {offsets = [0, 2, 0, 0], sizes = [2, 16, 16, 4], strides = [1, 1, 1, 1]} : vector<2x18x16x4xf32> to vector<2x16x16x4xf32>
    %19 = arith.addf %17, %18 : vector<2x16x16x4xf32>
    %cst_6 = arith.constant 6.250000e-02 : f32
    %20 = vector.broadcast %cst_6 : f32 to vector<2x16x16x4xf32>
    %21 = arith.mulf %19, %20 : vector<2x16x16x4xf32>
    %22 = arith.truncf %21 : vector<2x16x16x4xf32> to vector<2x16x16x4xbf16>
    %cst_7 = arith.constant 0.000000e+00 : bf16
    %23 = vector.broadcast %cst_7 : bf16 to vector<2x16x1x4xbf16>
    %cst_8 = arith.constant 0.000000e+00 : bf16
    %24 = vector.broadcast %cst_8 : bf16 to vector<2x1x18x4xbf16>
    %25 = tpu.concatenate %23, %22, %23 in 2 : vector<2x16x1x4xbf16>, vector<2x16x16x4xbf16>, vector<2x16x1x4xbf16> -> vector<2x16x18x4xbf16>
    %26 = tpu.concatenate %24, %25, %24 in 1 : vector<2x1x18x4xbf16>, vector<2x16x18x4xbf16>, vector<2x1x18x4xbf16> -> vector<2x18x18x4xbf16>
    %27 = vector.extract_strided_slice %26 {offsets = [0, 0, 0, 0], sizes = [2, 18, 16, 4], strides = [1, 1, 1, 1]} : vector<2x18x18x4xbf16> to vector<2x18x16x4xbf16>
    %28 = vector.extract_strided_slice %26 {offsets = [0, 0, 1, 0], sizes = [2, 18, 16, 4], strides = [1, 1, 1, 1]} : vector<2x18x18x4xbf16> to vector<2x18x16x4xbf16>
    %29 = vector.extract_strided_slice %26 {offsets = [0, 0, 2, 0], sizes = [2, 18, 16, 4], strides = [1, 1, 1, 1]} : vector<2x18x18x4xbf16> to vector<2x18x16x4xbf16>
    %30 = tpu.concatenate %27, %28, %29 in 3 : vector<2x18x16x4xbf16>, vector<2x18x16x4xbf16>, vector<2x18x16x4xbf16> -> vector<2x18x16x12xbf16>
    %31 = vector.extract_strided_slice %30 {offsets = [0, 0, 0, 0], sizes = [2, 16, 16, 12], strides = [1, 1, 1, 1]} : vector<2x18x16x12xbf16> to vector<2x16x16x12xbf16>
    %32 = vector.shape_cast %31 : vector<2x16x16x12xbf16> to vector<512x12xbf16>
    %c0_9 = arith.constant 0 : index
    %c0_10 = arith.constant 0 : index
    %c0_11 = arith.constant 0 : index
    %33 = vector.load %arg2[%c0_9, %c0_10, %c0_11] : memref<3x12x8xbf16, #tpu.memory_space<vmem>>, vector<1x12x8xbf16>
    %34 = vector.shape_cast %33 : vector<1x12x8xbf16> to vector<12x8xbf16>
    %cst_12 = arith.constant dense<0.000000e+00> : vector<512x8xf32>
    %35 = tpu.matmul %32, %34, %cst_12 {dimension_numbers = #tpu.dot_dimension_numbers<[1], [0], [0], [1], [0, 0, 1, 1], [], []>} : vector<512x12xbf16>, vector<12x8xbf16>, vector<512x8xf32> -> vector<512x8xf32>
    %36 = vector.extract_strided_slice %30 {offsets = [0, 1, 0, 0], sizes = [2, 16, 16, 12], strides = [1, 1, 1, 1]} : vector<2x18x16x12xbf16> to vector<2x16x16x12xbf16>
    %37 = vector.shape_cast %36 : vector<2x16x16x12xbf16> to vector<512x12xbf16>
    %c1 = arith.constant 1 : index
    %c0_13 = arith.constant 0 : index
    %c0_14 = arith.constant 0 : index
    %38 = vector.load %arg2[%c1, %c0_13, %c0_14] : memref<3x12x8xbf16, #tpu.memory_space<vmem>>, vector<1x12x8xbf16>
    %39 = vector.shape_cast %38 : vector<1x12x8xbf16> to vector<12x8xbf16>
    %cst_15 = arith.constant dense<0.000000e+00> : vector<512x8xf32>
    %40 = tpu.matmul %37, %39, %cst_15 {dimension_numbers = #tpu.dot_dimension_numbers<[1], [0], [0], [1], [0, 0, 1, 1], [], []>} : vector<512x12xbf16>, vector<12x8xbf16>, vector<512x8xf32> -> vector<512x8xf32>
    %41 = arith.addf %35, %40 : vector<512x8xf32>
    %42 = vector.extract_strided_slice %30 {offsets = [0, 2, 0, 0], sizes = [2, 16, 16, 12], strides = [1, 1, 1, 1]} : vector<2x18x16x12xbf16> to vector<2x16x16x12xbf16>
    %43 = vector.shape_cast %42 : vector<2x16x16x12xbf16> to vector<512x12xbf16>
    %c2 = arith.constant 2 : index
    %c0_16 = arith.constant 0 : index
    %c0_17 = arith.constant 0 : index
    %44 = vector.load %arg2[%c2, %c0_16, %c0_17] : memref<3x12x8xbf16, #tpu.memory_space<vmem>>, vector<1x12x8xbf16>
    %45 = vector.shape_cast %44 : vector<1x12x8xbf16> to vector<12x8xbf16>
    %cst_18 = arith.constant dense<0.000000e+00> : vector<512x8xf32>
    %46 = tpu.matmul %43, %45, %cst_18 {dimension_numbers = #tpu.dot_dimension_numbers<[1], [0], [0], [1], [0, 0, 1, 1], [], []>} : vector<512x12xbf16>, vector<12x8xbf16>, vector<512x8xf32> -> vector<512x8xf32>
    %47 = arith.addf %41, %46 : vector<512x8xf32>
    %c0_19 = arith.constant 0 : index
    %c0_20 = arith.constant 0 : index
    %48 = vector.load %arg3[%c0_19, %c0_20] : memref<1x8xf32, #tpu.memory_space<vmem>>, vector<1x8xf32>
    %49 = vector.broadcast %48 : vector<1x8xf32> to vector<512x8xf32>
    %50 = arith.addf %47, %49 : vector<512x8xf32>
    %51 = vector.shape_cast %50 : vector<512x8xf32> to vector<2x16x16x8xf32>
    %52 = tpu.transpose %51, [0, 2, 1, 3] : vector<2x16x16x8xf32> -> vector<2x16x16x8xf32>
    %53 = vector.shape_cast %52 : vector<2x16x16x8xf32> to vector<2x16x128xf32>
    %c0_21 = arith.constant 0 : index
    %c0_22 = arith.constant 0 : index
    %c0_23 = arith.constant 0 : index
    %54 = vector.load %arg4[%c0_21, %c0_22, %c0_23] : memref<2x16x128xf32, #tpu.memory_space<vmem>>, vector<2x16x128xf32>
    tpu.vector_store %arg4[%c0_21, %c0_22, %c0_23], %53 {strides = array<i32>} : memref<2x16x128xf32, #tpu.memory_space<vmem>>, vector<2x16x128xf32>,
    return
  }
  func.func @transform_0(%arg0: i32) -> (i32, i32, i32, i32) {
    %c0_i32 = arith.constant 0 : i32
    %c0_i32_0 = arith.constant 0 : i32
    %c0_i32_1 = arith.constant 0 : i32
    %c0_i32_2 = arith.constant 0 : i32
    return %arg0, %c0_i32, %c0_i32_0, %c0_i32_1 : i32, i32, i32, i32
  }
  func.func @transform_1(%arg0: i32) -> (i32, i32, i32) {
    %c0_i32 = arith.constant 0 : i32
    %c0_i32_0 = arith.constant 0 : i32
    %c0_i32_1 = arith.constant 0 : i32
    %c0_i32_2 = arith.constant 0 : i32
    return %c0_i32, %c0_i32_0, %c0_i32_1 : i32, i32, i32
  }
  func.func @transform_2(%arg0: i32) -> (i32, i32) {
    %c0_i32 = arith.constant 0 : i32
    %c0_i32_0 = arith.constant 0 : i32
    %c0_i32_1 = arith.constant 0 : i32
    return %c0_i32, %c0_i32_0 : i32, i32
  }
  func.func @transform_3(%arg0: i32) -> (i32, i32, i32) {
    %c0_i32 = arith.constant 0 : i32
    %c0_i32_0 = arith.constant 0 : i32
    %c0_i32_1 = arith.constant 0 : i32
    return %arg0, %c0_i32, %c0_i32_0 : i32, i32, i32
  }
}

</mosaic_0001>

<llo_original>
// kernel: blurpool_conv2d.1
$region0: #{blurpool_conv2d.1}
  #allocation0 [shape = 'u32[]', space=smem, size = 0x4, offset = 0x4, fixed_abs, tag = 'smem constant byte address 0x4 - core index']
  #allocation1 [shape = 'u32[144,128]{1,0:T(1,128)}', space=vmem, size = 0x12000, scoped, tag = 'internal scratch']
  %s0 = inlined_call_operand.vmem [shape: bf16[2,16,16,4], index: 0, kind: input, shape index: {}]
  %s1 = inlined_call_operand.vmem [shape: bf16[3,12,8], index: 1, kind: input, shape index: {}]
  %s2 = inlined_call_operand.vmem [shape: f32[1,8], index: 2, kind: input, shape index: {}]
  %s3 = inlined_call_operand.vmem [shape: f32[2,16,128], index: 3, kind: output, shape index: {}]
  %s4 = sld [smem:[#allocation0]]
  $region22: #{blurpool_conv2d.1} parent=0
    _
  %s6 = ssub.s32 1, %s4
  %s7 = scalar_select 0, %s6, %s4
  // Predicated region
  $region2: #{blurpool_conv2d.1} parent=0 // pred_check
    _
  $region3: #{blurpool_conv2d.1} parent=0 // pred_check_branch
    %9 = sbr.rel (0) target = $region5
  $region4: #{blurpool_conv2d.1} parent=0 // pred_region
    _
  $region5: #{blurpool_conv2d.1} parent=0 // pred_fallthru
    _
  // Predicated region
  $region6: #{blurpool_conv2d.1} parent=0 // pred_check
    _
  $region7: #{blurpool_conv2d.1} parent=0 // pred_check_branch
    %11 = sbr.rel (0) target = $region9
  $region8: #{blurpool_conv2d.1} parent=0 // pred_region
    _
  $region9: #{blurpool_conv2d.1} parent=0 // pred_fallthru
    _
  // Predicated region
  $region10: #{blurpool_conv2d.1} parent=0 // pred_check
    _
  $region11: #{blurpool_conv2d.1} parent=0 // pred_check_branch
    %13 = sbr.rel (0) target = $region13
  $region12: #{blurpool_conv2d.1} parent=0 // pred_region
    _
  $region13: #{blurpool_conv2d.1} parent=0 // pred_fallthru
    _
  %v15 = vld [vmem:[%s0] sm:$0xf]
  %v16 = vld [vmem:[%s0 + $0x4] sm:$0xf]
  %v17 = vld [vmem:[%s0 + $0x8] sm:$0xf]
  %v18 = vld [vmem:[%s0 + $0xc] sm:$0xf]
  %v19 = vld [vmem:[%s0 + $0x10] sm:$0xf]
  %v20 = vld [vmem:[%s0 + $0x14] sm:$0xf]
  %v21 = vld [vmem:[%s0 + $0x18] sm:$0xf]
  %v22 = vld [vmem:[%s0 + $0x1c] sm:$0xf]
  %v23 = vld [vmem:[%s0 + $0x20] sm:$0xf]
  %v24 = vld [vmem:[%s0 + $0x24] sm:$0xf]
  %v25 = vld [vmem:[%s0 + $0x28] sm:$0xf]
  %v26 = vld [vmem:[%s0 + $0x2c] sm:$0xf]
  %v27 = vld [vmem:[%s0 + $0x30] sm:$0xf]
  %v28 = vld [vmem:[%s0 + $0x34] sm:$0xf]
  %v29 = vld [vmem:[%s0 + $0x38] sm:$0xf]
  %v30 = vld [vmem:[%s0 + $0x3c] sm:$0xf]
  %v31 = vld [vmem:[%s0 + $0x40] sm:$0xf]
  %v32 = vld [vmem:[%s0 + $0x44] sm:$0xf]
  %v33 = vld [vmem:[%s0 + $0x48] sm:$0xf]
  %v34 = vld [vmem:[%s0 + $0x4c] sm:$0xf]
  %v35 = vld [vmem:[%s0 + $0x50] sm:$0xf]
  %v36 = vld [vmem:[%s0 + $0x54] sm:$0xf]
  %v37 = vld [vmem:[%s0 + $0x58] sm:$0xf]
  %v38 = vld [vmem:[%s0 + $0x5c] sm:$0xf]
  %v39 = vld [vmem:[%s0 + $0x60] sm:$0xf]
  %v40 = vld [vmem:[%s0 + $0x64] sm:$0xf]
  %v41 = vld [vmem:[%s0 + $0x68] sm:$0xf]
  %v42 = vld [vmem:[%s0 + $0x6c] sm:$0xf]
  %v43 = vld [vmem:[%s0 + $0x70] sm:$0xf]
  %v44 = vld [vmem:[%s0 + $0x74] sm:$0xf]
  %v45 = vld [vmem:[%s0 + $0x78] sm:$0xf]
  %v46 = vld [vmem:[%s0 + $0x7c] sm:$0xf]
  %v47 = vld [vmem:[%s0 + $0x80] sm:$0xf]
  %v48 = vld [vmem:[%s0 + $0x84] sm:$0xf]
  %v49 = vld [vmem:[%s0 + $0x88] sm:$0xf]
  %v50 = vld [vmem:[%s0 + $0x8c] sm:$0xf]
  %v51 = vld [vmem:[%s0 + $0x90] sm:$0xf]
  %v52 = vld [vmem:[%s0 + $0x94] sm:$0xf]
  %v53 = vld [vmem:[%s0 + $0x98] sm:$0xf]
  %v54 = vld [vmem:[%s0 + $0x9c] sm:$0xf]
  %v55 = vld [vmem:[%s0 + $0xa0] sm:$0xf]
  %v56 = vld [vmem:[%s0 + $0xa4] sm:$0xf]
  %v57 = vld [vmem:[%s0 + $0xa8] sm:$0xf]
  %v58 = vld [vmem:[%s0 + $0xac] sm:$0xf]
  %v59 = vld [vmem:[%s0 + $0xb0] sm:$0xf]
  %v60 = vld [vmem:[%s0 + $0xb4] sm:$0xf]
  %v61 = vld [vmem:[%s0 + $0xb8] sm:$0xf]
  %v62 = vld [vmem:[%s0 + $0xbc] sm:$0xf]
  %v63 = vld [vmem:[%s0 + $0xc0] sm:$0xf]
  %v64 = vld [vmem:[%s0 + $0xc4] sm:$0xf]
  %v65 = vld [vmem:[%s0 + $0xc8] sm:$0xf]
  %v66 = vld [vmem:[%s0 + $0xcc] sm:$0xf]
  %v67 = vld [vmem:[%s0 + $0xd0] sm:$0xf]
  %v68 = vld [vmem:[%s0 + $0xd4] sm:$0xf]
  %v69 = vld [vmem:[%s0 + $0xd8] sm:$0xf]
  %v70 = vld [vmem:[%s0 + $0xdc] sm:$0xf]
  %v71 = vld [vmem:[%s0 + $0xe0] sm:$0xf]
  %v72 = vld [vmem:[%s0 + $0xe4] sm:$0xf]
  %v73 = vld [vmem:[%s0 + $0xe8] sm:$0xf]
  %v74 = vld [vmem:[%s0 + $0xec] sm:$0xf]
  %v75 = vld [vmem:[%s0 + $0xf0] sm:$0xf]
  %v76 = vld [vmem:[%s0 + $0xf4] sm:$0xf]
  %v77 = vld [vmem:[%s0 + $0xf8] sm:$0xf]
  %v78 = vld [vmem:[%s0 + $0xfc] sm:$0xf]
  %v79 = vunpack.c.l.bf16 %v15
  %v80 = vunpack.c.l.bf16 %v16
  %v81 = vunpack.c.l.bf16 %v17
  %v82 = vunpack.c.l.bf16 %v18
  %v83 = vunpack.c.l.bf16 %v19
  %v84 = vunpack.c.l.bf16 %v20
  %v85 = vunpack.c.l.bf16 %v21
  %v86 = vunpack.c.l.bf16 %v22
  %v87 = vunpack.c.l.bf16 %v23
  %v88 = vunpack.c.l.bf16 %v24
  %v89 = vunpack.c.l.bf16 %v25
  %v90 = vunpack.c.l.bf16 %v26
  %v91 = vunpack.c.l.bf16 %v27
  %v92 = vunpack.c.l.bf16 %v28
  %v93 = vunpack.c.l.bf16 %v29
  %v94 = vunpack.c.l.bf16 %v30
  %v95 = vunpack.c.l.bf16 %v31
  %v96 = vunpack.c.l.bf16 %v32
  %v97 = vunpack.c.l.bf16 %v33
  %v98 = vunpack.c.l.bf16 %v34
  %v99 = vunpack.c.l.bf16 %v35
  %v100 = vunpack.c.l.bf16 %v36
  %v101 = vunpack.c.l.bf16 %v37
  %v102 = vunpack.c.l.bf16 %v38
  %v103 = vunpack.c.l.bf16 %v39
  %v104 = vunpack.c.l.bf16 %v40
  %v105 = vunpack.c.l.bf16 %v41
  %v106 = vunpack.c.l.bf16 %v42
  %v107 = vunpack.c.l.bf16 %v43
  %v108 = vunpack.c.l.bf16 %v44
  %v109 = vunpack.c.l.bf16 %v45
  %v110 = vunpack.c.l.bf16 %v46
  %v111 = vunpack.c.l.bf16 %v47
  %v112 = vunpack.c.l.bf16 %v48
  %v113 = vunpack.c.l.bf16 %v49
  %v114 = vunpack.c.l.bf16 %v50
  %v115 = vunpack.c.l.bf16 %v51
  %v116 = vunpack.c.l.bf16 %v52
  %v117 = vunpack.c.l.bf16 %v53
  %v118 = vunpack.c.l.bf16 %v54
  %v119 = vunpack.c.l.bf16 %v55
  %v120 = vunpack.c.l.bf16 %v56
  %v121 = vunpack.c.l.bf16 %v57
  %v122 = vunpack.c.l.bf16 %v58
  %v123 = vunpack.c.l.bf16 %v59
  %v124 = vunpack.c.l.bf16 %v60
  %v125 = vunpack.c.l.bf16 %v61
  %v126 = vunpack.c.l.bf16 %v62
  %v127 = vunpack.c.l.bf16 %v63
  %v128 = vunpack.c.l.bf16 %v64
  %v129 = vunpack.c.l.bf16 %v65
  %v130 = vunpack.c.l.bf16 %v66
  %v131 = vunpack.c.l.bf16 %v67
  %v132 = vunpack.c.l.bf16 %v68
  %v133 = vunpack.c.l.bf16 %v69
  %v134 = vunpack.c.l.bf16 %v70
  %v135 = vunpack.c.l.bf16 %v71
  %v136 = vunpack.c.l.bf16 %v72
  %v137 = vunpack.c.l.bf16 %v73
  %v138 = vunpack.c.l.bf16 %v74
  %v139 = vunpack.c.l.bf16 %v75
  %v140 = vunpack.c.l.bf16 %v76
  %v141 = vunpack.c.l.bf16 %v77
  %v142 = vunpack.c.l.bf16 %v78
  %vm207 = vcmask 1040384
  %v208 = vrot.slane %v79, 7
  %v209 = vrot.slane %v80, 7
  %v210 = vsel %vm207, %v208, %v209
  %v211 = vrot.slane %v81, 7
  %v212 = vrot.slane %v82, 7
  %v213 = vsel %vm207, %v211, %v212
  %v214 = vrot.slane %v83, 7
  %v215 = vrot.slane %v84, 7
  %v216 = vsel %vm207, %v214, %v215
  %v217 = vrot.slane %v85, 7
  %v218 = vrot.slane %v86, 7
  %v219 = vsel %vm207, %v217, %v218
  %v220 = vrot.slane %v87, 7
  %v221 = vrot.slane %v88, 7
  %v222 = vsel %vm207, %v220, %v221
  %v223 = vrot.slane %v89, 7
  %v224 = vrot.slane %v90, 7
  %v225 = vsel %vm207, %v223, %v224
  %v226 = vrot.slane %v91, 7
  %v227 = vrot.slane %v92, 7
  %v228 = vsel %vm207, %v226, %v227
  %v229 = vrot.slane %v93, 7
  %v230 = vrot.slane %v94, 7
  %v231 = vsel %vm207, %v229, %v230
  %v232 = vrot.slane %v95, 7
  %v233 = vrot.slane %v96, 7
  %v234 = vsel %vm207, %v232, %v233
  %v235 = vrot.slane %v97, 7
  %v236 = vrot.slane %v98, 7
  %v237 = vsel %vm207, %v235, %v236
  %v238 = vrot.slane %v99, 7
  %v239 = vrot.slane %v100, 7
  %v240 = vsel %vm207, %v238, %v239
  %v241 = vrot.slane %v101, 7
  %v242 = vrot.slane %v102, 7
  %v243 = vsel %vm207, %v241, %v242
  %v244 = vrot.slane %v103, 7
  %v245 = vrot.slane %v104, 7
  %v246 = vsel %vm207, %v244, %v245
  %v247 = vrot.slane %v105, 7
  %v248 = vrot.slane %v106, 7
  %v249 = vsel %vm207, %v247, %v248
  %v250 = vrot.slane %v107, 7
  %v251 = vrot.slane %v108, 7
  %v252 = vsel %vm207, %v250, %v251
  %v253 = vrot.slane %v109, 7
  %v254 = vrot.slane %v110, 7
  %v255 = vsel %vm207, %v253, %v254
  %v256 = vrot.slane %v111, 7
  %v257 = vrot.slane %v112, 7
  %v258 = vsel %vm207, %v256, %v257
  %v259 = vrot.slane %v113, 7
  %v260 = vrot.slane %v114, 7
  %v261 = vsel %vm207, %v259, %v260
  %v262 = vrot.slane %v115, 7
  %v263 = vrot.slane %v116, 7
  %v264 = vsel %vm207, %v262, %v263
  %v265 = vrot.slane %v117, 7
  %v266 = vrot.slane %v118, 7
  %v267 = vsel %vm207, %v265, %v266
  %v268 = vrot.slane %v119, 7
  %v269 = vrot.slane %v120, 7
  %v270 = vsel %vm207, %v268, %v269
  %v271 = vrot.slane %v121, 7
  %v272 = vrot.slane %v122, 7
  %v273 = vsel %vm207, %v271, %v272
  %v274 = vrot.slane %v123, 7
  %v275 = vrot.slane %v124, 7
  %v276 = vsel %vm207, %v274, %v275
  %v277 = vrot.slane %v125, 7
  %v278 = vrot.slane %v126, 7
  %v279 = vsel %vm207, %v277, %v278
  %v280 = vrot.slane %v127, 7
  %v281 = vrot.slane %v128, 7
  %v282 = vsel %vm207, %v280, %v281
  %v283 = vrot.slane %v129, 7
  %v284 = vrot.slane %v130, 7
  %v285 = vsel %vm207, %v283, %v284
  %v286 = vrot.slane %v131, 7
  %v287 = vrot.slane %v132, 7
  %v288 = vsel %vm207, %v286, %v287
  %v289 = vrot.slane %v133, 7
  %v290 = vrot.slane %v134, 7
  %v291 = vsel %vm207, %v289, %v290
  %v292 = vrot.slane %v135, 7
  %v293 = vrot.slane %v136, 7
  %v294 = vsel %vm207, %v292, %v293
  %v295 = vrot.slane %v137, 7
  %v296 = vrot.slane %v138, 7
  %v297 = vsel %vm207, %v295, %v296
  %v298 = vrot.slane %v139, 7
  %v299 = vrot.slane %v140, 7
  %v300 = vsel %vm207, %v298, %v299
  %v301 = vrot.slane %v141, 7
  %v302 = vrot.slane %v142, 7
  %v303 = vsel %vm207, %v301, %v302
  %v400 = vsel %vm207, 0.0, %v208
  %v401 = vsel %vm207, 0.0, %v211
  %v402 = vsel %vm207, 0.0, %v214
  %v403 = vsel %vm207, 0.0, %v217
  %v404 = vsel %vm207, 0.0, %v220
  %v405 = vsel %vm207, 0.0, %v223
  %v406 = vsel %vm207, 0.0, %v226
  %v407 = vsel %vm207, 0.0, %v229
  %v408 = vsel %vm207, 0.0, %v232
  %v409 = vsel %vm207, 0.0, %v235
  %v410 = vsel %vm207, 0.0, %v238
  %v411 = vsel %vm207, 0.0, %v241
  %v412 = vsel %vm207, 0.0, %v244
  %v413 = vsel %vm207, 0.0, %v247
  %v414 = vsel %vm207, 0.0, %v250
  %v415 = vsel %vm207, 0.0, %v253
  %v416 = vsel %vm207, 0.0, %v256
  %v417 = vsel %vm207, 0.0, %v259
  %v418 = vsel %vm207, 0.0, %v262
  %v419 = vsel %vm207, 0.0, %v265
  %v420 = vsel %vm207, 0.0, %v268
  %v421 = vsel %vm207, 0.0, %v271
  %v422 = vsel %vm207, 0.0, %v274
  %v423 = vsel %vm207, 0.0, %v277
  %v424 = vsel %vm207, 0.0, %v280
  %v425 = vsel %vm207, 0.0, %v283
  %v426 = vsel %vm207, 0.0, %v286
  %v427 = vsel %vm207, 0.0, %v289
  %v428 = vsel %vm207, 0.0, %v292
  %v429 = vsel %vm207, 0.0, %v295
  %v430 = vsel %vm207, 0.0, %v298
  %v431 = vsel %vm207, 0.0, %v301
  %v432 = vsel %vm207, %v209, 0.0
  %v433 = vsel %vm207, %v212, 0.0
  %v434 = vsel %vm207, %v215, 0.0
  %v435 = vsel %vm207, %v218, 0.0
  %v436 = vsel %vm207, %v221, 0.0
  %v437 = vsel %vm207, %v224, 0.0
  %v438 = vsel %vm207, %v227, 0.0
  %v439 = vsel %vm207, %v230, 0.0
  %v440 = vsel %vm207, %v233, 0.0
  %v441 = vsel %vm207, %v236, 0.0
  %v442 = vsel %vm207, %v239, 0.0
  %v443 = vsel %vm207, %v242, 0.0
  %v444 = vsel %vm207, %v245, 0.0
  %v445 = vsel %vm207, %v248, 0.0
  %v446 = vsel %vm207, %v251, 0.0
  %v447 = vsel %vm207, %v254, 0.0
  %v448 = vsel %vm207, %v257, 0.0
  %v449 = vsel %vm207, %v260, 0.0
  %v450 = vsel %vm207, %v263, 0.0
  %v451 = vsel %vm207, %v266, 0.0
  %v452 = vsel %vm207, %v269, 0.0
  %v453 = vsel %vm207, %v272, 0.0
  %v454 = vsel %vm207, %v275, 0.0
  %v455 = vsel %vm207, %v278, 0.0
  %v456 = vsel %vm207, %v281, 0.0
  %v457 = vsel %vm207, %v284, 0.0
  %v458 = vsel %vm207, %v287, 0.0
  %v459 = vsel %vm207, %v290, 0.0
  %v460 = vsel %vm207, %v293, 0.0
  %v461 = vsel %vm207, %v296, 0.0
  %v462 = vsel %vm207, %v299, 0.0
  %v463 = vsel %vm207, %v302, 0.0
  %v464 = vmul.f32 %v400, 2.0
  %v465 = vmul.f32 %v210, 2.0
  %v466 = vmul.f32 %v432, 2.0
  %v467 = vmul.f32 %v401, 2.0
  %v468 = vmul.f32 %v213, 2.0
  %v469 = vmul.f32 %v433, 2.0
  %v470 = vmul.f32 %v402, 2.0
  %v471 = vmul.f32 %v216, 2.0
  %v472 = vmul.f32 %v434, 2.0
  %v473 = vmul.f32 %v403, 2.0
  %v474 = vmul.f32 %v219, 2.0
  %v475 = vmul.f32 %v435, 2.0
  %v476 = vmul.f32 %v404, 2.0
  %v477 = vmul.f32 %v222, 2.0
  %v478 = vmul.f32 %v436, 2.0
  %v479 = vmul.f32 %v405, 2.0
  %v480 = vmul.f32 %v225, 2.0
  %v481 = vmul.f32 %v437, 2.0
  %v482 = vmul.f32 %v406, 2.0
  %v483 = vmul.f32 %v228, 2.0
  %v484 = vmul.f32 %v438, 2.0
  %v485 = vmul.f32 %v407, 2.0
  %v486 = vmul.f32 %v231, 2.0
  %v487 = vmul.f32 %v439, 2.0
  %v488 = vmul.f32 %v408, 2.0
  %v489 = vmul.f32 %v234, 2.0
  %v490 = vmul.f32 %v440, 2.0
  %v491 = vmul.f32 %v409, 2.0
  %v492 = vmul.f32 %v237, 2.0
  %v493 = vmul.f32 %v441, 2.0
  %v494 = vmul.f32 %v410, 2.0
  %v495 = vmul.f32 %v240, 2.0
  %v496 = vmul.f32 %v442, 2.0
  %v497 = vmul.f32 %v411, 2.0
  %v498 = vmul.f32 %v243, 2.0
  %v499 = vmul.f32 %v443, 2.0
  %v500 = vmul.f32 %v412, 2.0
  %v501 = vmul.f32 %v246, 2.0
  %v502 = vmul.f32 %v444, 2.0
  %v503 = vmul.f32 %v413, 2.0
  %v504 = vmul.f32 %v249, 2.0
  %v505 = vmul.f32 %v445, 2.0
  %v506 = vmul.f32 %v414, 2.0
  %v507 = vmul.f32 %v252, 2.0
  %v508 = vmul.f32 %v446, 2.0
  %v509 = vmul.f32 %v415, 2.0
  %v510 = vmul.f32 %v255, 2.0
  %v511 = vmul.f32 %v447, 2.0
  %v512 = vmul.f32 %v416, 2.0
  %v513 = vmul.f32 %v258, 2.0
  %v514 = vmul.f32 %v448, 2.0
  %v515 = vmul.f32 %v417, 2.0
  %v516 = vmul.f32 %v261, 2.0
  %v517 = vmul.f32 %v449, 2.0
  %v518 = vmul.f32 %v418, 2.0
  %v519 = vmul.f32 %v264, 2.0
  %v520 = vmul.f32 %v450, 2.0
  %v521 = vmul.f32 %v419, 2.0
  %v522 = vmul.f32 %v267, 2.0
  %v523 = vmul.f32 %v451, 2.0
  %v524 = vmul.f32 %v420, 2.0
  %v525 = vmul.f32 %v270, 2.0
  %v526 = vmul.f32 %v452, 2.0
  %v527 = vmul.f32 %v421, 2.0
  %v528 = vmul.f32 %v273, 2.0
  %v529 = vmul.f32 %v453, 2.0
  %v530 = vmul.f32 %v422, 2.0
  %v531 = vmul.f32 %v276, 2.0
  %v532 = vmul.f32 %v454, 2.0
  %v533 = vmul.f32 %v423, 2.0
  %v534 = vmul.f32 %v279, 2.0
  %v535 = vmul.f32 %v455, 2.0
  %v536 = vmul.f32 %v424, 2.0
  %v537 = vmul.f32 %v282, 2.0
  %v538 = vmul.f32 %v456, 2.0
  %v539 = vmul.f32 %v425, 2.0
  %v540 = vmul.f32 %v285, 2.0
  %v541 = vmul.f32 %v457, 2.0
  %v542 = vmul.f32 %v426, 2.0
  %v543 = vmul.f32 %v288, 2.0
  %v544 = vmul.f32 %v458, 2.0
  %v545 = vmul.f32 %v427, 2.0
  %v546 = vmul.f32 %v291, 2.0
  %v547 = vmul.f32 %v459, 2.0
  %v548 = vmul.f32 %v428, 2.0
  %v549 = vmul.f32 %v294, 2.0
  %v550 = vmul.f32 %v460, 2.0
  %v551 = vmul.f32 %v429, 2.0
  %v552 = vmul.f32 %v297, 2.0
  %v553 = vmul.f32 %v461, 2.0
  %v554 = vmul.f32 %v430, 2.0
  %v555 = vmul.f32 %v300, 2.0
  %v556 = vmul.f32 %v462, 2.0
  %v557 = vmul.f32 %v431, 2.0
  %v558 = vmul.f32 %v303, 2.0
  %v559 = vmul.f32 %v463, 2.0
  %vm657 = vcmask 1046528
  %v658 = vrot.slane 0.0, 1
  %v659 = vsel %vm657, %v658, %v658
  %v660 = vrot.slane %v464, 1
  %v661 = vrot.slane %v465, 1
  %v662 = vsel %vm657, %v660, %v661
  %v663 = vrot.slane %v466, 1
  %v664 = vsel %vm657, %v661, %v663
  %v665 = vrot.slane %v467, 1
  %v666 = vrot.slane %v468, 1
  %v667 = vsel %vm657, %v665, %v666
  %v668 = vrot.slane %v469, 1
  %v669 = vsel %vm657, %v666, %v668
  %v670 = vrot.slane %v470, 1
  %v671 = vrot.slane %v471, 1
  %v672 = vsel %vm657, %v670, %v671
  %v673 = vrot.slane %v472, 1
  %v674 = vsel %vm657, %v671, %v673
  %v675 = vrot.slane %v473, 1
  %v676 = vrot.slane %v474, 1
  %v677 = vsel %vm657, %v675, %v676
  %v678 = vrot.slane %v475, 1
  %v679 = vsel %vm657, %v676, %v678
  %v680 = vrot.slane %v476, 1
  %v681 = vrot.slane %v477, 1
  %v682 = vsel %vm657, %v680, %v681
  %v683 = vrot.slane %v478, 1
  %v684 = vsel %vm657, %v681, %v683
  %v685 = vrot.slane %v479, 1
  %v686 = vrot.slane %v480, 1
  %v687 = vsel %vm657, %v685, %v686
  %v688 = vrot.slane %v481, 1
  %v689 = vsel %vm657, %v686, %v688
  %v690 = vrot.slane %v482, 1
  %v691 = vrot.slane %v483, 1
  %v692 = vsel %vm657, %v690, %v691
  %v693 = vrot.slane %v484, 1
  %v694 = vsel %vm657, %v691, %v693
  %v695 = vrot.slane %v485, 1
  %v696 = vrot.slane %v486, 1
  %v697 = vsel %vm657, %v695, %v696
  %v698 = vrot.slane %v487, 1
  %v699 = vsel %vm657, %v696, %v698
  %v700 = vrot.slane %v488, 1
  %v701 = vrot.slane %v489, 1
  %v702 = vsel %vm657, %v700, %v701
  %v703 = vrot.slane %v490, 1
  %v704 = vsel %vm657, %v701, %v703
  %v705 = vrot.slane %v491, 1
  %v706 = vrot.slane %v492, 1
  %v707 = vsel %vm657, %v705, %v706
  %v708 = vrot.slane %v493, 1
  %v709 = vsel %vm657, %v706, %v708
  %v710 = vrot.slane %v494, 1
  %v711 = vrot.slane %v495, 1
  %v712 = vsel %vm657, %v710, %v711
  %v713 = vrot.slane %v496, 1
  %v714 = vsel %vm657, %v711, %v713
  %v715 = vrot.slane %v497, 1
  %v716 = vrot.slane %v498, 1
  %v717 = vsel %vm657, %v715, %v716
  %v718 = vrot.slane %v499, 1
  %v719 = vsel %vm657, %v716, %v718
  %v720 = vrot.slane %v500, 1
  %v721 = vrot.slane %v501, 1
  %v722 = vsel %vm657, %v720, %v721
  %v723 = vrot.slane %v502, 1
  %v724 = vsel %vm657, %v721, %v723
  %v725 = vrot.slane %v503, 1
  %v726 = vrot.slane %v504, 1
  %v727 = vsel %vm657, %v725, %v726
  %v728 = vrot.slane %v505, 1
  %v729 = vsel %vm657, %v726, %v728
  %v730 = vrot.slane %v506, 1
  %v731 = vrot.slane %v507, 1
  %v732 = vsel %vm657, %v730, %v731
  %v733 = vrot.slane %v508, 1
  %v734 = vsel %vm657, %v731, %v733
  %v735 = vrot.slane %v509, 1
  %v736 = vrot.slane %v510, 1
  %v737 = vsel %vm657, %v735, %v736
  %v738 = vrot.slane %v511, 1
  %v739 = vsel %vm657, %v736, %v738
  %v740 = vrot.slane %v512, 1
  %v741 = vrot.slane %v513, 1
  %v742 = vsel %vm657, %v740, %v741
  %v743 = vrot.slane %v514, 1
  %v744 = vsel %vm657, %v741, %v743
  %v745 = vrot.slane %v515, 1
  %v746 = vrot.slane %v516, 1
  %v747 = vsel %vm657, %v745, %v746
  %v748 = vrot.slane %v517, 1
  %v749 = vsel %vm657, %v746, %v748
  %v750 = vrot.slane %v518, 1
  %v751 = vrot.slane %v519, 1
  %v752 = vsel %vm657, %v750, %v751
  %v753 = vrot.slane %v520, 1
  %v754 = vsel %vm657, %v751, %v753
  %v755 = vrot.slane %v521, 1
  %v756 = vrot.slane %v522, 1
  %v757 = vsel %vm657, %v755, %v756
  %v758 = vrot.slane %v523, 1
  %v759 = vsel %vm657, %v756, %v758
  %v760 = vrot.slane %v524, 1
  %v761 = vrot.slane %v525, 1
  %v762 = vsel %vm657, %v760, %v761
  %v763 = vrot.slane %v526, 1
  %v764 = vsel %vm657, %v761, %v763
  %v765 = vrot.slane %v527, 1
  %v766 = vrot.slane %v528, 1
  %v767 = vsel %vm657, %v765, %v766
  %v768 = vrot.slane %v529, 1
  %v769 = vsel %vm657, %v766, %v768
  %v770 = vrot.slane %v530, 1
  %v771 = vrot.slane %v531, 1
  %v772 = vsel %vm657, %v770, %v771
  %v773 = vrot.slane %v532, 1
  %v774 = vsel %vm657, %v771, %v773
  %v775 = vrot.slane %v533, 1
  %v776 = vrot.slane %v534, 1
  %v777 = vsel %vm657, %v775, %v776
  %v778 = vrot.slane %v535, 1
  %v779 = vsel %vm657, %v776, %v778
  %v780 = vrot.slane %v536, 1
  %v781 = vrot.slane %v537, 1
  %v782 = vsel %vm657, %v780, %v781
  %v783 = vrot.slane %v538, 1
  %v784 = vsel %vm657, %v781, %v783
  %v785 = vrot.slane %v539, 1
  %v786 = vrot.slane %v540, 1
  %v787 = vsel %vm657, %v785, %v786
  %v788 = vrot.slane %v541, 1
  %v789 = vsel %vm657, %v786, %v788
  %v790 = vrot.slane %v542, 1
  %v791 = vrot.slane %v543, 1
  %v792 = vsel %vm657, %v790, %v791
  %v793 = vrot.slane %v544, 1
  %v794 = vsel %vm657, %v791, %v793
  %v795 = vrot.slane %v545, 1
  %v796 = vrot.slane %v546, 1
  %v797 = vsel %vm657, %v795, %v796
  %v798 = vrot.slane %v547, 1
  %v799 = vsel %vm657, %v796, %v798
  %v800 = vrot.slane %v548, 1
  %v801 = vrot.slane %v549, 1
  %v802 = vsel %vm657, %v800, %v801
  %v803 = vrot.slane %v550, 1
  %v804 = vsel %vm657, %v801, %v803
  %v805 = vrot.slane %v551, 1
  %v806 = vrot.slane %v552, 1
  %v807 = vsel %vm657, %v805, %v806
  %v808 = vrot.slane %v553, 1
  %v809 = vsel %vm657, %v806, %v808
  %v810 = vrot.slane %v554, 1
  %v811 = vrot.slane %v555, 1
  %v812 = vsel %vm657, %v810, %v811
  %v813 = vrot.slane %v556, 1
  %v814 = vsel %vm657, %v811, %v813
  %v815 = vrot.slane %v557, 1
  %v816 = vrot.slane %v558, 1
  %v817 = vsel %vm657, %v815, %v816
  %v818 = vrot.slane %v559, 1
  %v819 = vsel %vm657, %v816, %v818
  %v885 = vadd.f32 %v659, 0.0
  %v886 = vadd.f32 %v400, %v662
  %v887 = vadd.f32 %v210, %v664
  %v888 = vadd.f32 %v401, %v667
  %v889 = vadd.f32 %v213, %v669
  %v890 = vadd.f32 %v402, %v672
  %v891 = vadd.f32 %v216, %v674
  %v892 = vadd.f32 %v403, %v677
  %v893 = vadd.f32 %v219, %v679
  %v894 = vadd.f32 %v404, %v682
  %v895 = vadd.f32 %v222, %v684
  %v896 = vadd.f32 %v405, %v687
  %v897 = vadd.f32 %v225, %v689
  %v898 = vadd.f32 %v406, %v692
  %v899 = vadd.f32 %v228, %v694
  %v900 = vadd.f32 %v407, %v697
  %v901 = vadd.f32 %v231, %v699
  %v902 = vadd.f32 %v408, %v702
  %v903 = vadd.f32 %v234, %v704
  %v904 = vadd.f32 %v409, %v707
  %v905 = vadd.f32 %v237, %v709
  %v906 = vadd.f32 %v410, %v712
  %v907 = vadd.f32 %v240, %v714
  %v908 = vadd.f32 %v411, %v717
  %v909 = vadd.f32 %v243, %v719
  %v910 = vadd.f32 %v412, %v722
  %v911 = vadd.f32 %v246, %v724
  %v912 = vadd.f32 %v413, %v727
  %v913 = vadd.f32 %v249, %v729
  %v914 = vadd.f32 %v414, %v732
  %v915 = vadd.f32 %v252, %v734
  %v916 = vadd.f32 %v415, %v737
  %v917 = vadd.f32 %v255, %v739
  %v918 = vadd.f32 %v416, %v742
  %v919 = vadd.f32 %v258, %v744
  %v920 = vadd.f32 %v417, %v747
  %v921 = vadd.f32 %v261, %v749
  %v922 = vadd.f32 %v418, %v752
  %v923 = vadd.f32 %v264, %v754
  %v924 = vadd.f32 %v419, %v757
  %v925 = vadd.f32 %v267, %v759
  %v926 = vadd.f32 %v420, %v762
  %v927 = vadd.f32 %v270, %v764
  %v928 = vadd.f32 %v421, %v767
  %v929 = vadd.f32 %v273, %v769
  %v930 = vadd.f32 %v422, %v772
  %v931 = vadd.f32 %v276, %v774
  %v932 = vadd.f32 %v423, %v777
  %v933 = vadd.f32 %v279, %v779
  %v934 = vadd.f32 %v424, %v782
  %v935 = vadd.f32 %v282, %v784
  %v936 = vadd.f32 %v425, %v787
  %v937 = vadd.f32 %v285, %v789
  %v938 = vadd.f32 %v426, %v792
  %v939 = vadd.f32 %v288, %v794
  %v940 = vadd.f32 %v427, %v797
  %v941 = vadd.f32 %v291, %v799
  %v942 = vadd.f32 %v428, %v802
  %v943 = vadd.f32 %v294, %v804
  %v944 = vadd.f32 %v429, %v807
  %v945 = vadd.f32 %v297, %v809
  %v946 = vadd.f32 %v430, %v812
  %v947 = vadd.f32 %v300, %v814
  %v948 = vadd.f32 %v431, %v817
  %v949 = vadd.f32 %v303, %v819
  %vm1014 = vcmask 1045504
  %v1015 = vrot.slane 0.0, 2
  %v1016 = vsel %vm1014, %v1015, %v1015
  %v1017 = vrot.slane %v400, 2
  %v1018 = vrot.slane %v210, 2
  %v1019 = vsel %vm1014, %v1017, %v1018
  %v1020 = vrot.slane %v432, 2
  %v1021 = vsel %vm1014, %v1018, %v1020
  %v1022 = vrot.slane %v401, 2
  %v1023 = vrot.slane %v213, 2
  %v1024 = vsel %vm1014, %v1022, %v1023
  %v1025 = vrot.slane %v433, 2
  %v1026 = vsel %vm1014, %v1023, %v1025
  %v1027 = vrot.slane %v402, 2
  %v1028 = vrot.slane %v216, 2
  %v1029 = vsel %vm1014, %v1027, %v1028
  %v1030 = vrot.slane %v434, 2
  %v1031 = vsel %vm1014, %v1028, %v1030
  %v1032 = vrot.slane %v403, 2
  %v1033 = vrot.slane %v219, 2
  %v1034 = vsel %vm1014, %v1032, %v1033
  %v1035 = vrot.slane %v435, 2
  %v1036 = vsel %vm1014, %v1033, %v1035
  %v1037 = vrot.slane %v404, 2
  %v1038 = vrot.slane %v222, 2
  %v1039 = vsel %vm1014, %v1037, %v1038
  %v1040 = vrot.slane %v436, 2
  %v1041 = vsel %vm1014, %v1038, %v1040
  %v1042 = vrot.slane %v405, 2
  %v1043 = vrot.slane %v225, 2
  %v1044 = vsel %vm1014, %v1042, %v1043
  %v1045 = vrot.slane %v437, 2
  %v1046 = vsel %vm1014, %v1043, %v1045
  %v1047 = vrot.slane %v406, 2
  %v1048 = vrot.slane %v228, 2
  %v1049 = vsel %vm1014, %v1047, %v1048
  %v1050 = vrot.slane %v438, 2
  %v1051 = vsel %vm1014, %v1048, %v1050
  %v1052 = vrot.slane %v407, 2
  %v1053 = vrot.slane %v231, 2
  %v1054 = vsel %vm1014, %v1052, %v1053
  %v1055 = vrot.slane %v439, 2
  %v1056 = vsel %vm1014, %v1053, %v1055
  %v1057 = vrot.slane %v408, 2
  %v1058 = vrot.slane %v234, 2
  %v1059 = vsel %vm1014, %v1057, %v1058
  %v1060 = vrot.slane %v440, 2
  %v1061 = vsel %vm1014, %v1058, %v1060
  %v1062 = vrot.slane %v409, 2
  %v1063 = vrot.slane %v237, 2
  %v1064 = vsel %vm1014, %v1062, %v1063
  %v1065 = vrot.slane %v441, 2
  %v1066 = vsel %vm1014, %v1063, %v1065
  %v1067 = vrot.slane %v410, 2
  %v1068 = vrot.slane %v240, 2
  %v1069 = vsel %vm1014, %v1067, %v1068
  %v1070 = vrot.slane %v442, 2
  %v1071 = vsel %vm1014, %v1068, %v1070
  %v1072 = vrot.slane %v411, 2
  %v1073 = vrot.slane %v243, 2
  %v1074 = vsel %vm1014, %v1072, %v1073
  %v1075 = vrot.slane %v443, 2
  %v1076 = vsel %vm1014, %v1073, %v1075
  %v1077 = vrot.slane %v412, 2
  %v1078 = vrot.slane %v246, 2
  %v1079 = vsel %vm1014, %v1077, %v1078
  %v1080 = vrot.slane %v444, 2
  %v1081 = vsel %vm1014, %v1078, %v1080
  %v1082 = vrot.slane %v413, 2
  %v1083 = vrot.slane %v249, 2
  %v1084 = vsel %vm1014, %v1082, %v1083
  %v1085 = vrot.slane %v445, 2
  %v1086 = vsel %vm1014, %v1083, %v1085
  %v1087 = vrot.slane %v414, 2
  %v1088 = vrot.slane %v252, 2
  %v1089 = vsel %vm1014, %v1087, %v1088
  %v1090 = vrot.slane %v446, 2
  %v1091 = vsel %vm1014, %v1088, %v1090
  %v1092 = vrot.slane %v415, 2
  %v1093 = vrot.slane %v255, 2
  %v1094 = vsel %vm1014, %v1092, %v1093
  %v1095 = vrot.slane %v447, 2
  %v1096 = vsel %vm1014, %v1093, %v1095
  %v1097 = vrot.slane %v416, 2
  %v1098 = vrot.slane %v258, 2
  %v1099 = vsel %vm1014, %v1097, %v1098
  %v1100 = vrot.slane %v448, 2
  %v1101 = vsel %vm1014, %v1098, %v1100
  %v1102 = vrot.slane %v417, 2
  %v1103 = vrot.slane %v261, 2
  %v1104 = vsel %vm1014, %v1102, %v1103
  %v1105 = vrot.slane %v449, 2
  %v1106 = vsel %vm1014, %v1103, %v1105
  %v1107 = vrot.slane %v418, 2
  %v1108 = vrot.slane %v264, 2
  %v1109 = vsel %vm1014, %v1107, %v1108
  %v1110 = vrot.slane %v450, 2
  %v1111 = vsel %vm1014, %v1108, %v1110
  %v1112 = vrot.slane %v419, 2
  %v1113 = vrot.slane %v267, 2
  %v1114 = vsel %vm1014, %v1112, %v1113
  %v1115 = vrot.slane %v451, 2
  %v1116 = vsel %vm1014, %v1113, %v1115
  %v1117 = vrot.slane %v420, 2
  %v1118 = vrot.slane %v270, 2
  %v1119 = vsel %vm1014, %v1117, %v1118
  %v1120 = vrot.slane %v452, 2
  %v1121 = vsel %vm1014, %v1118, %v1120
  %v1122 = vrot.slane %v421, 2
  %v1123 = vrot.slane %v273, 2
  %v1124 = vsel %vm1014, %v1122, %v1123
  %v1125 = vrot.slane %v453, 2
  %v1126 = vsel %vm1014, %v1123, %v1125
  %v1127 = vrot.slane %v422, 2
  %v1128 = vrot.slane %v276, 2
  %v1129 = vsel %vm1014, %v1127, %v1128
  %v1130 = vrot.slane %v454, 2
  %v1131 = vsel %vm1014, %v1128, %v1130
  %v1132 = vrot.slane %v423, 2
  %v1133 = vrot.slane %v279, 2
  %v1134 = vsel %vm1014, %v1132, %v1133
  %v1135 = vrot.slane %v455, 2
  %v1136 = vsel %vm1014, %v1133, %v1135
  %v1137 = vrot.slane %v424, 2
  %v1138 = vrot.slane %v282, 2
  %v1139 = vsel %vm1014, %v1137, %v1138
  %v1140 = vrot.slane %v456, 2
  %v1141 = vsel %vm1014, %v1138, %v1140
  %v1142 = vrot.slane %v425, 2
  %v1143 = vrot.slane %v285, 2
  %v1144 = vsel %vm1014, %v1142, %v1143
  %v1145 = vrot.slane %v457, 2
  %v1146 = vsel %vm1014, %v1143, %v1145
  %v1147 = vrot.slane %v426, 2
  %v1148 = vrot.slane %v288, 2
  %v1149 = vsel %vm1014, %v1147, %v1148
  %v1150 = vrot.slane %v458, 2
  %v1151 = vsel %vm1014, %v1148, %v1150
  %v1152 = vrot.slane %v427, 2
  %v1153 = vrot.slane %v291, 2
  %v1154 = vsel %vm1014, %v1152, %v1153
  %v1155 = vrot.slane %v459, 2
  %v1156 = vsel %vm1014, %v1153, %v1155
  %v1157 = vrot.slane %v428, 2
  %v1158 = vrot.slane %v294, 2
  %v1159 = vsel %vm1014, %v1157, %v1158
  %v1160 = vrot.slane %v460, 2
  %v1161 = vsel %vm1014, %v1158, %v1160
  %v1162 = vrot.slane %v429, 2
  %v1163 = vrot.slane %v297, 2
  %v1164 = vsel %vm1014, %v1162, %v1163
  %v1165 = vrot.slane %v461, 2
  %v1166 = vsel %vm1014, %v1163, %v1165
  %v1167 = vrot.slane %v430, 2
  %v1168 = vrot.slane %v300, 2
  %v1169 = vsel %vm1014, %v1167, %v1168
  %v1170 = vrot.slane %v462, 2
  %v1171 = vsel %vm1014, %v1168, %v1170
  %v1172 = vrot.slane %v431, 2
  %v1173 = vrot.slane %v303, 2
  %v1174 = vsel %vm1014, %v1172, %v1173
  %v1175 = vrot.slane %v463, 2
  %v1176 = vsel %vm1014, %v1173, %v1175
  %v1242 = vadd.f32 %v885, %v1016
  %v1243 = vadd.f32 %v886, %v1019
  %v1244 = vadd.f32 %v887, %v1021
  %v1245 = vadd.f32 %v888, %v1024
  %v1246 = vadd.f32 %v889, %v1026
  %v1247 = vadd.f32 %v890, %v1029
  %v1248 = vadd.f32 %v891, %v1031
  %v1249 = vadd.f32 %v892, %v1034
  %v1250 = vadd.f32 %v893, %v1036
  %v1251 = vadd.f32 %v894, %v1039
  %v1252 = vadd.f32 %v895, %v1041
  %v1253 = vadd.f32 %v896, %v1044
  %v1254 = vadd.f32 %v897, %v1046
  %v1255 = vadd.f32 %v898, %v1049
  %v1256 = vadd.f32 %v899, %v1051
  %v1257 = vadd.f32 %v900, %v1054
  %v1258 = vadd.f32 %v901, %v1056
  %v1259 = vadd.f32 %v902, %v1059
  %v1260 = vadd.f32 %v903, %v1061
  %v1261 = vadd.f32 %v904, %v1064
  %v1262 = vadd.f32 %v905, %v1066
  %v1263 = vadd.f32 %v906, %v1069
  %v1264 = vadd.f32 %v907, %v1071
  %v1265 = vadd.f32 %v908, %v1074
  %v1266 = vadd.f32 %v909, %v1076
  %v1267 = vadd.f32 %v910, %v1079
  %v1268 = vadd.f32 %v911, %v1081
  %v1269 = vadd.f32 %v912, %v1084
  %v1270 = vadd.f32 %v913, %v1086
  %v1271 = vadd.f32 %v914, %v1089
  %v1272 = vadd.f32 %v915, %v1091
  %v1273 = vadd.f32 %v916, %v1094
  %v1274 = vadd.f32 %v917, %v1096
  %v1275 = vadd.f32 %v918, %v1099
  %v1276 = vadd.f32 %v919, %v1101
  %v1277 = vadd.f32 %v920, %v1104
  %v1278 = vadd.f32 %v921, %v1106
  %v1279 = vadd.f32 %v922, %v1109
  %v1280 = vadd.f32 %v923, %v1111
  %v1281 = vadd.f32 %v924, %v1114
  %v1282 = vadd.f32 %v925, %v1116
  %v1283 = vadd.f32 %v926, %v1119
  %v1284 = vadd.f32 %v927, %v1121
  %v1285 = vadd.f32 %v928, %v1124
  %v1286 = vadd.f32 %v929, %v1126
  %v1287 = vadd.f32 %v930, %v1129
  %v1288 = vadd.f32 %v931, %v1131
  %v1289 = vadd.f32 %v932, %v1134
  %v1290 = vadd.f32 %v933, %v1136
  %v1291 = vadd.f32 %v934, %v1139
  %v1292 = vadd.f32 %v935, %v1141
  %v1293 = vadd.f32 %v936, %v1144
  %v1294 = vadd.f32 %v937, %v1146
  %v1295 = vadd.f32 %v938, %v1149
  %v1296 = vadd.f32 %v939, %v1151
  %v1297 = vadd.f32 %v940, %v1154
  %v1298 = vadd.f32 %v941, %v1156
  %v1299 = vadd.f32 %v942, %v1159
  %v1300 = vadd.f32 %v943, %v1161
  %v1301 = vadd.f32 %v944, %v1164
  %v1302 = vadd.f32 %v945, %v1166
  %v1303 = vadd.f32 %v946, %v1169
  %v1304 = vadd.f32 %v947, %v1171
  %v1305 = vadd.f32 %v948, %v1174
  %v1306 = vadd.f32 %v949, %v1176
  %v1307 = vmul.f32 %v1243, 2.0
  %v1308 = vmul.f32 %v1244, 2.0
  %v1309 = vmul.f32 %v1245, 2.0
  %v1310 = vmul.f32 %v1246, 2.0
  %v1311 = vmul.f32 %v1247, 2.0
  %v1312 = vmul.f32 %v1248, 2.0
  %v1313 = vmul.f32 %v1249, 2.0
  %v1314 = vmul.f32 %v1250, 2.0
  %v1315 = vmul.f32 %v1251, 2.0
  %v1316 = vmul.f32 %v1252, 2.0
  %v1317 = vmul.f32 %v1253, 2.0
  %v1318 = vmul.f32 %v1254, 2.0
  %v1319 = vmul.f32 %v1255, 2.0
  %v1320 = vmul.f32 %v1256, 2.0
  %v1321 = vmul.f32 %v1257, 2.0
  %v1322 = vmul.f32 %v1258, 2.0
  %v1323 = vmul.f32 %v1259, 2.0
  %v1324 = vmul.f32 %v1260, 2.0
  %v1325 = vmul.f32 %v1261, 2.0
  %v1326 = vmul.f32 %v1262, 2.0
  %v1327 = vmul.f32 %v1263, 2.0
  %v1328 = vmul.f32 %v1264, 2.0
  %v1329 = vmul.f32 %v1265, 2.0
  %v1330 = vmul.f32 %v1266, 2.0
  %v1331 = vmul.f32 %v1267, 2.0
  %v1332 = vmul.f32 %v1268, 2.0
  %v1333 = vmul.f32 %v1269, 2.0
  %v1334 = vmul.f32 %v1270, 2.0
  %v1335 = vmul.f32 %v1271, 2.0
  %v1336 = vmul.f32 %v1272, 2.0
  %v1337 = vmul.f32 %v1273, 2.0
  %v1338 = vmul.f32 %v1274, 2.0
  %v1339 = vmul.f32 %v1275, 2.0
  %v1340 = vmul.f32 %v1276, 2.0
  %v1341 = vmul.f32 %v1277, 2.0
  %v1342 = vmul.f32 %v1278, 2.0
  %v1343 = vmul.f32 %v1279, 2.0
  %v1344 = vmul.f32 %v1280, 2.0
  %v1345 = vmul.f32 %v1281, 2.0
  %v1346 = vmul.f32 %v1282, 2.0
  %v1347 = vmul.f32 %v1283, 2.0
  %v1348 = vmul.f32 %v1284, 2.0
  %v1349 = vmul.f32 %v1285, 2.0
  %v1350 = vmul.f32 %v1286, 2.0
  %v1351 = vmul.f32 %v1287, 2.0
  %v1352 = vmul.f32 %v1288, 2.0
  %v1353 = vmul.f32 %v1289, 2.0
  %v1354 = vmul.f32 %v1290, 2.0
  %v1355 = vmul.f32 %v1291, 2.0
  %v1356 = vmul.f32 %v1292, 2.0
  %v1357 = vmul.f32 %v1293, 2.0
  %v1358 = vmul.f32 %v1294, 2.0
  %v1359 = vmul.f32 %v1295, 2.0
  %v1360 = vmul.f32 %v1296, 2.0
  %v1361 = vmul.f32 %v1297, 2.0
  %v1362 = vmul.f32 %v1298, 2.0
  %v1363 = vmul.f32 %v1299, 2.0
  %v1364 = vmul.f32 %v1300, 2.0
  %v1365 = vmul.f32 %v1301, 2.0
  %v1366 = vmul.f32 %v1302, 2.0
  %v1367 = vmul.f32 %v1303, 2.0
  %v1368 = vmul.f32 %v1304, 2.0
  %v1369 = vmul.f32 %v1305, 2.0
  %v1370 = vmul.f32 %v1306, 2.0
  %v1371 = vadd.f32 %v1242, %v1307
  %v1372 = vadd.f32 %v1242, %v1308
  %v1373 = vadd.f32 %v1243, %v1309
  %v1374 = vadd.f32 %v1244, %v1310
  %v1375 = vadd.f32 %v1245, %v1311
  %v1376 = vadd.f32 %v1246, %v1312
  %v1377 = vadd.f32 %v1247, %v1313
  %v1378 = vadd.f32 %v1248, %v1314
  %v1379 = vadd.f32 %v1249, %v1315
  %v1380 = vadd.f32 %v1250, %v1316
  %v1381 = vadd.f32 %v1251, %v1317
  %v1382 = vadd.f32 %v1252, %v1318
  %v1383 = vadd.f32 %v1253, %v1319
  %v1384 = vadd.f32 %v1254, %v1320
  %v1385 = vadd.f32 %v1255, %v1321
  %v1386 = vadd.f32 %v1256, %v1322
  %v1387 = vadd.f32 %v1257, %v1323
  %v1388 = vadd.f32 %v1258, %v1324
  %v1389 = vadd.f32 %v1259, %v1325
  %v1390 = vadd.f32 %v1260, %v1326
  %v1391 = vadd.f32 %v1261, %v1327
  %v1392 = vadd.f32 %v1262, %v1328
  %v1393 = vadd.f32 %v1263, %v1329
  %v1394 = vadd.f32 %v1264, %v1330
  %v1395 = vadd.f32 %v1265, %v1331
  %v1396 = vadd.f32 %v1266, %v1332
  %v1397 = vadd.f32 %v1267, %v1333
  %v1398 = vadd.f32 %v1268, %v1334
  %v1399 = vadd.f32 %v1269, %v1335
  %v1400 = vadd.f32 %v1270, %v1336
  %v1401 = vadd.f32 %v1271, %v1337
  %v1402 = vadd.f32 %v1272, %v1338
  %v1403 = vadd.f32 %v1242, %v1339
  %v1404 = vadd.f32 %v1242, %v1340
  %v1405 = vadd.f32 %v1275, %v1341
  %v1406 = vadd.f32 %v1276, %v1342
  %v1407 = vadd.f32 %v1277, %v1343
  %v1408 = vadd.f32 %v1278, %v1344
  %v1409 = vadd.f32 %v1279, %v1345
  %v1410 = vadd.f32 %v1280, %v1346
  %v1411 = vadd.f32 %v1281, %v1347
  %v1412 = vadd.f32 %v1282, %v1348
  %v1413 = vadd.f32 %v1283, %v1349
  %v1414 = vadd.f32 %v1284, %v1350
  %v1415 = vadd.f32 %v1285, %v1351
  %v1416 = vadd.f32 %v1286, %v1352
  %v1417 = vadd.f32 %v1287, %v1353
  %v1418 = vadd.f32 %v1288, %v1354
  %v1419 = vadd.f32 %v1289, %v1355
  %v1420 = vadd.f32 %v1290, %v1356
  %v1421 = vadd.f32 %v1291, %v1357
  %v1422 = vadd.f32 %v1292, %v1358
  %v1423 = vadd.f32 %v1293, %v1359
  %v1424 = vadd.f32 %v1294, %v1360
  %v1425 = vadd.f32 %v1295, %v1361
  %v1426 = vadd.f32 %v1296, %v1362
  %v1427 = vadd.f32 %v1297, %v1363
  %v1428 = vadd.f32 %v1298, %v1364
  %v1429 = vadd.f32 %v1299, %v1365
  %v1430 = vadd.f32 %v1300, %v1366
  %v1431 = vadd.f32 %v1301, %v1367
  %v1432 = vadd.f32 %v1302, %v1368
  %v1433 = vadd.f32 %v1303, %v1369
  %v1434 = vadd.f32 %v1304, %v1370
  %v1435 = vadd.f32 %v1371, %v1245
  %v1436 = vadd.f32 %v1372, %v1246
  %v1437 = vadd.f32 %v1373, %v1247
  %v1438 = vadd.f32 %v1374, %v1248
  %v1439 = vadd.f32 %v1375, %v1249
  %v1440 = vadd.f32 %v1376, %v1250
  %v1441 = vadd.f32 %v1377, %v1251
  %v1442 = vadd.f32 %v1378, %v1252
  %v1443 = vadd.f32 %v1379, %v1253
  %v1444 = vadd.f32 %v1380, %v1254
  %v1445 = vadd.f32 %v1381, %v1255
  %v1446 = vadd.f32 %v1382, %v1256
  %v1447 = vadd.f32 %v1383, %v1257
  %v1448 = vadd.f32 %v1384, %v1258
  %v1449 = vadd.f32 %v1385, %v1259
  %v1450 = vadd.f32 %v1386, %v1260
  %v1451 = vadd.f32 %v1387, %v1261
  %v1452 = vadd.f32 %v1388, %v1262
  %v1453 = vadd.f32 %v1389, %v1263
  %v1454 = vadd.f32 %v1390, %v1264
  %v1455 = vadd.f32 %v1391, %v1265
  %v1456 = vadd.f32 %v1392, %v1266
  %v1457 = vadd.f32 %v1393, %v1267
  %v1458 = vadd.f32 %v1394, %v1268
  %v1459 = vadd.f32 %v1395, %v1269
  %v1460 = vadd.f32 %v1396, %v1270
  %v1461 = vadd.f32 %v1397, %v1271
  %v1462 = vadd.f32 %v1398, %v1272
  %v1463 = vadd.f32 %v1399, %v1273
  %v1464 = vadd.f32 %v1400, %v1274
  %v1465 = vadd.f32 %v1401, %v1242
  %v1466 = vadd.f32 %v1402, %v1242
  %v1467 = vadd.f32 %v1403, %v1277
  %v1468 = vadd.f32 %v1404, %v1278
  %v1469 = vadd.f32 %v1405, %v1279
  %v1470 = vadd.f32 %v1406, %v1280
  %v1471 = vadd.f32 %v1407, %v1281
  %v1472 = vadd.f32 %v1408, %v1282
  %v1473 = vadd.f32 %v1409, %v1283
  %v1474 = vadd.f32 %v1410, %v1284
  %v1475 = vadd.f32 %v1411, %v1285
  %v1476 = vadd.f32 %v1412, %v1286
  %v1477 = vadd.f32 %v1413, %v1287
  %v1478 = vadd.f32 %v1414, %v1288
  %v1479 = vadd.f32 %v1415, %v1289
  %v1480 = vadd.f32 %v1416, %v1290
  %v1481 = vadd.f32 %v1417, %v1291
  %v1482 = vadd.f32 %v1418, %v1292
  %v1483 = vadd.f32 %v1419, %v1293
  %v1484 = vadd.f32 %v1420, %v1294
  %v1485 = vadd.f32 %v1421, %v1295
  %v1486 = vadd.f32 %v1422, %v1296
  %v1487 = vadd.f32 %v1423, %v1297
  %v1488 = vadd.f32 %v1424, %v1298
  %v1489 = vadd.f32 %v1425, %v1299
  %v1490 = vadd.f32 %v1426, %v1300
  %v1491 = vadd.f32 %v1427, %v1301
  %v1492 = vadd.f32 %v1428, %v1302
  %v1493 = vadd.f32 %v1429, %v1303
  %v1494 = vadd.f32 %v1430, %v1304
  %v1495 = vadd.f32 %v1431, %v1305
  %v1496 = vadd.f32 %v1432, %v1306
  %v1497 = vadd.f32 %v1433, %v1242
  %v1498 = vadd.f32 %v1434, %v1242
  %v1499 = vmul.f32 %v1435, 0.0625
  %v1500 = vmul.f32 %v1436, 0.0625
  %v1501 = vmul.f32 %v1437, 0.0625
  %v1502 = vmul.f32 %v1438, 0.0625
  %v1503 = vmul.f32 %v1439, 0.0625
  %v1504 = vmul.f32 %v1440, 0.0625
  %v1505 = vmul.f32 %v1441, 0.0625
  %v1506 = vmul.f32 %v1442, 0.0625
  %v1507 = vmul.f32 %v1443, 0.0625
  %v1508 = vmul.f32 %v1444, 0.0625
  %v1509 = vmul.f32 %v1445, 0.0625
  %v1510 = vmul.f32 %v1446, 0.0625
  %v1511 = vmul.f32 %v1447, 0.0625
  %v1512 = vmul.f32 %v1448, 0.0625
  %v1513 = vmul.f32 %v1449, 0.0625
  %v1514 = vmul.f32 %v1450, 0.0625
  %v1515 = vmul.f32 %v1451, 0.0625
  %v1516 = vmul.f32 %v1452, 0.0625
  %v1517 = vmul.f32 %v1453, 0.0625
  %v1518 = vmul.f32 %v1454, 0.0625
  %v1519 = vmul.f32 %v1455, 0.0625
  %v1520 = vmul.f32 %v1456, 0.0625
  %v1521 = vmul.f32 %v1457, 0.0625
  %v1522 = vmul.f32 %v1458, 0.0625
  %v1523 = vmul.f32 %v1459, 0.0625
  %v1524 = vmul.f32 %v1460, 0.0625
  %v1525 = vmul.f32 %v1461, 0.0625
  %v1526 = vmul.f32 %v1462, 0.0625
  %v1527 = vmul.f32 %v1463, 0.0625
  %v1528 = vmul.f32 %v1464, 0.0625
  %v1529 = vmul.f32 %v1465, 0.0625
  %v1530 = vmul.f32 %v1466, 0.0625
  %v1531 = vmul.f32 %v1467, 0.0625
  %v1532 = vmul.f32 %v1468, 0.0625
  %v1533 = vmul.f32 %v1469, 0.0625
  %v1534 = vmul.f32 %v1470, 0.0625
  %v1535 = vmul.f32 %v1471, 0.0625
  %v1536 = vmul.f32 %v1472, 0.0625
  %v1537 = vmul.f32 %v1473, 0.0625
  %v1538 = vmul.f32 %v1474, 0.0625
  %v1539 = vmul.f32 %v1475, 0.0625
  %v1540 = vmul.f32 %v1476, 0.0625
  %v1541 = vmul.f32 %v1477, 0.0625
  %v1542 = vmul.f32 %v1478, 0.0625
  %v1543 = vmul.f32 %v1479, 0.0625
  %v1544 = vmul.f32 %v1480, 0.0625
  %v1545 = vmul.f32 %v1481, 0.0625
  %v1546 = vmul.f32 %v1482, 0.0625
  %v1547 = vmul.f32 %v1483, 0.0625
  %v1548 = vmul.f32 %v1484, 0.0625
  %v1549 = vmul.f32 %v1485, 0.0625
  %v1550 = vmul.f32 %v1486, 0.0625
  %v1551 = vmul.f32 %v1487, 0.0625
  %v1552 = vmul.f32 %v1488, 0.0625
  %v1553 = vmul.f32 %v1489, 0.0625
  %v1554 = vmul.f32 %v1490, 0.0625
  %v1555 = vmul.f32 %v1491, 0.0625
  %v1556 = vmul.f32 %v1492, 0.0625
  %v1557 = vmul.f32 %v1493, 0.0625
  %v1558 = vmul.f32 %v1494, 0.0625
  %v1559 = vmul.f32 %v1495, 0.0625
  %v1560 = vmul.f32 %v1496, 0.0625
  %v1561 = vmul.f32 %v1497, 0.0625
  %v1562 = vmul.f32 %v1498, 0.0625
  %v1563 = vpack.c.bf16 %v1500, %v1499
  %v1564 = vpack.c.bf16 %v1502, %v1501
  %v1565 = vpack.c.bf16 %v1504, %v1503
  %v1566 = vpack.c.bf16 %v1506, %v1505
  %v1567 = vpack.c.bf16 %v1508, %v1507
  %v1568 = vpack.c.bf16 %v1510, %v1509
  %v1569 = vpack.c.bf16 %v1512, %v1511
  %v1570 = vpack.c.bf16 %v1514, %v1513
  %v1571 = vpack.c.bf16 %v1516, %v1515
  %v1572 = vpack.c.bf16 %v1518, %v1517
  %v1573 = vpack.c.bf16 %v1520, %v1519
  %v1574 = vpack.c.bf16 %v1522, %v1521
  %v1575 = vpack.c.bf16 %v1524, %v1523
  %v1576 = vpack.c.bf16 %v1526, %v1525
  %v1577 = vpack.c.bf16 %v1528, %v1527
  %v1578 = vpack.c.bf16 %v1530, %v1529
  %v1579 = vpack.c.bf16 %v1532, %v1531
  %v1580 = vpack.c.bf16 %v1534, %v1533
  %v1581 = vpack.c.bf16 %v1536, %v1535
  %v1582 = vpack.c.bf16 %v1538, %v1537
  %v1583 = vpack.c.bf16 %v1540, %v1539
  %v1584 = vpack.c.bf16 %v1542, %v1541
  %v1585 = vpack.c.bf16 %v1544, %v1543
  %v1586 = vpack.c.bf16 %v1546, %v1545
  %v1587 = vpack.c.bf16 %v1548, %v1547
  %v1588 = vpack.c.bf16 %v1550, %v1549
  %v1589 = vpack.c.bf16 %v1552, %v1551
  %v1590 = vpack.c.bf16 %v1554, %v1553
  %v1591 = vpack.c.bf16 %v1556, %v1555
  %v1592 = vpack.c.bf16 %v1558, %v1557
  %v1593 = vpack.c.bf16 %v1560, %v1559
  %v1594 = vpack.c.bf16 %v1562, %v1561
  %v1596 = vshrl.u32 %v1563, 16
  %v1598 = vrot.slane %v1596, 7
  %v1599 = vshll.u32 %v1563, 16
  %v1601 = vor.u32 %v1598, %v1599
  %v1603 = vshrl.u32 %v1564, 16
  %v1605 = vrot.slane %v1603, 7
  %v1606 = vshll.u32 %v1564, 16
  %v1608 = vor.u32 %v1605, %v1606
  %v1610 = vshrl.u32 %v1565, 16
  %v1612 = vrot.slane %v1610, 7
  %v1613 = vshll.u32 %v1565, 16
  %v1615 = vor.u32 %v1612, %v1613
  %v1617 = vshrl.u32 %v1566, 16
  %v1619 = vrot.slane %v1617, 7
  %v1620 = vshll.u32 %v1566, 16
  %v1622 = vor.u32 %v1619, %v1620
  %v1624 = vshrl.u32 %v1567, 16
  %v1626 = vrot.slane %v1624, 7
  %v1627 = vshll.u32 %v1567, 16
  %v1629 = vor.u32 %v1626, %v1627
  %v1631 = vshrl.u32 %v1568, 16
  %v1633 = vrot.slane %v1631, 7
  %v1634 = vshll.u32 %v1568, 16
  %v1636 = vor.u32 %v1633, %v1634
  %v1638 = vshrl.u32 %v1569, 16
  %v1640 = vrot.slane %v1638, 7
  %v1641 = vshll.u32 %v1569, 16
  %v1643 = vor.u32 %v1640, %v1641
  %v1645 = vshrl.u32 %v1570, 16
  %v1647 = vrot.slane %v1645, 7
  %v1648 = vshll.u32 %v1570, 16
  %v1650 = vor.u32 %v1647, %v1648
  %v1652 = vshrl.u32 %v1571, 16
  %v1654 = vrot.slane %v1652, 7
  %v1655 = vshll.u32 %v1571, 16
  %v1657 = vor.u32 %v1654, %v1655
  %v1659 = vshrl.u32 %v1572, 16
  %v1661 = vrot.slane %v1659, 7
  %v1662 = vshll.u32 %v1572, 16
  %v1664 = vor.u32 %v1661, %v1662
  %v1666 = vshrl.u32 %v1573, 16
  %v1668 = vrot.slane %v1666, 7
  %v1669 = vshll.u32 %v1573, 16
  %v1671 = vor.u32 %v1668, %v1669
  %v1673 = vshrl.u32 %v1574, 16
  %v1675 = vrot.slane %v1673, 7
  %v1676 = vshll.u32 %v1574, 16
  %v1678 = vor.u32 %v1675, %v1676
  %v1680 = vshrl.u32 %v1575, 16
  %v1682 = vrot.slane %v1680, 7
  %v1683 = vshll.u32 %v1575, 16
  %v1685 = vor.u32 %v1682, %v1683
  %v1687 = vshrl.u32 %v1576, 16
  %v1689 = vrot.slane %v1687, 7
  %v1690 = vshll.u32 %v1576, 16
  %v1692 = vor.u32 %v1689, %v1690
  %v1694 = vshrl.u32 %v1577, 16
  %v1696 = vrot.slane %v1694, 7
  %v1697 = vshll.u32 %v1577, 16
  %v1699 = vor.u32 %v1696, %v1697
  %v1701 = vshrl.u32 %v1578, 16
  %v1703 = vrot.slane %v1701, 7
  %v1704 = vshll.u32 %v1578, 16
  %v1706 = vor.u32 %v1703, %v1704
  %v1708 = vshrl.u32 %v1579, 16
  %v1710 = vrot.slane %v1708, 7
  %v1711 = vshll.u32 %v1579, 16
  %v1713 = vor.u32 %v1710, %v1711
  %v1715 = vshrl.u32 %v1580, 16
  %v1717 = vrot.slane %v1715, 7
  %v1718 = vshll.u32 %v1580, 16
  %v1720 = vor.u32 %v1717, %v1718
  %v1722 = vshrl.u32 %v1581, 16
  %v1724 = vrot.slane %v1722, 7
  %v1725 = vshll.u32 %v1581, 16
  %v1727 = vor.u32 %v1724, %v1725
  %v1729 = vshrl.u32 %v1582, 16
  %v1731 = vrot.slane %v1729, 7
  %v1732 = vshll.u32 %v1582, 16
  %v1734 = vor.u32 %v1731, %v1732
  %v1736 = vshrl.u32 %v1583, 16
  %v1738 = vrot.slane %v1736, 7
  %v1739 = vshll.u32 %v1583, 16
  %v1741 = vor.u32 %v1738, %v1739
  %v1743 = vshrl.u32 %v1584, 16
  %v1745 = vrot.slane %v1743, 7
  %v1746 = vshll.u32 %v1584, 16
  %v1748 = vor.u32 %v1745, %v1746
  %v1750 = vshrl.u32 %v1585, 16
  %v1752 = vrot.slane %v1750, 7
  %v1753 = vshll.u32 %v1585, 16
  %v1755 = vor.u32 %v1752, %v1753
  %v1757 = vshrl.u32 %v1586, 16
  %v1759 = vrot.slane %v1757, 7
  %v1760 = vshll.u32 %v1586, 16
  %v1762 = vor.u32 %v1759, %v1760
  %v1764 = vshrl.u32 %v1587, 16
  %v1766 = vrot.slane %v1764, 7
  %v1767 = vshll.u32 %v1587, 16
  %v1769 = vor.u32 %v1766, %v1767
  %v1771 = vshrl.u32 %v1588, 16
  %v1773 = vrot.slane %v1771, 7
  %v1774 = vshll.u32 %v1588, 16
  %v1776 = vor.u32 %v1773, %v1774
  %v1778 = vshrl.u32 %v1589, 16
  %v1780 = vrot.slane %v1778, 7
  %v1781 = vshll.u32 %v1589, 16
  %v1783 = vor.u32 %v1780, %v1781
  %v1785 = vshrl.u32 %v1590, 16
  %v1787 = vrot.slane %v1785, 7
  %v1788 = vshll.u32 %v1590, 16
  %v1790 = vor.u32 %v1787, %v1788
  %v1792 = vshrl.u32 %v1591, 16
  %v1794 = vrot.slane %v1792, 7
  %v1795 = vshll.u32 %v1591, 16
  %v1797 = vor.u32 %v1794, %v1795
  %v1799 = vshrl.u32 %v1592, 16
  %v1801 = vrot.slane %v1799, 7
  %v1802 = vshll.u32 %v1592, 16
  %v1804 = vor.u32 %v1801, %v1802
  %v1806 = vshrl.u32 %v1593, 16
  %v1808 = vrot.slane %v1806, 7
  %v1809 = vshll.u32 %v1593, 16
  %v1811 = vor.u32 %v1808, %v1809
  %v1813 = vshrl.u32 %v1594, 16
  %v1815 = vrot.slane %v1813, 7
  %v1816 = vshll.u32 %v1594, 16
  %v1818 = vor.u32 %v1815, %v1816
  %vm1883 = vcmask 1040384
  %vm1884 = vsmask.f32 256
  %vm1885 = vmand %vm1883, %vm1884
  %v1886 = vsel %vm1885, 0, %v1601
  %v1887 = vsel %vm1885, 0, %v1608
  %v1888 = vsel %vm1885, 0, %v1615
  %v1889 = vsel %vm1885, 0, %v1622
  %v1890 = vsel %vm1885, 0, %v1629
  %v1891 = vsel %vm1885, 0, %v1636
  %v1892 = vsel %vm1885, 0, %v1643
  %v1893 = vsel %vm1885, 0, %v1650
  %v1894 = vsel %vm1885, 0, %v1657
  %v1895 = vsel %vm1885, 0, %v1664
  %v1896 = vsel %vm1885, 0, %v1671
  %v1897 = vsel %vm1885, 0, %v1678
  %v1898 = vsel %vm1885, 0, %v1685
  %v1899 = vsel %vm1885, 0, %v1692
  %v1900 = vsel %vm1885, 0, %v1699
  %v1901 = vsel %vm1885, 0, %v1706
  %v1902 = vsel %vm1885, 0, %v1713
  %v1903 = vsel %vm1885, 0, %v1720
  %v1904 = vsel %vm1885, 0, %v1727
  %v1905 = vsel %vm1885, 0, %v1734
  %v1906 = vsel %vm1885, 0, %v1741
  %v1907 = vsel %vm1885, 0, %v1748
  %v1908 = vsel %vm1885, 0, %v1755
  %v1909 = vsel %vm1885, 0, %v1762
  %v1910 = vsel %vm1885, 0, %v1769
  %v1911 = vsel %vm1885, 0, %v1776
  %v1912 = vsel %vm1885, 0, %v1783
  %v1913 = vsel %vm1885, 0, %v1790
  %v1914 = vsel %vm1885, 0, %v1797
  %v1915 = vsel %vm1885, 0, %v1804
  %v1916 = vsel %vm1885, 0, %v1811
  %v1917 = vsel %vm1885, 0, %v1818
  %v1918 = vsel %vm1885, %v1598, 0
  %v1919 = vsel %vm1885, %v1605, 0
  %v1920 = vsel %vm1885, %v1612, 0
  %v1921 = vsel %vm1885, %v1619, 0
  %v1922 = vsel %vm1885, %v1626, 0
  %v1923 = vsel %vm1885, %v1633, 0
  %v1924 = vsel %vm1885, %v1640, 0
  %v1925 = vsel %vm1885, %v1647, 0
  %v1926 = vsel %vm1885, %v1654, 0
  %v1927 = vsel %vm1885, %v1661, 0
  %v1928 = vsel %vm1885, %v1668, 0
  %v1929 = vsel %vm1885, %v1675, 0
  %v1930 = vsel %vm1885, %v1682, 0
  %v1931 = vsel %vm1885, %v1689, 0
  %v1932 = vsel %vm1885, %v1696, 0
  %v1933 = vsel %vm1885, %v1703, 0
  %v1934 = vsel %vm1885, %v1710, 0
  %v1935 = vsel %vm1885, %v1717, 0
  %v1936 = vsel %vm1885, %v1724, 0
  %v1937 = vsel %vm1885, %v1731, 0
  %v1938 = vsel %vm1885, %v1738, 0
  %v1939 = vsel %vm1885, %v1745, 0
  %v1940 = vsel %vm1885, %v1752, 0
  %v1941 = vsel %vm1885, %v1759, 0
  %v1942 = vsel %vm1885, %v1766, 0
  %v1943 = vsel %vm1885, %v1773, 0
  %v1944 = vsel %vm1885, %v1780, 0
  %v1945 = vsel %vm1885, %v1787, 0
  %v1946 = vsel %vm1885, %v1794, 0
  %v1947 = vsel %vm1885, %v1801, 0
  %v1948 = vsel %vm1885, %v1808, 0
  %v1949 = vsel %vm1885, %v1815, 0
  %vm1950 = vsmask.f32 7424
  %v1952 = vshrl.u32 0, 16
  %v1954 = vshll.u32 0, 16
  %v1956 = vrot.slane %v1954, 1
  %v1957 = vor.u32 %v1952, %v1956
  %v1958 = vsel %vm1950, %v1957, %v1956
  %v1960 = vshrl.u32 %v1886, 16
  %v1962 = vshll.u32 %v1886, 16
  %v1964 = vrot.slane %v1962, 1
  %v1965 = vor.u32 %v1960, %v1964
  %v1967 = vshll.u32 %v1918, 16
  %v1969 = vrot.slane %v1967, 1
  %v1970 = vsel %vm1950, %v1965, %v1969
  %v1972 = vshrl.u32 %v1887, 16
  %v1974 = vshll.u32 %v1887, 16
  %v1976 = vrot.slane %v1974, 1
  %v1977 = vor.u32 %v1972, %v1976
  %v1979 = vshll.u32 %v1919, 16
  %v1981 = vrot.slane %v1979, 1
  %v1982 = vsel %vm1950, %v1977, %v1981
  %v1984 = vshrl.u32 %v1888, 16
  %v1986 = vshll.u32 %v1888, 16
  %v1988 = vrot.slane %v1986, 1
  %v1989 = vor.u32 %v1984, %v1988
  %v1991 = vshll.u32 %v1920, 16
  %v1993 = vrot.slane %v1991, 1
  %v1994 = vsel %vm1950, %v1989, %v1993
  %v1996 = vshrl.u32 %v1889, 16
  %v1998 = vshll.u32 %v1889, 16
  %v2000 = vrot.slane %v1998, 1
  %v2001 = vor.u32 %v1996, %v2000
  %v2003 = vshll.u32 %v1921, 16
  %v2005 = vrot.slane %v2003, 1
  %v2006 = vsel %vm1950, %v2001, %v2005
  %v2008 = vshrl.u32 %v1890, 16
  %v2010 = vshll.u32 %v1890, 16
  %v2012 = vrot.slane %v2010, 1
  %v2013 = vor.u32 %v2008, %v2012
  %v2015 = vshll.u32 %v1922, 16
  %v2017 = vrot.slane %v2015, 1
  %v2018 = vsel %vm1950, %v2013, %v2017
  %v2020 = vshrl.u32 %v1891, 16
  %v2022 = vshll.u32 %v1891, 16
  %v2024 = vrot.slane %v2022, 1
  %v2025 = vor.u32 %v2020, %v2024
  %v2027 = vshll.u32 %v1923, 16
  %v2029 = vrot.slane %v2027, 1
  %v2030 = vsel %vm1950, %v2025, %v2029
  %v2032 = vshrl.u32 %v1892, 16
  %v2034 = vshll.u32 %v1892, 16
  %v2036 = vrot.slane %v2034, 1
  %v2037 = vor.u32 %v2032, %v2036
  %v2039 = vshll.u32 %v1924, 16
  %v2041 = vrot.slane %v2039, 1
  %v2042 = vsel %vm1950, %v2037, %v2041
  %v2044 = vshrl.u32 %v1893, 16
  %v2046 = vshll.u32 %v1893, 16
  %v2048 = vrot.slane %v2046, 1
  %v2049 = vor.u32 %v2044, %v2048
  %v2051 = vshll.u32 %v1925, 16
  %v2053 = vrot.slane %v2051, 1
  %v2054 = vsel %vm1950, %v2049, %v2053
  %v2056 = vshrl.u32 %v1894, 16
  %v2058 = vshll.u32 %v1894, 16
  %v2060 = vrot.slane %v2058, 1
  %v2061 = vor.u32 %v2056, %v2060
  %v2063 = vshll.u32 %v1926, 16
  %v2065 = vrot.slane %v2063, 1
  %v2066 = vsel %vm1950, %v2061, %v2065
  %v2068 = vshrl.u32 %v1895, 16
  %v2070 = vshll.u32 %v1895, 16
  %v2072 = vrot.slane %v2070, 1
  %v2073 = vor.u32 %v2068, %v2072
  %v2075 = vshll.u32 %v1927, 16
  %v2077 = vrot.slane %v2075, 1
  %v2078 = vsel %vm1950, %v2073, %v2077
  %v2080 = vshrl.u32 %v1896, 16
  %v2082 = vshll.u32 %v1896, 16
  %v2084 = vrot.slane %v2082, 1
  %v2085 = vor.u32 %v2080, %v2084
  %v2087 = vshll.u32 %v1928, 16
  %v2089 = vrot.slane %v2087, 1
  %v2090 = vsel %vm1950, %v2085, %v2089
  %v2092 = vshrl.u32 %v1897, 16
  %v2094 = vshll.u32 %v1897, 16
  %v2096 = vrot.slane %v2094, 1
  %v2097 = vor.u32 %v2092, %v2096
  %v2099 = vshll.u32 %v1929, 16
  %v2101 = vrot.slane %v2099, 1
  %v2102 = vsel %vm1950, %v2097, %v2101
  %v2104 = vshrl.u32 %v1898, 16
  %v2106 = vshll.u32 %v1898, 16
  %v2108 = vrot.slane %v2106, 1
  %v2109 = vor.u32 %v2104, %v2108
  %v2111 = vshll.u32 %v1930, 16
  %v2113 = vrot.slane %v2111, 1
  %v2114 = vsel %vm1950, %v2109, %v2113
  %v2116 = vshrl.u32 %v1899, 16
  %v2118 = vshll.u32 %v1899, 16
  %v2120 = vrot.slane %v2118, 1
  %v2121 = vor.u32 %v2116, %v2120
  %v2123 = vshll.u32 %v1931, 16
  %v2125 = vrot.slane %v2123, 1
  %v2126 = vsel %vm1950, %v2121, %v2125
  %v2128 = vshrl.u32 %v1900, 16
  %v2130 = vshll.u32 %v1900, 16
  %v2132 = vrot.slane %v2130, 1
  %v2133 = vor.u32 %v2128, %v2132
  %v2135 = vshll.u32 %v1932, 16
  %v2137 = vrot.slane %v2135, 1
  %v2138 = vsel %vm1950, %v2133, %v2137
  %v2140 = vshrl.u32 %v1901, 16
  %v2142 = vshll.u32 %v1901, 16
  %v2144 = vrot.slane %v2142, 1
  %v2145 = vor.u32 %v2140, %v2144
  %v2147 = vshll.u32 %v1933, 16
  %v2149 = vrot.slane %v2147, 1
  %v2150 = vsel %vm1950, %v2145, %v2149
  %v2152 = vshrl.u32 %v1902, 16
  %v2154 = vshll.u32 %v1902, 16
  %v2156 = vrot.slane %v2154, 1
  %v2157 = vor.u32 %v2152, %v2156
  %v2159 = vshll.u32 %v1934, 16
  %v2161 = vrot.slane %v2159, 1
  %v2162 = vsel %vm1950, %v2157, %v2161
  %v2164 = vshrl.u32 %v1903, 16
  %v2166 = vshll.u32 %v1903, 16
  %v2168 = vrot.slane %v2166, 1
  %v2169 = vor.u32 %v2164, %v2168
  %v2171 = vshll.u32 %v1935, 16
  %v2173 = vrot.slane %v2171, 1
  %v2174 = vsel %vm1950, %v2169, %v2173
  %v2176 = vshrl.u32 %v1904, 16
  %v2178 = vshll.u32 %v1904, 16
  %v2180 = vrot.slane %v2178, 1
  %v2181 = vor.u32 %v2176, %v2180
  %v2183 = vshll.u32 %v1936, 16
  %v2185 = vrot.slane %v2183, 1
  %v2186 = vsel %vm1950, %v2181, %v2185
  %v2188 = vshrl.u32 %v1905, 16
  %v2190 = vshll.u32 %v1905, 16
  %v2192 = vrot.slane %v2190, 1
  %v2193 = vor.u32 %v2188, %v2192
  %v2195 = vshll.u32 %v1937, 16
  %v2197 = vrot.slane %v2195, 1
  %v2198 = vsel %vm1950, %v2193, %v2197
  %v2200 = vshrl.u32 %v1906, 16
  %v2202 = vshll.u32 %v1906, 16
  %v2204 = vrot.slane %v2202, 1
  %v2205 = vor.u32 %v2200, %v2204
  %v2207 = vshll.u32 %v1938, 16
  %v2209 = vrot.slane %v2207, 1
  %v2210 = vsel %vm1950, %v2205, %v2209
  %v2212 = vshrl.u32 %v1907, 16
  %v2214 = vshll.u32 %v1907, 16
  %v2216 = vrot.slane %v2214, 1
  %v2217 = vor.u32 %v2212, %v2216
  %v2219 = vshll.u32 %v1939, 16
  %v2221 = vrot.slane %v2219, 1
  %v2222 = vsel %vm1950, %v2217, %v2221
  %v2224 = vshrl.u32 %v1908, 16
  %v2226 = vshll.u32 %v1908, 16
  %v2228 = vrot.slane %v2226, 1
  %v2229 = vor.u32 %v2224, %v2228
  %v2231 = vshll.u32 %v1940, 16
  %v2233 = vrot.slane %v2231, 1
  %v2234 = vsel %vm1950, %v2229, %v2233
  %v2236 = vshrl.u32 %v1909, 16
  %v2238 = vshll.u32 %v1909, 16
  %v2240 = vrot.slane %v2238, 1
  %v2241 = vor.u32 %v2236, %v2240
  %v2243 = vshll.u32 %v1941, 16
  %v2245 = vrot.slane %v2243, 1
  %v2246 = vsel %vm1950, %v2241, %v2245
  %v2248 = vshrl.u32 %v1910, 16
  %v2250 = vshll.u32 %v1910, 16
  %v2252 = vrot.slane %v2250, 1
  %v2253 = vor.u32 %v2248, %v2252
  %v2255 = vshll.u32 %v1942, 16
  %v2257 = vrot.slane %v2255, 1
  %v2258 = vsel %vm1950, %v2253, %v2257
  %v2260 = vshrl.u32 %v1911, 16
  %v2262 = vshll.u32 %v1911, 16
  %v2264 = vrot.slane %v2262, 1
  %v2265 = vor.u32 %v2260, %v2264
  %v2267 = vshll.u32 %v1943, 16
  %v2269 = vrot.slane %v2267, 1
  %v2270 = vsel %vm1950, %v2265, %v2269
  %v2272 = vshrl.u32 %v1912, 16
  %v2274 = vshll.u32 %v1912, 16
  %v2276 = vrot.slane %v2274, 1
  %v2277 = vor.u32 %v2272, %v2276
  %v2279 = vshll.u32 %v1944, 16
  %v2281 = vrot.slane %v2279, 1
  %v2282 = vsel %vm1950, %v2277, %v2281
  %v2284 = vshrl.u32 %v1913, 16
  %v2286 = vshll.u32 %v1913, 16
  %v2288 = vrot.slane %v2286, 1
  %v2289 = vor.u32 %v2284, %v2288
  %v2291 = vshll.u32 %v1945, 16
  %v2293 = vrot.slane %v2291, 1
  %v2294 = vsel %vm1950, %v2289, %v2293
  %v2296 = vshrl.u32 %v1914, 16
  %v2298 = vshll.u32 %v1914, 16
  %v2300 = vrot.slane %v2298, 1
  %v2301 = vor.u32 %v2296, %v2300
  %v2303 = vshll.u32 %v1946, 16
  %v2305 = vrot.slane %v2303, 1
  %v2306 = vsel %vm1950, %v2301, %v2305
  %v2308 = vshrl.u32 %v1915, 16
  %v2310 = vshll.u32 %v1915, 16
  %v2312 = vrot.slane %v2310, 1
  %v2313 = vor.u32 %v2308, %v2312
  %v2315 = vshll.u32 %v1947, 16
  %v2317 = vrot.slane %v2315, 1
  %v2318 = vsel %vm1950, %v2313, %v2317
  %v2320 = vshrl.u32 %v1916, 16
  %v2322 = vshll.u32 %v1916, 16
  %v2324 = vrot.slane %v2322, 1
  %v2325 = vor.u32 %v2320, %v2324
  %v2327 = vshll.u32 %v1948, 16
  %v2329 = vrot.slane %v2327, 1
  %v2330 = vsel %vm1950, %v2325, %v2329
  %v2332 = vshrl.u32 %v1917, 16
  %v2334 = vshll.u32 %v1917, 16
  %v2336 = vrot.slane %v2334, 1
  %v2337 = vor.u32 %v2332, %v2336
  %v2339 = vshll.u32 %v1949, 16
  %v2341 = vrot.slane %v2339, 1
  %v2342 = vsel %vm1950, %v2337, %v2341
  %2343 = vrot.lane.b32.xlu0 %v1958, 4
  %v2344 = vpop.permute.xlu0 %2343
  %2345 = vrot.lane.b32.xlu0 %v1970, 4
  %v2346 = vpop.permute.xlu0 %2345
  %2347 = vrot.lane.b32.xlu0 %v1982, 4
  %v2348 = vpop.permute.xlu0 %2347
  %2349 = vrot.lane.b32.xlu0 %v1994, 4
  %v2350 = vpop.permute.xlu0 %2349
  %2351 = vrot.lane.b32.xlu0 %v2006, 4
  %v2352 = vpop.permute.xlu0 %2351
  %2353 = vrot.lane.b32.xlu0 %v2018, 4
  %v2354 = vpop.permute.xlu0 %2353
  %2355 = vrot.lane.b32.xlu0 %v2030, 4
  %v2356 = vpop.permute.xlu0 %2355
  %2357 = vrot.lane.b32.xlu0 %v2042, 4
  %v2358 = vpop.permute.xlu0 %2357
  %2359 = vrot.lane.b32.xlu0 %v2054, 4
  %v2360 = vpop.permute.xlu0 %2359
  %2361 = vrot.lane.b32.xlu0 %v2066, 4
  %v2362 = vpop.permute.xlu0 %2361
  %2363 = vrot.lane.b32.xlu0 %v2078, 4
  %v2364 = vpop.permute.xlu0 %2363
  %2365 = vrot.lane.b32.xlu0 %v2090, 4
  %v2366 = vpop.permute.xlu0 %2365
  %2367 = vrot.lane.b32.xlu0 %v2102, 4
  %v2368 = vpop.permute.xlu0 %2367
  %2369 = vrot.lane.b32.xlu0 %v2114, 4
  %v2370 = vpop.permute.xlu0 %2369
  %2371 = vrot.lane.b32.xlu0 %v2126, 4
  %v2372 = vpop.permute.xlu0 %2371
  %2373 = vrot.lane.b32.xlu0 %v2138, 4
  %v2374 = vpop.permute.xlu0 %2373
  %2375 = vrot.lane.b32.xlu0 %v2150, 4
  %v2376 = vpop.permute.xlu0 %2375
  %2377 = vrot.lane.b32.xlu0 %v2162, 4
  %v2378 = vpop.permute.xlu0 %2377
  %2379 = vrot.lane.b32.xlu0 %v2174, 4
  %v2380 = vpop.permute.xlu0 %2379
  %2381 = vrot.lane.b32.xlu0 %v2186, 4
  %v2382 = vpop.permute.xlu0 %2381
  %2383 = vrot.lane.b32.xlu0 %v2198, 4
  %v2384 = vpop.permute.xlu0 %2383
  %2385 = vrot.lane.b32.xlu0 %v2210, 4
  %v2386 = vpop.permute.xlu0 %2385
  %2387 = vrot.lane.b32.xlu0 %v2222, 4
  %v2388 = vpop.permute.xlu0 %2387
  %2389 = vrot.lane.b32.xlu0 %v2234, 4
  %v2390 = vpop.permute.xlu0 %2389
  %2391 = vrot.lane.b32.xlu0 %v2246, 4
  %v2392 = vpop.permute.xlu0 %2391
  %2393 = vrot.lane.b32.xlu0 %v2258, 4
  %v2394 = vpop.permute.xlu0 %2393
  %2395 = vrot.lane.b32.xlu0 %v2270, 4
  %v2396 = vpop.permute.xlu0 %2395
  %2397 = vrot.lane.b32.xlu0 %v2282, 4
  %v2398 = vpop.permute.xlu0 %2397
  %2399 = vrot.lane.b32.xlu0 %v2294, 4
  %v2400 = vpop.permute.xlu0 %2399
  %2401 = vrot.lane.b32.xlu0 %v2306, 4
  %v2402 = vpop.permute.xlu0 %2401
  %2403 = vrot.lane.b32.xlu0 %v2318, 4
  %v2404 = vpop.permute.xlu0 %2403
  %2405 = vrot.lane.b32.xlu0 %v2330, 4
  %v2406 = vpop.permute.xlu0 %2405
  %2407 = vrot.lane.b32.xlu0 %v2342, 4
  %v2408 = vpop.permute.xlu0 %2407
  %vm2474 = vcmask 1046528
  %v2475 = vrot.slane 0, 1
  %v2476 = vsel %vm2474, %v2475, %v2475
  %v2477 = vrot.slane %v1886, 1
  %v2478 = vrot.slane %v1918, 1
  %v2479 = vsel %vm2474, %v2477, %v2478
  %v2480 = vrot.slane %v1887, 1
  %v2481 = vrot.slane %v1919, 1
  %v2482 = vsel %vm2474, %v2480, %v2481
  %v2483 = vrot.slane %v1888, 1
  %v2484 = vrot.slane %v1920, 1
  %v2485 = vsel %vm2474, %v2483, %v2484
  %v2486 = vrot.slane %v1889, 1
  %v2487 = vrot.slane %v1921, 1
  %v2488 = vsel %vm2474, %v2486, %v2487
  %v2489 = vrot.slane %v1890, 1
  %v2490 = vrot.slane %v1922, 1
  %v2491 = vsel %vm2474, %v2489, %v2490
  %v2492 = vrot.slane %v1891, 1
  %v2493 = vrot.slane %v1923, 1
  %v2494 = vsel %vm2474, %v2492, %v2493
  %v2495 = vrot.slane %v1892, 1
  %v2496 = vrot.slane %v1924, 1
  %v2497 = vsel %vm2474, %v2495, %v2496
  %v2498 = vrot.slane %v1893, 1
  %v2499 = vrot.slane %v1925, 1
  %v2500 = vsel %vm2474, %v2498, %v2499
  %v2501 = vrot.slane %v1894, 1
  %v2502 = vrot.slane %v1926, 1
  %v2503 = vsel %vm2474, %v2501, %v2502
  %v2504 = vrot.slane %v1895, 1
  %v2505 = vrot.slane %v1927, 1
  %v2506 = vsel %vm2474, %v2504, %v2505
  %v2507 = vrot.slane %v1896, 1
  %v2508 = vrot.slane %v1928, 1
  %v2509 = vsel %vm2474, %v2507, %v2508
  %v2510 = vrot.slane %v1897, 1
  %v2511 = vrot.slane %v1929, 1
  %v2512 = vsel %vm2474, %v2510, %v2511
  %v2513 = vrot.slane %v1898, 1
  %v2514 = vrot.slane %v1930, 1
  %v2515 = vsel %vm2474, %v2513, %v2514
  %v2516 = vrot.slane %v1899, 1
  %v2517 = vrot.slane %v1931, 1
  %v2518 = vsel %vm2474, %v2516, %v2517
  %v2519 = vrot.slane %v1900, 1
  %v2520 = vrot.slane %v1932, 1
  %v2521 = vsel %vm2474, %v2519, %v2520
  %v2522 = vrot.slane %v1901, 1
  %v2523 = vrot.slane %v1933, 1
  %v2524 = vsel %vm2474, %v2522, %v2523
  %v2525 = vrot.slane %v1902, 1
  %v2526 = vrot.slane %v1934, 1
  %v2527 = vsel %vm2474, %v2525, %v2526
  %v2528 = vrot.slane %v1903, 1
  %v2529 = vrot.slane %v1935, 1
  %v2530 = vsel %vm2474, %v2528, %v2529
  %v2531 = vrot.slane %v1904, 1
  %v2532 = vrot.slane %v1936, 1
  %v2533 = vsel %vm2474, %v2531, %v2532
  %v2534 = vrot.slane %v1905, 1
  %v2535 = vrot.slane %v1937, 1
  %v2536 = vsel %vm2474, %v2534, %v2535
  %v2537 = vrot.slane %v1906, 1
  %v2538 = vrot.slane %v1938, 1
  %v2539 = vsel %vm2474, %v2537, %v2538
  %v2540 = vrot.slane %v1907, 1
  %v2541 = vrot.slane %v1939, 1
  %v2542 = vsel %vm2474, %v2540, %v2541
  %v2543 = vrot.slane %v1908, 1
  %v2544 = vrot.slane %v1940, 1
  %v2545 = vsel %vm2474, %v2543, %v2544
  %v2546 = vrot.slane %v1909, 1
  %v2547 = vrot.slane %v1941, 1
  %v2548 = vsel %vm2474, %v2546, %v2547
  %v2549 = vrot.slane %v1910, 1
  %v2550 = vrot.slane %v1942, 1
  %v2551 = vsel %vm2474, %v2549, %v2550
  %v2552 = vrot.slane %v1911, 1
  %v2553 = vrot.slane %v1943, 1
  %v2554 = vsel %vm2474, %v2552, %v2553
  %v2555 = vrot.slane %v1912, 1
  %v2556 = vrot.slane %v1944, 1
  %v2557 = vsel %vm2474, %v2555, %v2556
  %v2558 = vrot.slane %v1913, 1
  %v2559 = vrot.slane %v1945, 1
  %v2560 = vsel %vm2474, %v2558, %v2559
  %v2561 = vrot.slane %v1914, 1
  %v2562 = vrot.slane %v1946, 1
  %v2563 = vsel %vm2474, %v2561, %v2562
  %v2564 = vrot.slane %v1915, 1
  %v2565 = vrot.slane %v1947, 1
  %v2566 = vsel %vm2474, %v2564, %v2565
  %v2567 = vrot.slane %v1916, 1
  %v2568 = vrot.slane %v1948, 1
  %v2569 = vsel %vm2474, %v2567, %v2568
  %v2570 = vrot.slane %v1917, 1
  %v2571 = vrot.slane %v1949, 1
  %v2572 = vsel %vm2474, %v2570, %v2571
  %2573 = vrot.lane.b32.xlu0 %v2476, 8
  %v2574 = vpop.permute.xlu0 %2573
  %2575 = vrot.lane.b32.xlu0 %v2479, 8
  %v2576 = vpop.permute.xlu0 %2575
  %2577 = vrot.lane.b32.xlu0 %v2482, 8
  %v2578 = vpop.permute.xlu0 %2577
  %2579 = vrot.lane.b32.xlu0 %v2485, 8
  %v2580 = vpop.permute.xlu0 %2579
  %2581 = vrot.lane.b32.xlu0 %v2488, 8
  %v2582 = vpop.permute.xlu0 %2581
  %2583 = vrot.lane.b32.xlu0 %v2491, 8
  %v2584 = vpop.permute.xlu0 %2583
  %2585 = vrot.lane.b32.xlu0 %v2494, 8
  %v2586 = vpop.permute.xlu0 %2585
  %2587 = vrot.lane.b32.xlu0 %v2497, 8
  %v2588 = vpop.permute.xlu0 %2587
  %2589 = vrot.lane.b32.xlu0 %v2500, 8
  %v2590 = vpop.permute.xlu0 %2589
  %2591 = vrot.lane.b32.xlu0 %v2503, 8
  %v2592 = vpop.permute.xlu0 %2591
  %2593 = vrot.lane.b32.xlu0 %v2506, 8
  %v2594 = vpop.permute.xlu0 %2593
  %2595 = vrot.lane.b32.xlu0 %v2509, 8
  %v2596 = vpop.permute.xlu0 %2595
  %2597 = vrot.lane.b32.xlu0 %v2512, 8
  %v2598 = vpop.permute.xlu0 %2597
  %2599 = vrot.lane.b32.xlu0 %v2515, 8
  %v2600 = vpop.permute.xlu0 %2599
  %2601 = vrot.lane.b32.xlu0 %v2518, 8
  %v2602 = vpop.permute.xlu0 %2601
  %2603 = vrot.lane.b32.xlu0 %v2521, 8
  %v2604 = vpop.permute.xlu0 %2603
  %2605 = vrot.lane.b32.xlu0 %v2524, 8
  %v2606 = vpop.permute.xlu0 %2605
  %2607 = vrot.lane.b32.xlu0 %v2527, 8
  %v2608 = vpop.permute.xlu0 %2607
  %2609 = vrot.lane.b32.xlu0 %v2530, 8
  %v2610 = vpop.permute.xlu0 %2609
  %2611 = vrot.lane.b32.xlu0 %v2533, 8
  %v2612 = vpop.permute.xlu0 %2611
  %2613 = vrot.lane.b32.xlu0 %v2536, 8
  %v2614 = vpop.permute.xlu0 %2613
  %2615 = vrot.lane.b32.xlu0 %v2539, 8
  %v2616 = vpop.permute.xlu0 %2615
  %2617 = vrot.lane.b32.xlu0 %v2542, 8
  %v2618 = vpop.permute.xlu0 %2617
  %2619 = vrot.lane.b32.xlu0 %v2545, 8
  %v2620 = vpop.permute.xlu0 %2619
  %2621 = vrot.lane.b32.xlu0 %v2548, 8
  %v2622 = vpop.permute.xlu0 %2621
  %2623 = vrot.lane.b32.xlu0 %v2551, 8
  %v2624 = vpop.permute.xlu0 %2623
  %2625 = vrot.lane.b32.xlu0 %v2554, 8
  %v2626 = vpop.permute.xlu0 %2625
  %2627 = vrot.lane.b32.xlu0 %v2557, 8
  %v2628 = vpop.permute.xlu0 %2627
  %2629 = vrot.lane.b32.xlu0 %v2560, 8
  %v2630 = vpop.permute.xlu0 %2629
  %2631 = vrot.lane.b32.xlu0 %v2563, 8
  %v2632 = vpop.permute.xlu0 %2631
  %2633 = vrot.lane.b32.xlu0 %v2566, 8
  %v2634 = vpop.permute.xlu0 %2633
  %2635 = vrot.lane.b32.xlu0 %v2569, 8
  %v2636 = vpop.permute.xlu0 %2635
  %2637 = vrot.lane.b32.xlu0 %v2572, 8
  %v2638 = vpop.permute.xlu0 %2637
  %vm2639 = vcmask 31744
  %v2641 = vsel %vm2639, 0, %v2344
  %v2643 = vsel %vm2639, %v1886, %v2346
  %v2645 = vsel %vm2639, %v1887, %v2348
  %v2647 = vsel %vm2639, %v1888, %v2350
  %v2649 = vsel %vm2639, %v1889, %v2352
  %v2651 = vsel %vm2639, %v1890, %v2354
  %v2653 = vsel %vm2639, %v1891, %v2356
  %v2655 = vsel %vm2639, %v1892, %v2358
  %v2657 = vsel %vm2639, %v1893, %v2360
  %v2659 = vsel %vm2639, %v1894, %v2362
  %v2661 = vsel %vm2639, %v1895, %v2364
  %v2663 = vsel %vm2639, %v1896, %v2366
  %v2665 = vsel %vm2639, %v1897, %v2368
  %v2667 = vsel %vm2639, %v1898, %v2370
  %v2669 = vsel %vm2639, %v1899, %v2372
  %v2671 = vsel %vm2639, %v1900, %v2374
  %v2673 = vsel %vm2639, %v1901, %v2376
  %v2675 = vsel %vm2639, %v1902, %v2378
  %v2677 = vsel %vm2639, %v1903, %v2380
  %v2679 = vsel %vm2639, %v1904, %v2382
  %v2681 = vsel %vm2639, %v1905, %v2384
  %v2683 = vsel %vm2639, %v1906, %v2386
  %v2685 = vsel %vm2639, %v1907, %v2388
  %v2687 = vsel %vm2639, %v1908, %v2390
  %v2689 = vsel %vm2639, %v1909, %v2392
  %v2691 = vsel %vm2639, %v1910, %v2394
  %v2693 = vsel %vm2639, %v1911, %v2396
  %v2695 = vsel %vm2639, %v1912, %v2398
  %v2697 = vsel %vm2639, %v1913, %v2400
  %v2699 = vsel %vm2639, %v1914, %v2402
  %v2701 = vsel %vm2639, %v1915, %v2404
  %v2703 = vsel %vm2639, %v1916, %v2406
  %v2705 = vsel %vm2639, %v1917, %v2408
  %vm2706 = vcmask 64512
  %v2708 = vsel %vm2706, %v2641, %v2574
  %v2710 = vsel %vm2706, %v2643, %v2576
  %v2712 = vsel %vm2706, %v2645, %v2578
  %v2714 = vsel %vm2706, %v2647, %v2580
  %v2716 = vsel %vm2706, %v2649, %v2582
  %v2718 = vsel %vm2706, %v2651, %v2584
  %v2720 = vsel %vm2706, %v2653, %v2586
  %v2722 = vsel %vm2706, %v2655, %v2588
  %v2724 = vsel %vm2706, %v2657, %v2590
  %v2726 = vsel %vm2706, %v2659, %v2592
  %v2728 = vsel %vm2706, %v2661, %v2594
  %v2730 = vsel %vm2706, %v2663, %v2596
  %v2732 = vsel %vm2706, %v2665, %v2598
  %v2734 = vsel %vm2706, %v2667, %v2600
  %v2736 = vsel %vm2706, %v2669, %v2602
  %v2738 = vsel %vm2706, %v2671, %v2604
  %v2740 = vsel %vm2706, %v2673, %v2606
  %v2742 = vsel %vm2706, %v2675, %v2608
  %v2744 = vsel %vm2706, %v2677, %v2610
  %v2746 = vsel %vm2706, %v2679, %v2612
  %v2748 = vsel %vm2706, %v2681, %v2614
  %v2750 = vsel %vm2706, %v2683, %v2616
  %v2752 = vsel %vm2706, %v2685, %v2618
  %v2754 = vsel %vm2706, %v2687, %v2620
  %v2756 = vsel %vm2706, %v2689, %v2622
  %v2758 = vsel %vm2706, %v2691, %v2624
  %v2760 = vsel %vm2706, %v2693, %v2626
  %v2762 = vsel %vm2706, %v2695, %v2628
  %v2764 = vsel %vm2706, %v2697, %v2630
  %v2766 = vsel %vm2706, %v2699, %v2632
  %v2768 = vsel %vm2706, %v2701, %v2634
  %v2770 = vsel %vm2706, %v2703, %v2636
  %v2772 = vsel %vm2706, %v2705, %v2638
  %v2773 = vld [vmem:[%s1] sm:$0xf]
  %v2774 = vld [vmem:[%s1 + $0x4] sm:$0x3]
  %s2775 = scalar_lea.vmem %s1, 8
  %v2776 = vld [vmem:[%s2775] sm:$0xf]
  %v2777 = vld [vmem:[%s2775 + $0x4] sm:$0x3]
  %v2780 = vunpack.c.l.b16 %v2776
  %v2781 = vunpack.c.l.b16 %v2777
  %v2782 = vpack.c.b16 %v2781, %v2780
  %vm2783 = vcmask 97280
  %v2784 = vsel %vm2783, %v2710, 0
  %v2786 = vsel %vm2783, %v2712, 0
  %v2788 = vsel %vm2783, %v2714, 0
  %v2790 = vsel %vm2783, %v2716, 0
  %v2792 = vsel %vm2783, %v2718, 0
  %v2794 = vsel %vm2783, %v2720, 0
  %v2796 = vsel %vm2783, %v2722, 0
  %v2798 = vsel %vm2783, %v2724, 0
  %v2800 = vsel %vm2783, %v2726, 0
  %v2802 = vsel %vm2783, %v2728, 0
  %v2804 = vsel %vm2783, %v2730, 0
  %v2806 = vsel %vm2783, %v2732, 0
  %v2808 = vsel %vm2783, %v2734, 0
  %v2810 = vsel %vm2783, %v2736, 0
  %v2812 = vsel %vm2783, %v2738, 0
  %v2814 = vsel %vm2783, %v2740, 0
  %v2816 = vsel %vm2783, %v2742, 0
  %v2818 = vsel %vm2783, %v2744, 0
  %v2820 = vsel %vm2783, %v2746, 0
  %v2822 = vsel %vm2783, %v2748, 0
  %v2824 = vsel %vm2783, %v2750, 0
  %v2826 = vsel %vm2783, %v2752, 0
  %v2828 = vsel %vm2783, %v2754, 0
  %v2830 = vsel %vm2783, %v2756, 0
  %v2832 = vsel %vm2783, %v2758, 0
  %v2834 = vsel %vm2783, %v2760, 0
  %v2836 = vsel %vm2783, %v2762, 0
  %v2838 = vsel %vm2783, %v2764, 0
  %v2840 = vsel %vm2783, %v2766, 0
  %v2842 = vsel %vm2783, %v2768, 0
  %v2844 = vsel %vm2783, %v2770, 0
  %v2846 = vsel %vm2783, %v2772, 0
  %v2849 = vsel %vm1014, %v2782, 0
  %2851 = vmatprep.subr.bf16.mxu0 0
  %2852 = vmatpush1.bf16.msra.mxu0 0
  %2853 = vmatprep.subr.bf16.mxu0 0
  %2854 = vmatpush1.bf16.msra.mxu0 0
  %2855 = vmatprep.subr.bf16.mxu0 0
  %2856 = vmatpush1.bf16.msra.mxu0 0
  %2857 = vmatprep.subr.bf16.mxu0 0
  %2858 = vmatpush1.bf16.msra.mxu0 0
  %2859 = vmatprep.subr.bf16.mxu0 0
  %2860 = vmatpush1.bf16.msra.mxu0 0
  %2861 = vmatprep.subr.bf16.mxu0 0
  %2862 = vmatpush1.bf16.msra.mxu0 0
  %2863 = vmatprep.subr.bf16.mxu0 0
  %2864 = vmatpush1.bf16.msra.mxu0 0
  %2865 = vmatprep.subr.bf16.mxu0 0
  %2866 = vmatpush1.bf16.msra.mxu0 %v2849
  %2867 = vmatprep.subr.bf16.mxu0 0
  %2868 = vmatpush2.bf16.msra.mxu0 0
  %2869 = vmatprep.subr.bf16.mxu0 0
  %2870 = vmatpush2.bf16.msra.mxu0 0
  %2871 = vmatprep.subr.bf16.mxu0 0
  %2872 = vmatpush2.bf16.msra.mxu0 0
  %2873 = vmatprep.subr.bf16.mxu0 0
  %2874 = vmatpush2.bf16.msra.mxu0 0
  %2875 = vmatprep.subr.bf16.mxu0 0
  %2876 = vmatpush2.bf16.msra.mxu0 0
  %2877 = vmatprep.subr.bf16.mxu0 0
  %2878 = vmatpush2.bf16.msra.mxu0 0
  %2879 = vmatprep.subr.bf16.mxu0 0
  %2880 = vmatpush2.bf16.msra.mxu0 0
  %2881 = vmatprep.subr.bf16.mxu0 0
  %2882 = vmatpush2.bf16.msra.mxu0 0
  %2883 = vmatprep.mubr.bf16.mxu0 0
  %2884 = vmatmul.mubr.bf16.gmra.mxu0 %v2784
  %v2885 = vpop.f32.mrf.mxu0
  %v2886 = vadd.f32 0.0, %v2885
  %v2887 = vpop.f32.mrf.mxu0
  %v2888 = vpop.f32.mrf.mxu0
  %v2889 = vadd.f32 0.0, %v2888
  %v2890 = vpop.f32.mrf.mxu0
  %2891 = vmatprep.mubr.bf16.mxu0 0
  %2892 = vmatmul.mubr.bf16.gmra.mxu0 %v2786
  %v2893 = vpop.f32.mrf.mxu0
  %v2894 = vadd.f32 0.0, %v2893
  %v2895 = vpop.f32.mrf.mxu0
  %v2896 = vpop.f32.mrf.mxu0
  %v2897 = vadd.f32 0.0, %v2896
  %v2898 = vpop.f32.mrf.mxu0
  %2899 = vmatprep.mubr.bf16.mxu0 0
  %2900 = vmatmul.mubr.bf16.gmra.mxu0 %v2788
  %v2901 = vpop.f32.mrf.mxu0
  %v2902 = vadd.f32 0.0, %v2901
  %v2903 = vpop.f32.mrf.mxu0
  %v2904 = vpop.f32.mrf.mxu0
  %v2905 = vadd.f32 0.0, %v2904
  %v2906 = vpop.f32.mrf.mxu0
  %2907 = vmatprep.mubr.bf16.mxu0 0
  %2908 = vmatmul.mubr.bf16.gmra.mxu0 %v2790
  %v2909 = vpop.f32.mrf.mxu0
  %v2910 = vadd.f32 0.0, %v2909
  %v2911 = vpop.f32.mrf.mxu0
  %v2912 = vpop.f32.mrf.mxu0
  %v2913 = vadd.f32 0.0, %v2912
  %v2914 = vpop.f32.mrf.mxu0
  %2915 = vmatprep.mubr.bf16.mxu0 0
  %2916 = vmatmul.mubr.bf16.gmra.mxu0 %v2792
  %v2917 = vpop.f32.mrf.mxu0
  %v2918 = vadd.f32 0.0, %v2917
  %v2919 = vpop.f32.mrf.mxu0
  %v2920 = vpop.f32.mrf.mxu0
  %v2921 = vadd.f32 0.0, %v2920
  %v2922 = vpop.f32.mrf.mxu0
  %2923 = vmatprep.mubr.bf16.mxu0 0
  %2924 = vmatmul.mubr.bf16.gmra.mxu0 %v2794
  %v2925 = vpop.f32.mrf.mxu0
  %v2926 = vadd.f32 0.0, %v2925
  %v2927 = vpop.f32.mrf.mxu0
  %v2928 = vpop.f32.mrf.mxu0
  %v2929 = vadd.f32 0.0, %v2928
  %v2930 = vpop.f32.mrf.mxu0
  %2931 = vmatprep.mubr.bf16.mxu0 0
  %2932 = vmatmul.mubr.bf16.gmra.mxu0 %v2796
  %v2933 = vpop.f32.mrf.mxu0
  %v2934 = vadd.f32 0.0, %v2933
  %v2935 = vpop.f32.mrf.mxu0
  %v2936 = vpop.f32.mrf.mxu0
  %v2937 = vadd.f32 0.0, %v2936
  %v2938 = vpop.f32.mrf.mxu0
  %2939 = vmatprep.mubr.bf16.mxu0 0
  %2940 = vmatmul.mubr.bf16.gmra.mxu0 %v2798
  %v2941 = vpop.f32.mrf.mxu0
  %v2942 = vadd.f32 0.0, %v2941
  %v2943 = vpop.f32.mrf.mxu0
  %v2944 = vpop.f32.mrf.mxu0
  %v2945 = vadd.f32 0.0, %v2944
  %v2946 = vpop.f32.mrf.mxu0
  %2947 = vmatprep.mubr.bf16.mxu0 0
  %2948 = vmatmul.mubr.bf16.gmra.mxu0 %v2800
  %v2949 = vpop.f32.mrf.mxu0
  %v2950 = vadd.f32 0.0, %v2949
  %v2951 = vpop.f32.mrf.mxu0
  %v2952 = vpop.f32.mrf.mxu0
  %v2953 = vadd.f32 0.0, %v2952
  %v2954 = vpop.f32.mrf.mxu0
  %2955 = vmatprep.mubr.bf16.mxu0 0
  %2956 = vmatmul.mubr.bf16.gmra.mxu0 %v2802
  %v2957 = vpop.f32.mrf.mxu0
  %v2958 = vadd.f32 0.0, %v2957
  %v2959 = vpop.f32.mrf.mxu0
  %v2960 = vpop.f32.mrf.mxu0
  %v2961 = vadd.f32 0.0, %v2960
  %v2962 = vpop.f32.mrf.mxu0
  %2963 = vmatprep.mubr.bf16.mxu0 0
  %2964 = vmatmul.mubr.bf16.gmra.mxu0 %v2804
  %v2965 = vpop.f32.mrf.mxu0
  %v2966 = vadd.f32 0.0, %v2965
  %v2967 = vpop.f32.mrf.mxu0
  %v2968 = vpop.f32.mrf.mxu0
  %v2969 = vadd.f32 0.0, %v2968
  %v2970 = vpop.f32.mrf.mxu0
  %2971 = vmatprep.mubr.bf16.mxu0 0
  %2972 = vmatmul.mubr.bf16.gmra.mxu0 %v2806
  %v2973 = vpop.f32.mrf.mxu0
  %v2974 = vadd.f32 0.0, %v2973
  %v2975 = vpop.f32.mrf.mxu0
  %v2976 = vpop.f32.mrf.mxu0
  %v2977 = vadd.f32 0.0, %v2976
  %v2978 = vpop.f32.mrf.mxu0
  %2979 = vmatprep.mubr.bf16.mxu0 0
  %2980 = vmatmul.mubr.bf16.gmra.mxu0 %v2808
  %v2981 = vpop.f32.mrf.mxu0
  %v2982 = vadd.f32 0.0, %v2981
  %v2983 = vpop.f32.mrf.mxu0
  %v2984 = vpop.f32.mrf.mxu0
  %v2985 = vadd.f32 0.0, %v2984
  %v2986 = vpop.f32.mrf.mxu0
  %2987 = vmatprep.mubr.bf16.mxu0 0
  %2988 = vmatmul.mubr.bf16.gmra.mxu0 %v2810
  %v2989 = vpop.f32.mrf.mxu0
  %v2990 = vadd.f32 0.0, %v2989
  %v2991 = vpop.f32.mrf.mxu0
  %v2992 = vpop.f32.mrf.mxu0
  %v2993 = vadd.f32 0.0, %v2992
  %v2994 = vpop.f32.mrf.mxu0
  %2995 = vmatprep.mubr.bf16.mxu0 0
  %2996 = vmatmul.mubr.bf16.gmra.mxu0 %v2812
  %v2997 = vpop.f32.mrf.mxu0
  %v2998 = vadd.f32 0.0, %v2997
  %v2999 = vpop.f32.mrf.mxu0
  %v3000 = vpop.f32.mrf.mxu0
  %v3001 = vadd.f32 0.0, %v3000
  %v3002 = vpop.f32.mrf.mxu0
  %3003 = vmatprep.mubr.bf16.mxu0 0
  %3004 = vmatmul.mubr.bf16.gmra.mxu0 %v2814
  %v3005 = vpop.f32.mrf.mxu0
  %v3006 = vadd.f32 0.0, %v3005
  %v3007 = vpop.f32.mrf.mxu0
  %v3008 = vpop.f32.mrf.mxu0
  %v3009 = vadd.f32 0.0, %v3008
  %v3010 = vpop.f32.mrf.mxu0
  %3011 = vmatprep.mubr.bf16.mxu0 0
  %3012 = vmatmul.mubr.bf16.gmra.mxu0 %v2816
  %v3013 = vpop.f32.mrf.mxu0
  %v3014 = vadd.f32 0.0, %v3013
  %v3015 = vpop.f32.mrf.mxu0
  %v3016 = vpop.f32.mrf.mxu0
  %v3017 = vadd.f32 0.0, %v3016
  %v3018 = vpop.f32.mrf.mxu0
  %3019 = vmatprep.mubr.bf16.mxu0 0
  %3020 = vmatmul.mubr.bf16.gmra.mxu0 %v2818
  %v3021 = vpop.f32.mrf.mxu0
  %v3022 = vadd.f32 0.0, %v3021
  %v3023 = vpop.f32.mrf.mxu0
  %v3024 = vpop.f32.mrf.mxu0
  %v3025 = vadd.f32 0.0, %v3024
  %v3026 = vpop.f32.mrf.mxu0
  %3027 = vmatprep.mubr.bf16.mxu0 0
  %3028 = vmatmul.mubr.bf16.gmra.mxu0 %v2820
  %v3029 = vpop.f32.mrf.mxu0
  %v3030 = vadd.f32 0.0, %v3029
  %v3031 = vpop.f32.mrf.mxu0
  %v3032 = vpop.f32.mrf.mxu0
  %v3033 = vadd.f32 0.0, %v3032
  %v3034 = vpop.f32.mrf.mxu0
  %3035 = vmatprep.mubr.bf16.mxu0 0
  %3036 = vmatmul.mubr.bf16.gmra.mxu0 %v2822
  %v3037 = vpop.f32.mrf.mxu0
  %v3038 = vadd.f32 0.0, %v3037
  %v3039 = vpop.f32.mrf.mxu0
  %v3040 = vpop.f32.mrf.mxu0
  %v3041 = vadd.f32 0.0, %v3040
  %v3042 = vpop.f32.mrf.mxu0
  %3043 = vmatprep.mubr.bf16.mxu0 0
  %3044 = vmatmul.mubr.bf16.gmra.mxu0 %v2824
  %v3045 = vpop.f32.mrf.mxu0
  %v3046 = vadd.f32 0.0, %v3045
  %v3047 = vpop.f32.mrf.mxu0
  %v3048 = vpop.f32.mrf.mxu0
  %v3049 = vadd.f32 0.0, %v3048
  %v3050 = vpop.f32.mrf.mxu0
  %3051 = vmatprep.mubr.bf16.mxu0 0
  %3052 = vmatmul.mubr.bf16.gmra.mxu0 %v2826
  %v3053 = vpop.f32.mrf.mxu0
  %v3054 = vadd.f32 0.0, %v3053
  %v3055 = vpop.f32.mrf.mxu0
  %v3056 = vpop.f32.mrf.mxu0
  %v3057 = vadd.f32 0.0, %v3056
  %v3058 = vpop.f32.mrf.mxu0
  %3059 = vmatprep.mubr.bf16.mxu0 0
  %3060 = vmatmul.mubr.bf16.gmra.mxu0 %v2828
  %v3061 = vpop.f32.mrf.mxu0
  %v3062 = vadd.f32 0.0, %v3061
  %v3063 = vpop.f32.mrf.mxu0
  %v3064 = vpop.f32.mrf.mxu0
  %v3065 = vadd.f32 0.0, %v3064
  %v3066 = vpop.f32.mrf.mxu0
  %3067 = vmatprep.mubr.bf16.mxu0 0
  %3068 = vmatmul.mubr.bf16.gmra.mxu0 %v2830
  %v3069 = vpop.f32.mrf.mxu0
  %v3070 = vadd.f32 0.0, %v3069
  %v3071 = vpop.f32.mrf.mxu0
  %v3072 = vpop.f32.mrf.mxu0
  %v3073 = vadd.f32 0.0, %v3072
  %v3074 = vpop.f32.mrf.mxu0
  %3075 = vmatprep.mubr.bf16.mxu0 0
  %3076 = vmatmul.mubr.bf16.gmra.mxu0 %v2832
  %v3077 = vpop.f32.mrf.mxu0
  %v3078 = vadd.f32 0.0, %v3077
  %v3079 = vpop.f32.mrf.mxu0
  %v3080 = vpop.f32.mrf.mxu0
  %v3081 = vadd.f32 0.0, %v3080
  %v3082 = vpop.f32.mrf.mxu0
  %3083 = vmatprep.mubr.bf16.mxu0 0
  %3084 = vmatmul.mubr.bf16.gmra.mxu0 %v2834
  %v3085 = vpop.f32.mrf.mxu0
  %v3086 = vadd.f32 0.0, %v3085
  %v3087 = vpop.f32.mrf.mxu0
  %v3088 = vpop.f32.mrf.mxu0
  %v3089 = vadd.f32 0.0, %v3088
  %v3090 = vpop.f32.mrf.mxu0
  %3091 = vmatprep.mubr.bf16.mxu0 0
  %3092 = vmatmul.mubr.bf16.gmra.mxu0 %v2836
  %v3093 = vpop.f32.mrf.mxu0
  %v3094 = vadd.f32 0.0, %v3093
  %v3095 = vpop.f32.mrf.mxu0
  %v3096 = vpop.f32.mrf.mxu0
  %v3097 = vadd.f32 0.0, %v3096
  %v3098 = vpop.f32.mrf.mxu0
  %3099 = vmatprep.mubr.bf16.mxu0 0
  %3100 = vmatmul.mubr.bf16.gmra.mxu0 %v2838
  %v3101 = vpop.f32.mrf.mxu0
  %v3102 = vadd.f32 0.0, %v3101
  %v3103 = vpop.f32.mrf.mxu0
  %v3104 = vpop.f32.mrf.mxu0
  %v3105 = vadd.f32 0.0, %v3104
  %v3106 = vpop.f32.mrf.mxu0
  %3107 = vmatprep.mubr.bf16.mxu0 0
  %3108 = vmatmul.mubr.bf16.gmra.mxu0 %v2840
  %v3109 = vpop.f32.mrf.mxu0
  %v3110 = vadd.f32 0.0, %v3109
  %v3111 = vpop.f32.mrf.mxu0
  %v3112 = vpop.f32.mrf.mxu0
  %v3113 = vadd.f32 0.0, %v3112
  %v3114 = vpop.f32.mrf.mxu0
  %3115 = vmatprep.mubr.bf16.mxu0 0
  %3116 = vmatmul.mubr.bf16.gmra.mxu0 %v2842
  %v3117 = vpop.f32.mrf.mxu0
  %v3118 = vadd.f32 0.0, %v3117
  %v3119 = vpop.f32.mrf.mxu0
  %v3120 = vpop.f32.mrf.mxu0
  %v3121 = vadd.f32 0.0, %v3120
  %v3122 = vpop.f32.mrf.mxu0
  %3123 = vmatprep.mubr.bf16.mxu0 0
  %3124 = vmatmul.mubr.bf16.gmra.mxu0 %v2844
  %v3125 = vpop.f32.mrf.mxu0
  %v3126 = vadd.f32 0.0, %v3125
  %v3127 = vpop.f32.mrf.mxu0
  %v3128 = vpop.f32.mrf.mxu0
  %v3129 = vadd.f32 0.0, %v3128
  %v3130 = vpop.f32.mrf.mxu0
  %3131 = vmatprep.mubr.bf16.mxu0 0
  %3132 = vmatmul.mubr.bf16.gmra.mxu0 %v2846
  %v3133 = vpop.f32.mrf.mxu0
  %v3134 = vadd.f32 0.0, %v3133
  %v3135 = vpop.f32.mrf.mxu0
  %v3136 = vpop.f32.mrf.mxu0
  %v3137 = vadd.f32 0.0, %v3136
  %v3138 = vpop.f32.mrf.mxu0
  %3139 = vdwg.mxu0
  %v3142 = vunpack.c.l.b16 %v2773
  %v3143 = vunpack.c.l.b16 %v2774
  %v3144 = vpack.c.b16 %v3143, %v3142
  %v3145 = vsel %vm2783, %v2708, 0
  %v3148 = vsel %vm1014, %v3144, 0
  %3150 = vmatprep.subr.bf16.mxu0 0
  %3151 = vmatpush1.bf16.msra.mxu0 0
  %3152 = vmatprep.subr.bf16.mxu0 0
  %3153 = vmatpush1.bf16.msra.mxu0 0
  %3154 = vmatprep.subr.bf16.mxu0 0
  %3155 = vmatpush1.bf16.msra.mxu0 0
  %3156 = vmatprep.subr.bf16.mxu0 0
  %3157 = vmatpush1.bf16.msra.mxu0 0
  %3158 = vmatprep.subr.bf16.mxu0 0
  %3159 = vmatpush1.bf16.msra.mxu0 0
  %3160 = vmatprep.subr.bf16.mxu0 0
  %3161 = vmatpush1.bf16.msra.mxu0 0
  %3162 = vmatprep.subr.bf16.mxu0 0
  %3163 = vmatpush1.bf16.msra.mxu0 0
  %3164 = vmatprep.subr.bf16.mxu0 0
  %3165 = vmatpush1.bf16.msra.mxu0 %v3148
  %3166 = vmatprep.subr.bf16.mxu0 0
  %3167 = vmatpush2.bf16.msra.mxu0 0
  %3168 = vmatprep.subr.bf16.mxu0 0
  %3169 = vmatpush2.bf16.msra.mxu0 0
  %3170 = vmatprep.subr.bf16.mxu0 0
  %3171 = vmatpush2.bf16.msra.mxu0 0
  %3172 = vmatprep.subr.bf16.mxu0 0
  %3173 = vmatpush2.bf16.msra.mxu0 0
  %3174 = vmatprep.subr.bf16.mxu0 0
  %3175 = vmatpush2.bf16.msra.mxu0 0
  %3176 = vmatprep.subr.bf16.mxu0 0
  %3177 = vmatpush2.bf16.msra.mxu0 0
  %3178 = vmatprep.subr.bf16.mxu0 0
  %3179 = vmatpush2.bf16.msra.mxu0 0
  %3180 = vmatprep.subr.bf16.mxu0 0
  %3181 = vmatpush2.bf16.msra.mxu0 0
  %3182 = vmatprep.mubr.bf16.mxu0 0
  %3183 = vmatmul.mubr.bf16.gmra.mxu0 %v3145
  %v3184 = vpop.f32.mrf.mxu0
  %v3185 = vadd.f32 %v2886, %v3184
  %v3186 = vpop.f32.mrf.mxu0
  %v3187 = vpop.f32.mrf.mxu0
  %v3188 = vadd.f32 %v2889, %v3187
  %v3189 = vpop.f32.mrf.mxu0
  %3190 = vmatprep.mubr.bf16.mxu0 0
  %3191 = vmatmul.mubr.bf16.gmra.mxu0 %v2784
  %v3192 = vpop.f32.mrf.mxu0
  %v3193 = vadd.f32 %v2894, %v3192
  %v3194 = vpop.f32.mrf.mxu0
  %v3195 = vpop.f32.mrf.mxu0
  %v3196 = vadd.f32 %v2897, %v3195
  %v3197 = vpop.f32.mrf.mxu0
  %3198 = vmatprep.mubr.bf16.mxu0 0
  %3199 = vmatmul.mubr.bf16.gmra.mxu0 %v2786
  %v3200 = vpop.f32.mrf.mxu0
  %v3201 = vadd.f32 %v2902, %v3200
  %v3202 = vpop.f32.mrf.mxu0
  %v3203 = vpop.f32.mrf.mxu0
  %v3204 = vadd.f32 %v2905, %v3203
  %v3205 = vpop.f32.mrf.mxu0
  %3206 = vmatprep.mubr.bf16.mxu0 0
  %3207 = vmatmul.mubr.bf16.gmra.mxu0 %v2788
  %v3208 = vpop.f32.mrf.mxu0
  %v3209 = vadd.f32 %v2910, %v3208
  %v3210 = vpop.f32.mrf.mxu0
  %v3211 = vpop.f32.mrf.mxu0
  %v3212 = vadd.f32 %v2913, %v3211
  %v3213 = vpop.f32.mrf.mxu0
  %3214 = vmatprep.mubr.bf16.mxu0 0
  %3215 = vmatmul.mubr.bf16.gmra.mxu0 %v2790
  %v3216 = vpop.f32.mrf.mxu0
  %v3217 = vadd.f32 %v2918, %v3216
  %v3218 = vpop.f32.mrf.mxu0
  %v3219 = vpop.f32.mrf.mxu0
  %v3220 = vadd.f32 %v2921, %v3219
  %v3221 = vpop.f32.mrf.mxu0
  %3222 = vmatprep.mubr.bf16.mxu0 0
  %3223 = vmatmul.mubr.bf16.gmra.mxu0 %v2792
  %v3224 = vpop.f32.mrf.mxu0
  %v3225 = vadd.f32 %v2926, %v3224
  %v3226 = vpop.f32.mrf.mxu0
  %v3227 = vpop.f32.mrf.mxu0
  %v3228 = vadd.f32 %v2929, %v3227
  %v3229 = vpop.f32.mrf.mxu0
  %3230 = vmatprep.mubr.bf16.mxu0 0
  %3231 = vmatmul.mubr.bf16.gmra.mxu0 %v2794
  %v3232 = vpop.f32.mrf.mxu0
  %v3233 = vadd.f32 %v2934, %v3232
  %v3234 = vpop.f32.mrf.mxu0
  %v3235 = vpop.f32.mrf.mxu0
  %v3236 = vadd.f32 %v2937, %v3235
  %v3237 = vpop.f32.mrf.mxu0
  %3238 = vmatprep.mubr.bf16.mxu0 0
  %3239 = vmatmul.mubr.bf16.gmra.mxu0 %v2796
  %v3240 = vpop.f32.mrf.mxu0
  %v3241 = vadd.f32 %v2942, %v3240
  %v3242 = vpop.f32.mrf.mxu0
  %v3243 = vpop.f32.mrf.mxu0
  %v3244 = vadd.f32 %v2945, %v3243
  %v3245 = vpop.f32.mrf.mxu0
  %3246 = vmatprep.mubr.bf16.mxu0 0
  %3247 = vmatmul.mubr.bf16.gmra.mxu0 %v2798
  %v3248 = vpop.f32.mrf.mxu0
  %v3249 = vadd.f32 %v2950, %v3248
  %v3250 = vpop.f32.mrf.mxu0
  %v3251 = vpop.f32.mrf.mxu0
  %v3252 = vadd.f32 %v2953, %v3251
  %v3253 = vpop.f32.mrf.mxu0
  %3254 = vmatprep.mubr.bf16.mxu0 0
  %3255 = vmatmul.mubr.bf16.gmra.mxu0 %v2800
  %v3256 = vpop.f32.mrf.mxu0
  %v3257 = vadd.f32 %v2958, %v3256
  %v3258 = vpop.f32.mrf.mxu0
  %v3259 = vpop.f32.mrf.mxu0
  %v3260 = vadd.f32 %v2961, %v3259
  %v3261 = vpop.f32.mrf.mxu0
  %3262 = vmatprep.mubr.bf16.mxu0 0
  %3263 = vmatmul.mubr.bf16.gmra.mxu0 %v2802
  %v3264 = vpop.f32.mrf.mxu0
  %v3265 = vadd.f32 %v2966, %v3264
  %v3266 = vpop.f32.mrf.mxu0
  %v3267 = vpop.f32.mrf.mxu0
  %v3268 = vadd.f32 %v2969, %v3267
  %v3269 = vpop.f32.mrf.mxu0
  %3270 = vmatprep.mubr.bf16.mxu0 0
  %3271 = vmatmul.mubr.bf16.gmra.mxu0 %v2804
  %v3272 = vpop.f32.mrf.mxu0
  %v3273 = vadd.f32 %v2974, %v3272
  %v3274 = vpop.f32.mrf.mxu0
  %v3275 = vpop.f32.mrf.mxu0
  %v3276 = vadd.f32 %v2977, %v3275
  %v3277 = vpop.f32.mrf.mxu0
  %3278 = vmatprep.mubr.bf16.mxu0 0
  %3279 = vmatmul.mubr.bf16.gmra.mxu0 %v2806
  %v3280 = vpop.f32.mrf.mxu0
  %v3281 = vadd.f32 %v2982, %v3280
  %v3282 = vpop.f32.mrf.mxu0
  %v3283 = vpop.f32.mrf.mxu0
  %v3284 = vadd.f32 %v2985, %v3283
  %v3285 = vpop.f32.mrf.mxu0
  %3286 = vmatprep.mubr.bf16.mxu0 0
  %3287 = vmatmul.mubr.bf16.gmra.mxu0 %v2808
  %v3288 = vpop.f32.mrf.mxu0
  %v3289 = vadd.f32 %v2990, %v3288
  %v3290 = vpop.f32.mrf.mxu0
  %v3291 = vpop.f32.mrf.mxu0
  %v3292 = vadd.f32 %v2993, %v3291
  %v3293 = vpop.f32.mrf.mxu0
  %3294 = vmatprep.mubr.bf16.mxu0 0
  %3295 = vmatmul.mubr.bf16.gmra.mxu0 %v2810
  %v3296 = vpop.f32.mrf.mxu0
  %v3297 = vadd.f32 %v2998, %v3296
  %v3298 = vpop.f32.mrf.mxu0
  %v3299 = vpop.f32.mrf.mxu0
  %v3300 = vadd.f32 %v3001, %v3299
  %v3301 = vpop.f32.mrf.mxu0
  %3302 = vmatprep.mubr.bf16.mxu0 0
  %3303 = vmatmul.mubr.bf16.gmra.mxu0 %v2812
  %v3304 = vpop.f32.mrf.mxu0
  %v3305 = vadd.f32 %v3006, %v3304
  %v3306 = vpop.f32.mrf.mxu0
  %v3307 = vpop.f32.mrf.mxu0
  %v3308 = vadd.f32 %v3009, %v3307
  %v3309 = vpop.f32.mrf.mxu0
  %3310 = vmatprep.mubr.bf16.mxu0 0
  %3311 = vmatmul.mubr.bf16.gmra.mxu0 %v3145
  %v3312 = vpop.f32.mrf.mxu0
  %v3313 = vadd.f32 %v3014, %v3312
  %v3314 = vpop.f32.mrf.mxu0
  %v3315 = vpop.f32.mrf.mxu0
  %v3316 = vadd.f32 %v3017, %v3315
  %v3317 = vpop.f32.mrf.mxu0
  %3318 = vmatprep.mubr.bf16.mxu0 0
  %3319 = vmatmul.mubr.bf16.gmra.mxu0 %v2816
  %v3320 = vpop.f32.mrf.mxu0
  %v3321 = vadd.f32 %v3022, %v3320
  %v3322 = vpop.f32.mrf.mxu0
  %v3323 = vpop.f32.mrf.mxu0
  %v3324 = vadd.f32 %v3025, %v3323
  %v3325 = vpop.f32.mrf.mxu0
  %3326 = vmatprep.mubr.bf16.mxu0 0
  %3327 = vmatmul.mubr.bf16.gmra.mxu0 %v2818
  %v3328 = vpop.f32.mrf.mxu0
  %v3329 = vadd.f32 %v3030, %v3328
  %v3330 = vpop.f32.mrf.mxu0
  %v3331 = vpop.f32.mrf.mxu0
  %v3332 = vadd.f32 %v3033, %v3331
  %v3333 = vpop.f32.mrf.mxu0
  %3334 = vmatprep.mubr.bf16.mxu0 0
  %3335 = vmatmul.mubr.bf16.gmra.mxu0 %v2820
  %v3336 = vpop.f32.mrf.mxu0
  %v3337 = vadd.f32 %v3038, %v3336
  %v3338 = vpop.f32.mrf.mxu0
  %v3339 = vpop.f32.mrf.mxu0
  %v3340 = vadd.f32 %v3041, %v3339
  %v3341 = vpop.f32.mrf.mxu0
  %3342 = vmatprep.mubr.bf16.mxu0 0
  %3343 = vmatmul.mubr.bf16.gmra.mxu0 %v2822
  %v3344 = vpop.f32.mrf.mxu0
  %v3345 = vadd.f32 %v3046, %v3344
  %v3346 = vpop.f32.mrf.mxu0
  %v3347 = vpop.f32.mrf.mxu0
  %v3348 = vadd.f32 %v3049, %v3347
  %v3349 = vpop.f32.mrf.mxu0
  %3350 = vmatprep.mubr.bf16.mxu0 0
  %3351 = vmatmul.mubr.bf16.gmra.mxu0 %v2824
  %v3352 = vpop.f32.mrf.mxu0
  %v3353 = vadd.f32 %v3054, %v3352
  %v3354 = vpop.f32.mrf.mxu0
  %v3355 = vpop.f32.mrf.mxu0
  %v3356 = vadd.f32 %v3057, %v3355
  %v3357 = vpop.f32.mrf.mxu0
  %3358 = vmatprep.mubr.bf16.mxu0 0
  %3359 = vmatmul.mubr.bf16.gmra.mxu0 %v2826
  %v3360 = vpop.f32.mrf.mxu0
  %v3361 = vadd.f32 %v3062, %v3360
  %v3362 = vpop.f32.mrf.mxu0
  %v3363 = vpop.f32.mrf.mxu0
  %v3364 = vadd.f32 %v3065, %v3363
  %v3365 = vpop.f32.mrf.mxu0
  %3366 = vmatprep.mubr.bf16.mxu0 0
  %3367 = vmatmul.mubr.bf16.gmra.mxu0 %v2828
  %v3368 = vpop.f32.mrf.mxu0
  %v3369 = vadd.f32 %v3070, %v3368
  %v3370 = vpop.f32.mrf.mxu0
  %v3371 = vpop.f32.mrf.mxu0
  %v3372 = vadd.f32 %v3073, %v3371
  %v3373 = vpop.f32.mrf.mxu0
  %3374 = vmatprep.mubr.bf16.mxu0 0
  %3375 = vmatmul.mubr.bf16.gmra.mxu0 %v2830
  %v3376 = vpop.f32.mrf.mxu0
  %v3377 = vadd.f32 %v3078, %v3376
  %v3378 = vpop.f32.mrf.mxu0
  %v3379 = vpop.f32.mrf.mxu0
  %v3380 = vadd.f32 %v3081, %v3379
  %v3381 = vpop.f32.mrf.mxu0
  %3382 = vmatprep.mubr.bf16.mxu0 0
  %3383 = vmatmul.mubr.bf16.gmra.mxu0 %v2832
  %v3384 = vpop.f32.mrf.mxu0
  %v3385 = vadd.f32 %v3086, %v3384
  %v3386 = vpop.f32.mrf.mxu0
  %v3387 = vpop.f32.mrf.mxu0
  %v3388 = vadd.f32 %v3089, %v3387
  %v3389 = vpop.f32.mrf.mxu0
  %3390 = vmatprep.mubr.bf16.mxu0 0
  %3391 = vmatmul.mubr.bf16.gmra.mxu0 %v2834
  %v3392 = vpop.f32.mrf.mxu0
  %v3393 = vadd.f32 %v3094, %v3392
  %v3394 = vpop.f32.mrf.mxu0
  %v3395 = vpop.f32.mrf.mxu0
  %v3396 = vadd.f32 %v3097, %v3395
  %v3397 = vpop.f32.mrf.mxu0
  %3398 = vmatprep.mubr.bf16.mxu0 0
  %3399 = vmatmul.mubr.bf16.gmra.mxu0 %v2836
  %v3400 = vpop.f32.mrf.mxu0
  %v3401 = vadd.f32 %v3102, %v3400
  %v3402 = vpop.f32.mrf.mxu0
  %v3403 = vpop.f32.mrf.mxu0
  %v3404 = vadd.f32 %v3105, %v3403
  %v3405 = vpop.f32.mrf.mxu0
  %3406 = vmatprep.mubr.bf16.mxu0 0
  %3407 = vmatmul.mubr.bf16.gmra.mxu0 %v2838
  %v3408 = vpop.f32.mrf.mxu0
  %v3409 = vadd.f32 %v3110, %v3408
  %v3410 = vpop.f32.mrf.mxu0
  %v3411 = vpop.f32.mrf.mxu0
  %v3412 = vadd.f32 %v3113, %v3411
  %v3413 = vpop.f32.mrf.mxu0
  %3414 = vmatprep.mubr.bf16.mxu0 0
  %3415 = vmatmul.mubr.bf16.gmra.mxu0 %v2840
  %v3416 = vpop.f32.mrf.mxu0
  %v3417 = vadd.f32 %v3118, %v3416
  %v3418 = vpop.f32.mrf.mxu0
  %v3419 = vpop.f32.mrf.mxu0
  %v3420 = vadd.f32 %v3121, %v3419
  %v3421 = vpop.f32.mrf.mxu0
  %3422 = vmatprep.mubr.bf16.mxu0 0
  %3423 = vmatmul.mubr.bf16.gmra.mxu0 %v2842
  %v3424 = vpop.f32.mrf.mxu0
  %v3425 = vadd.f32 %v3126, %v3424
  %v3426 = vpop.f32.mrf.mxu0
  %v3427 = vpop.f32.mrf.mxu0
  %v3428 = vadd.f32 %v3129, %v3427
  %v3429 = vpop.f32.mrf.mxu0
  %3430 = vmatprep.mubr.bf16.mxu0 0
  %3431 = vmatmul.mubr.bf16.gmra.mxu0 %v2844
  %v3432 = vpop.f32.mrf.mxu0
  %v3433 = vadd.f32 %v3134, %v3432
  %v3434 = vpop.f32.mrf.mxu0
  %v3435 = vpop.f32.mrf.mxu0
  %v3436 = vadd.f32 %v3137, %v3435
  %v3437 = vpop.f32.mrf.mxu0
  %3438 = vdwg.mxu0
  %s3439 = scalar_lea.vmem %s1, 16
  %v3440 = vld [vmem:[%s3439] sm:$0xf]
  %v3441 = vld [vmem:[%s3439 + $0x4] sm:$0x3]
  %v3444 = vunpack.c.l.b16 %v3440
  %v3445 = vunpack.c.l.b16 %v3441
  %v3446 = vpack.c.b16 %v3445, %v3444
  %v3448 = vsel %vm1014, %v3446, 0
  %3450 = vmatprep.subr.bf16.mxu0 0
  %3451 = vmatpush1.bf16.msra.mxu0 0
  %3452 = vmatprep.subr.bf16.mxu0 0
  %3453 = vmatpush1.bf16.msra.mxu0 0
  %3454 = vmatprep.subr.bf16.mxu0 0
  %3455 = vmatpush1.bf16.msra.mxu0 0
  %3456 = vmatprep.subr.bf16.mxu0 0
  %3457 = vmatpush1.bf16.msra.mxu0 0
  %3458 = vmatprep.subr.bf16.mxu0 0
  %3459 = vmatpush1.bf16.msra.mxu0 0
  %3460 = vmatprep.subr.bf16.mxu0 0
  %3461 = vmatpush1.bf16.msra.mxu0 0
  %3462 = vmatprep.subr.bf16.mxu0 0
  %3463 = vmatpush1.bf16.msra.mxu0 0
  %3464 = vmatprep.subr.bf16.mxu0 0
  %3465 = vmatpush1.bf16.msra.mxu0 %v3448
  %3466 = vmatprep.subr.bf16.mxu0 0
  %3467 = vmatpush2.bf16.msra.mxu0 0
  %3468 = vmatprep.subr.bf16.mxu0 0
  %3469 = vmatpush2.bf16.msra.mxu0 0
  %3470 = vmatprep.subr.bf16.mxu0 0
  %3471 = vmatpush2.bf16.msra.mxu0 0
  %3472 = vmatprep.subr.bf16.mxu0 0
  %3473 = vmatpush2.bf16.msra.mxu0 0
  %3474 = vmatprep.subr.bf16.mxu0 0
  %3475 = vmatpush2.bf16.msra.mxu0 0
  %3476 = vmatprep.subr.bf16.mxu0 0
  %3477 = vmatpush2.bf16.msra.mxu0 0
  %3478 = vmatprep.subr.bf16.mxu0 0
  %3479 = vmatpush2.bf16.msra.mxu0 0
  %3480 = vmatprep.subr.bf16.mxu0 0
  %3481 = vmatpush2.bf16.msra.mxu0 0
  %3482 = vmatprep.mubr.bf16.mxu0 0
  %3483 = vmatmul.mubr.bf16.gmra.mxu0 %v2786
  %v3484 = vpop.f32.mrf.mxu0
  %v3485 = vadd.f32 0.0, %v3484
  %v3486 = vpop.f32.mrf.mxu0
  %v3487 = vpop.f32.mrf.mxu0
  %v3488 = vadd.f32 0.0, %v3487
  %v3489 = vpop.f32.mrf.mxu0
  %3490 = vmatprep.mubr.bf16.mxu0 0
  %3491 = vmatmul.mubr.bf16.gmra.mxu0 %v2788
  %v3492 = vpop.f32.mrf.mxu0
  %v3493 = vadd.f32 0.0, %v3492
  %v3494 = vpop.f32.mrf.mxu0
  %v3495 = vpop.f32.mrf.mxu0
  %v3496 = vadd.f32 0.0, %v3495
  %v3497 = vpop.f32.mrf.mxu0
  %3498 = vmatprep.mubr.bf16.mxu0 0
  %3499 = vmatmul.mubr.bf16.gmra.mxu0 %v2790
  %v3500 = vpop.f32.mrf.mxu0
  %v3501 = vadd.f32 0.0, %v3500
  %v3502 = vpop.f32.mrf.mxu0
  %v3503 = vpop.f32.mrf.mxu0
  %v3504 = vadd.f32 0.0, %v3503
  %v3505 = vpop.f32.mrf.mxu0
  %3506 = vmatprep.mubr.bf16.mxu0 0
  %3507 = vmatmul.mubr.bf16.gmra.mxu0 %v2792
  %v3508 = vpop.f32.mrf.mxu0
  %v3509 = vadd.f32 0.0, %v3508
  %v3510 = vpop.f32.mrf.mxu0
  %v3511 = vpop.f32.mrf.mxu0
  %v3512 = vadd.f32 0.0, %v3511
  %v3513 = vpop.f32.mrf.mxu0
  %3514 = vmatprep.mubr.bf16.mxu0 0
  %3515 = vmatmul.mubr.bf16.gmra.mxu0 %v2794
  %v3516 = vpop.f32.mrf.mxu0
  %v3517 = vadd.f32 0.0, %v3516
  %v3518 = vpop.f32.mrf.mxu0
  %v3519 = vpop.f32.mrf.mxu0
  %v3520 = vadd.f32 0.0, %v3519
  %v3521 = vpop.f32.mrf.mxu0
  %3522 = vmatprep.mubr.bf16.mxu0 0
  %3523 = vmatmul.mubr.bf16.gmra.mxu0 %v2796
  %v3524 = vpop.f32.mrf.mxu0
  %v3525 = vadd.f32 0.0, %v3524
  %v3526 = vpop.f32.mrf.mxu0
  %v3527 = vpop.f32.mrf.mxu0
  %v3528 = vadd.f32 0.0, %v3527
  %v3529 = vpop.f32.mrf.mxu0
  %3530 = vmatprep.mubr.bf16.mxu0 0
  %3531 = vmatmul.mubr.bf16.gmra.mxu0 %v2798
  %v3532 = vpop.f32.mrf.mxu0
  %v3533 = vadd.f32 0.0, %v3532
  %v3534 = vpop.f32.mrf.mxu0
  %v3535 = vpop.f32.mrf.mxu0
  %v3536 = vadd.f32 0.0, %v3535
  %v3537 = vpop.f32.mrf.mxu0
  %3538 = vmatprep.mubr.bf16.mxu0 0
  %3539 = vmatmul.mubr.bf16.gmra.mxu0 %v2800
  %v3540 = vpop.f32.mrf.mxu0
  %v3541 = vadd.f32 0.0, %v3540
  %v3542 = vpop.f32.mrf.mxu0
  %v3543 = vpop.f32.mrf.mxu0
  %v3544 = vadd.f32 0.0, %v3543
  %v3545 = vpop.f32.mrf.mxu0
  %3546 = vmatprep.mubr.bf16.mxu0 0
  %3547 = vmatmul.mubr.bf16.gmra.mxu0 %v2802
  %v3548 = vpop.f32.mrf.mxu0
  %v3549 = vadd.f32 0.0, %v3548
  %v3550 = vpop.f32.mrf.mxu0
  %v3551 = vpop.f32.mrf.mxu0
  %v3552 = vadd.f32 0.0, %v3551
  %v3553 = vpop.f32.mrf.mxu0
  %3554 = vmatprep.mubr.bf16.mxu0 0
  %3555 = vmatmul.mubr.bf16.gmra.mxu0 %v2804
  %v3556 = vpop.f32.mrf.mxu0
  %v3557 = vadd.f32 0.0, %v3556
  %v3558 = vpop.f32.mrf.mxu0
  %v3559 = vpop.f32.mrf.mxu0
  %v3560 = vadd.f32 0.0, %v3559
  %v3561 = vpop.f32.mrf.mxu0
  %3562 = vmatprep.mubr.bf16.mxu0 0
  %3563 = vmatmul.mubr.bf16.gmra.mxu0 %v2806
  %v3564 = vpop.f32.mrf.mxu0
  %v3565 = vadd.f32 0.0, %v3564
  %v3566 = vpop.f32.mrf.mxu0
  %v3567 = vpop.f32.mrf.mxu0
  %v3568 = vadd.f32 0.0, %v3567
  %v3569 = vpop.f32.mrf.mxu0
  %3570 = vmatprep.mubr.bf16.mxu0 0
  %3571 = vmatmul.mubr.bf16.gmra.mxu0 %v2808
  %v3572 = vpop.f32.mrf.mxu0
  %v3573 = vadd.f32 0.0, %v3572
  %v3574 = vpop.f32.mrf.mxu0
  %v3575 = vpop.f32.mrf.mxu0
  %v3576 = vadd.f32 0.0, %v3575
  %v3577 = vpop.f32.mrf.mxu0
  %3578 = vmatprep.mubr.bf16.mxu0 0
  %3579 = vmatmul.mubr.bf16.gmra.mxu0 %v2810
  %v3580 = vpop.f32.mrf.mxu0
  %v3581 = vadd.f32 0.0, %v3580
  %v3582 = vpop.f32.mrf.mxu0
  %v3583 = vpop.f32.mrf.mxu0
  %v3584 = vadd.f32 0.0, %v3583
  %v3585 = vpop.f32.mrf.mxu0
  %3586 = vmatprep.mubr.bf16.mxu0 0
  %3587 = vmatmul.mubr.bf16.gmra.mxu0 %v2812
  %v3588 = vpop.f32.mrf.mxu0
  %v3589 = vadd.f32 0.0, %v3588
  %v3590 = vpop.f32.mrf.mxu0
  %v3591 = vpop.f32.mrf.mxu0
  %v3592 = vadd.f32 0.0, %v3591
  %v3593 = vpop.f32.mrf.mxu0
  %3594 = vmatprep.mubr.bf16.mxu0 0
  %3595 = vmatmul.mubr.bf16.gmra.mxu0 %v2814
  %v3596 = vpop.f32.mrf.mxu0
  %v3597 = vadd.f32 0.0, %v3596
  %v3598 = vpop.f32.mrf.mxu0
  %v3599 = vpop.f32.mrf.mxu0
  %v3600 = vadd.f32 0.0, %v3599
  %v3601 = vpop.f32.mrf.mxu0
  %3602 = vmatprep.mubr.bf16.mxu0 0
  %3603 = vmatmul.mubr.bf16.gmra.mxu0 %v3145
  %v3604 = vpop.f32.mrf.mxu0
  %v3605 = vadd.f32 0.0, %v3604
  %v3606 = vpop.f32.mrf.mxu0
  %v3607 = vpop.f32.mrf.mxu0
  %v3608 = vadd.f32 0.0, %v3607
  %v3609 = vpop.f32.mrf.mxu0
  %3610 = vmatprep.mubr.bf16.mxu0 0
  %3611 = vmatmul.mubr.bf16.gmra.mxu0 %v2818
  %v3612 = vpop.f32.mrf.mxu0
  %v3613 = vadd.f32 0.0, %v3612
  %v3614 = vpop.f32.mrf.mxu0
  %v3615 = vpop.f32.mrf.mxu0
  %v3616 = vadd.f32 0.0, %v3615
  %v3617 = vpop.f32.mrf.mxu0
  %3618 = vmatprep.mubr.bf16.mxu0 0
  %3619 = vmatmul.mubr.bf16.gmra.mxu0 %v2820
  %v3620 = vpop.f32.mrf.mxu0
  %v3621 = vadd.f32 0.0, %v3620
  %v3622 = vpop.f32.mrf.mxu0
  %v3623 = vpop.f32.mrf.mxu0
  %v3624 = vadd.f32 0.0, %v3623
  %v3625 = vpop.f32.mrf.mxu0
  %3626 = vmatprep.mubr.bf16.mxu0 0
  %3627 = vmatmul.mubr.bf16.gmra.mxu0 %v2822
  %v3628 = vpop.f32.mrf.mxu0
  %v3629 = vadd.f32 0.0, %v3628
  %v3630 = vpop.f32.mrf.mxu0
  %v3631 = vpop.f32.mrf.mxu0
  %v3632 = vadd.f32 0.0, %v3631
  %v3633 = vpop.f32.mrf.mxu0
  %3634 = vmatprep.mubr.bf16.mxu0 0
  %3635 = vmatmul.mubr.bf16.gmra.mxu0 %v2824
  %v3636 = vpop.f32.mrf.mxu0
  %v3637 = vadd.f32 0.0, %v3636
  %v3638 = vpop.f32.mrf.mxu0
  %v3639 = vpop.f32.mrf.mxu0
  %v3640 = vadd.f32 0.0, %v3639
  %v3641 = vpop.f32.mrf.mxu0
  %3642 = vmatprep.mubr.bf16.mxu0 0
  %3643 = vmatmul.mubr.bf16.gmra.mxu0 %v2826
  %v3644 = vpop.f32.mrf.mxu0
  %v3645 = vadd.f32 0.0, %v3644
  %v3646 = vpop.f32.mrf.mxu0
  %v3647 = vpop.f32.mrf.mxu0
  %v3648 = vadd.f32 0.0, %v3647
  %v3649 = vpop.f32.mrf.mxu0
  %3650 = vmatprep.mubr.bf16.mxu0 0
  %3651 = vmatmul.mubr.bf16.gmra.mxu0 %v2828
  %v3652 = vpop.f32.mrf.mxu0
  %v3653 = vadd.f32 0.0, %v3652
  %v3654 = vpop.f32.mrf.mxu0
  %v3655 = vpop.f32.mrf.mxu0
  %v3656 = vadd.f32 0.0, %v3655
  %v3657 = vpop.f32.mrf.mxu0
  %3658 = vmatprep.mubr.bf16.mxu0 0
  %3659 = vmatmul.mubr.bf16.gmra.mxu0 %v2830
  %v3660 = vpop.f32.mrf.mxu0
  %v3661 = vadd.f32 0.0, %v3660
  %v3662 = vpop.f32.mrf.mxu0
  %v3663 = vpop.f32.mrf.mxu0
  %v3664 = vadd.f32 0.0, %v3663
  %v3665 = vpop.f32.mrf.mxu0
  %3666 = vmatprep.mubr.bf16.mxu0 0
  %3667 = vmatmul.mubr.bf16.gmra.mxu0 %v2832
  %v3668 = vpop.f32.mrf.mxu0
  %v3669 = vadd.f32 0.0, %v3668
  %v3670 = vpop.f32.mrf.mxu0
  %v3671 = vpop.f32.mrf.mxu0
  %v3672 = vadd.f32 0.0, %v3671
  %v3673 = vpop.f32.mrf.mxu0
  %3674 = vmatprep.mubr.bf16.mxu0 0
  %3675 = vmatmul.mubr.bf16.gmra.mxu0 %v2834
  %v3676 = vpop.f32.mrf.mxu0
  %v3677 = vadd.f32 0.0, %v3676
  %v3678 = vpop.f32.mrf.mxu0
  %v3679 = vpop.f32.mrf.mxu0
  %v3680 = vadd.f32 0.0, %v3679
  %v3681 = vpop.f32.mrf.mxu0
  %3682 = vmatprep.mubr.bf16.mxu0 0
  %3683 = vmatmul.mubr.bf16.gmra.mxu0 %v2836
  %v3684 = vpop.f32.mrf.mxu0
  %v3685 = vadd.f32 0.0, %v3684
  %v3686 = vpop.f32.mrf.mxu0
  %v3687 = vpop.f32.mrf.mxu0
  %v3688 = vadd.f32 0.0, %v3687
  %v3689 = vpop.f32.mrf.mxu0
  %3690 = vmatprep.mubr.bf16.mxu0 0
  %3691 = vmatmul.mubr.bf16.gmra.mxu0 %v2838
  %v3692 = vpop.f32.mrf.mxu0
  %v3693 = vadd.f32 0.0, %v3692
  %v3694 = vpop.f32.mrf.mxu0
  %v3695 = vpop.f32.mrf.mxu0
  %v3696 = vadd.f32 0.0, %v3695
  %v3697 = vpop.f32.mrf.mxu0
  %3698 = vmatprep.mubr.bf16.mxu0 0
  %3699 = vmatmul.mubr.bf16.gmra.mxu0 %v2840
  %v3700 = vpop.f32.mrf.mxu0
  %v3701 = vadd.f32 0.0, %v3700
  %v3702 = vpop.f32.mrf.mxu0
  %v3703 = vpop.f32.mrf.mxu0
  %v3704 = vadd.f32 0.0, %v3703
  %v3705 = vpop.f32.mrf.mxu0
  %3706 = vmatprep.mubr.bf16.mxu0 0
  %3707 = vmatmul.mubr.bf16.gmra.mxu0 %v2842
  %v3708 = vpop.f32.mrf.mxu0
  %v3709 = vadd.f32 0.0, %v3708
  %v3710 = vpop.f32.mrf.mxu0
  %v3711 = vpop.f32.mrf.mxu0
  %v3712 = vadd.f32 0.0, %v3711
  %v3713 = vpop.f32.mrf.mxu0
  %3714 = vmatprep.mubr.bf16.mxu0 0
  %3715 = vmatmul.mubr.bf16.gmra.mxu0 %v2844
  %v3716 = vpop.f32.mrf.mxu0
  %v3717 = vadd.f32 0.0, %v3716
  %v3718 = vpop.f32.mrf.mxu0
  %v3719 = vpop.f32.mrf.mxu0
  %v3720 = vadd.f32 0.0, %v3719
  %v3721 = vpop.f32.mrf.mxu0
  %3722 = vmatprep.mubr.bf16.mxu0 0
  %3723 = vmatmul.mubr.bf16.gmra.mxu0 %v2846
  %v3724 = vpop.f32.mrf.mxu0
  %v3725 = vadd.f32 0.0, %v3724
  %v3726 = vpop.f32.mrf.mxu0
  %v3727 = vpop.f32.mrf.mxu0
  %v3728 = vadd.f32 0.0, %v3727
  %v3729 = vpop.f32.mrf.mxu0
  %3730 = vmatprep.mubr.bf16.mxu0 0
  %3731 = vmatmul.mubr.bf16.gmra.mxu0 %v3145
  %v3732 = vpop.f32.mrf.mxu0
  %v3733 = vadd.f32 0.0, %v3732
  %v3734 = vpop.f32.mrf.mxu0
  %v3735 = vpop.f32.mrf.mxu0
  %v3736 = vadd.f32 0.0, %v3735
  %v3737 = vpop.f32.mrf.mxu0
  %3738 = vdwg.mxu0
  %v3739 = vadd.f32 %v3185, %v3485
  %v3740 = vadd.f32 %v3188, %v3488
  %v3741 = vadd.f32 %v3193, %v3493
  %v3742 = vadd.f32 %v3196, %v3496
  %v3743 = vadd.f32 %v3201, %v3501
  %v3744 = vadd.f32 %v3204, %v3504
  %v3745 = vadd.f32 %v3209, %v3509
  %v3746 = vadd.f32 %v3212, %v3512
  %v3747 = vadd.f32 %v3217, %v3517
  %v3748 = vadd.f32 %v3220, %v3520
  %v3749 = vadd.f32 %v3225, %v3525
  %v3750 = vadd.f32 %v3228, %v3528
  %v3751 = vadd.f32 %v3233, %v3533
  %v3752 = vadd.f32 %v3236, %v3536
  %v3753 = vadd.f32 %v3241, %v3541
  %v3754 = vadd.f32 %v3244, %v3544
  %v3755 = vadd.f32 %v3249, %v3549
  %v3756 = vadd.f32 %v3252, %v3552
  %v3757 = vadd.f32 %v3257, %v3557
  %v3758 = vadd.f32 %v3260, %v3560
  %v3759 = vadd.f32 %v3265, %v3565
  %v3760 = vadd.f32 %v3268, %v3568
  %v3761 = vadd.f32 %v3273, %v3573
  %v3762 = vadd.f32 %v3276, %v3576
  %v3763 = vadd.f32 %v3281, %v3581
  %v3764 = vadd.f32 %v3284, %v3584
  %v3765 = vadd.f32 %v3289, %v3589
  %v3766 = vadd.f32 %v3292, %v3592
  %v3767 = vadd.f32 %v3297, %v3597
  %v3768 = vadd.f32 %v3300, %v3600
  %v3769 = vadd.f32 %v3305, %v3605
  %v3770 = vadd.f32 %v3308, %v3608
  %v3771 = vadd.f32 %v3313, %v3613
  %v3772 = vadd.f32 %v3316, %v3616
  %v3773 = vadd.f32 %v3321, %v3621
  %v3774 = vadd.f32 %v3324, %v3624
  %v3775 = vadd.f32 %v3329, %v3629
  %v3776 = vadd.f32 %v3332, %v3632
  %v3777 = vadd.f32 %v3337, %v3637
  %v3778 = vadd.f32 %v3340, %v3640
  %v3779 = vadd.f32 %v3345, %v3645
  %v3780 = vadd.f32 %v3348, %v3648
  %v3781 = vadd.f32 %v3353, %v3653
  %v3782 = vadd.f32 %v3356, %v3656
  %v3783 = vadd.f32 %v3361, %v3661
  %v3784 = vadd.f32 %v3364, %v3664
  %v3785 = vadd.f32 %v3369, %v3669
  %v3786 = vadd.f32 %v3372, %v3672
  %v3787 = vadd.f32 %v3377, %v3677
  %v3788 = vadd.f32 %v3380, %v3680
  %v3789 = vadd.f32 %v3385, %v3685
  %v3790 = vadd.f32 %v3388, %v3688
  %v3791 = vadd.f32 %v3393, %v3693
  %v3792 = vadd.f32 %v3396, %v3696
  %v3793 = vadd.f32 %v3401, %v3701
  %v3794 = vadd.f32 %v3404, %v3704
  %v3795 = vadd.f32 %v3409, %v3709
  %v3796 = vadd.f32 %v3412, %v3712
  %v3797 = vadd.f32 %v3417, %v3717
  %v3798 = vadd.f32 %v3420, %v3720
  %v3799 = vadd.f32 %v3425, %v3725
  %v3800 = vadd.f32 %v3428, %v3728
  %v3801 = vadd.f32 %v3433, %v3733
  %v3802 = vadd.f32 %v3436, %v3736
  %v3803 = vld [vmem:[%s2] sm:$0x1]
  %v3805 = vlaneseq
  %v3806 = vshrl.u32 %v3805, 7
  %v3807 = vsub.s32 0, %v3806
  %v3808 = vrot.slane %v3803, %v3807
  %v3810 = vadd.f32 %v3739, %v3808
  %v3811 = vadd.f32 %v3740, %v3808
  %v3812 = vadd.f32 %v3741, %v3808
  %v3813 = vadd.f32 %v3742, %v3808
  %v3814 = vadd.f32 %v3743, %v3808
  %v3815 = vadd.f32 %v3744, %v3808
  %v3816 = vadd.f32 %v3745, %v3808
  %v3817 = vadd.f32 %v3746, %v3808
  %v3818 = vadd.f32 %v3747, %v3808
  %v3819 = vadd.f32 %v3748, %v3808
  %v3820 = vadd.f32 %v3749, %v3808
  %v3821 = vadd.f32 %v3750, %v3808
  %v3822 = vadd.f32 %v3751, %v3808
  %v3823 = vadd.f32 %v3752, %v3808
  %v3824 = vadd.f32 %v3753, %v3808
  %v3825 = vadd.f32 %v3754, %v3808
  %v3826 = vadd.f32 %v3755, %v3808
  %v3827 = vadd.f32 %v3756, %v3808
  %v3828 = vadd.f32 %v3757, %v3808
  %v3829 = vadd.f32 %v3758, %v3808
  %v3830 = vadd.f32 %v3759, %v3808
  %v3831 = vadd.f32 %v3760, %v3808
  %v3832 = vadd.f32 %v3761, %v3808
  %v3833 = vadd.f32 %v3762, %v3808
  %v3834 = vadd.f32 %v3763, %v3808
  %v3835 = vadd.f32 %v3764, %v3808
  %v3836 = vadd.f32 %v3765, %v3808
  %v3837 = vadd.f32 %v3766, %v3808
  %v3838 = vadd.f32 %v3767, %v3808
  %v3839 = vadd.f32 %v3768, %v3808
  %v3840 = vadd.f32 %v3769, %v3808
  %v3841 = vadd.f32 %v3770, %v3808
  %v3842 = vadd.f32 %v3771, %v3808
  %v3843 = vadd.f32 %v3772, %v3808
  %v3844 = vadd.f32 %v3773, %v3808
  %v3845 = vadd.f32 %v3774, %v3808
  %v3846 = vadd.f32 %v3775, %v3808
  %v3847 = vadd.f32 %v3776, %v3808
  %v3848 = vadd.f32 %v3777, %v3808
  %v3849 = vadd.f32 %v3778, %v3808
  %v3850 = vadd.f32 %v3779, %v3808
  %v3851 = vadd.f32 %v3780, %v3808
  %v3852 = vadd.f32 %v3781, %v3808
  %v3853 = vadd.f32 %v3782, %v3808
  %v3854 = vadd.f32 %v3783, %v3808
  %v3855 = vadd.f32 %v3784, %v3808
  %v3856 = vadd.f32 %v3785, %v3808
  %v3857 = vadd.f32 %v3786, %v3808
  %v3858 = vadd.f32 %v3787, %v3808
  %v3859 = vadd.f32 %v3788, %v3808
  %v3860 = vadd.f32 %v3789, %v3808
  %v3861 = vadd.f32 %v3790, %v3808
  %v3862 = vadd.f32 %v3791, %v3808
  %v3863 = vadd.f32 %v3792, %v3808
  %v3864 = vadd.f32 %v3793, %v3808
  %v3865 = vadd.f32 %v3794, %v3808
  %v3866 = vadd.f32 %v3795, %v3808
  %v3867 = vadd.f32 %v3796, %v3808
  %v3868 = vadd.f32 %v3797, %v3808
  %v3869 = vadd.f32 %v3798, %v3808
  %v3870 = vadd.f32 %v3799, %v3808
  %v3871 = vadd.f32 %v3800, %v3808
  %v3872 = vadd.f32 %v3801, %v3808
  %v3873 = vadd.f32 %v3802, %v3808
  %v3874 = vcombine.low %v3810, %v3814
  %v3875 = vcombine.high %v3810, %v3814
  %v3877 = vunpack.c.l.s4 1983009808
  %v3878 = vunpack.c.0.s8 %v3877
  %v3879 = vlaneseq
  %v3880 = vshrl.u32 %v3879, 7
  %v3881 = vsub.s32 %v3878, %v3880
  %v3882 = vrot.slane %v3874, %v3881
  %v3884 = vunpack.c.l.s4 1983009808
  %v3885 = vunpack.c.0.s8 %v3884
  %v3886 = vlaneseq
  %v3887 = vshrl.u32 %v3886, 7
  %v3888 = vsub.s32 %v3885, %v3887
  %v3889 = vrot.slane %v3875, %v3888
  %v3890 = vcombine.low %v3812, %v3816
  %v3891 = vcombine.high %v3812, %v3816
  %v3893 = vunpack.c.l.s4 1983009808
  %v3894 = vunpack.c.0.s8 %v3893
  %v3895 = vlaneseq
  %v3896 = vshrl.u32 %v3895, 7
  %v3897 = vsub.s32 %v3894, %v3896
  %v3898 = vrot.slane %v3890, %v3897
  %v3900 = vunpack.c.l.s4 1983009808
  %v3901 = vunpack.c.0.s8 %v3900
  %v3902 = vlaneseq
  %v3903 = vshrl.u32 %v3902, 7
  %v3904 = vsub.s32 %v3901, %v3903
  %v3905 = vrot.slane %v3891, %v3904
  %v3906 = vcombine.low %v3818, %v3822
  %v3907 = vcombine.high %v3818, %v3822
  %v3909 = vunpack.c.l.s4 1983009808
  %v3910 = vunpack.c.0.s8 %v3909
  %v3911 = vlaneseq
  %v3912 = vshrl.u32 %v3911, 7
  %v3913 = vsub.s32 %v3910, %v3912
  %v3914 = vrot.slane %v3906, %v3913
  %v3916 = vunpack.c.l.s4 1983009808
  %v3917 = vunpack.c.0.s8 %v3916
  %v3918 = vlaneseq
  %v3919 = vshrl.u32 %v3918, 7
  %v3920 = vsub.s32 %v3917, %v3919
  %v3921 = vrot.slane %v3907, %v3920
  %v3922 = vcombine.low %v3820, %v3824
  %v3923 = vcombine.high %v3820, %v3824
  %v3925 = vunpack.c.l.s4 1983009808
  %v3926 = vunpack.c.0.s8 %v3925
  %v3927 = vlaneseq
  %v3928 = vshrl.u32 %v3927, 7
  %v3929 = vsub.s32 %v3926, %v3928
  %v3930 = vrot.slane %v3922, %v3929
  %v3932 = vunpack.c.l.s4 1983009808
  %v3933 = vunpack.c.0.s8 %v3932
  %v3934 = vlaneseq
  %v3935 = vshrl.u32 %v3934, 7
  %v3936 = vsub.s32 %v3933, %v3935
  %v3937 = vrot.slane %v3923, %v3936
  %v3938 = vcombine.low %v3882, %v3898
  %v3939 = vcombine.high %v3882, %v3898
  %v3941 = vunpack.c.l.s4 1934713408
  %v3942 = vunpack.c.0.s8 %v3941
  %v3943 = vlaneseq
  %v3944 = vshrl.u32 %v3943, 7
  %v3945 = vsub.s32 %v3942, %v3944
  %v3946 = vrot.slane %v3938, %v3945
  %v3948 = vunpack.c.l.s4 1934713408
  %v3949 = vunpack.c.0.s8 %v3948
  %v3950 = vlaneseq
  %v3951 = vshrl.u32 %v3950, 7
  %v3952 = vsub.s32 %v3949, %v3951
  %v3953 = vrot.slane %v3939, %v3952
  %v3954 = vcombine.low %v3889, %v3905
  %v3955 = vcombine.high %v3889, %v3905
  %v3957 = vunpack.c.l.s4 1934713408
  %v3958 = vunpack.c.0.s8 %v3957
  %v3959 = vlaneseq
  %v3960 = vshrl.u32 %v3959, 7
  %v3961 = vsub.s32 %v3958, %v3960
  %v3962 = vrot.slane %v3954, %v3961
  %v3964 = vunpack.c.l.s4 1934713408
  %v3965 = vunpack.c.0.s8 %v3964
  %v3966 = vlaneseq
  %v3967 = vshrl.u32 %v3966, 7
  %v3968 = vsub.s32 %v3965, %v3967
  %v3969 = vrot.slane %v3955, %v3968
  %v3970 = vcombine.low %v3914, %v3930
  %v3971 = vcombine.high %v3914, %v3930
  %v3973 = vunpack.c.l.s4 1934713408
  %v3974 = vunpack.c.0.s8 %v3973
  %v3975 = vlaneseq
  %v3976 = vshrl.u32 %v3975, 7
  %v3977 = vsub.s32 %v3974, %v3976
  %v3978 = vrot.slane %v3970, %v3977
  %v3980 = vunpack.c.l.s4 1934713408
  %v3981 = vunpack.c.0.s8 %v3980
  %v3982 = vlaneseq
  %v3983 = vshrl.u32 %v3982, 7
  %v3984 = vsub.s32 %v3981, %v3983
  %v3985 = vrot.slane %v3971, %v3984
  %v3986 = vcombine.low %v3921, %v3937
  %v3987 = vcombine.high %v3921, %v3937
  %v3989 = vunpack.c.l.s4 1934713408
  %v3990 = vunpack.c.0.s8 %v3989
  %v3991 = vlaneseq
  %v3992 = vshrl.u32 %v3991, 7
  %v3993 = vsub.s32 %v3990, %v3992
  %v3994 = vrot.slane %v3986, %v3993
  %v3996 = vunpack.c.l.s4 1934713408
  %v3997 = vunpack.c.0.s8 %v3996
  %v3998 = vlaneseq
  %v3999 = vshrl.u32 %v3998, 7
  %v4000 = vsub.s32 %v3997, %v3999
  %v4001 = vrot.slane %v3987, %v4000
  %v4002 = vcombine.low %v3946, %v3978
  %v4003 = vcombine.high %v3946, %v3978
  %v4004 = vcombine.low %v3953, %v3985
  %v4005 = vcombine.high %v3953, %v3985
  %v4006 = vcombine.low %v3962, %v3994
  %v4007 = vcombine.high %v3962, %v3994
  %v4008 = vcombine.low %v3969, %v4001
  %v4009 = vcombine.high %v3969, %v4001
  %v4010 = vcombine.low %v3826, %v3830
  %v4011 = vcombine.high %v3826, %v3830
  %v4013 = vunpack.c.l.s4 1983009808
  %v4014 = vunpack.c.0.s8 %v4013
  %v4015 = vlaneseq
  %v4016 = vshrl.u32 %v4015, 7
  %v4017 = vsub.s32 %v4014, %v4016
  %v4018 = vrot.slane %v4010, %v4017
  %v4020 = vunpack.c.l.s4 1983009808
  %v4021 = vunpack.c.0.s8 %v4020
  %v4022 = vlaneseq
  %v4023 = vshrl.u32 %v4022, 7
  %v4024 = vsub.s32 %v4021, %v4023
  %v4025 = vrot.slane %v4011, %v4024
  %v4026 = vcombine.low %v3828, %v3832
  %v4027 = vcombine.high %v3828, %v3832
  %v4029 = vunpack.c.l.s4 1983009808
  %v4030 = vunpack.c.0.s8 %v4029
  %v4031 = vlaneseq
  %v4032 = vshrl.u32 %v4031, 7
  %v4033 = vsub.s32 %v4030, %v4032
  %v4034 = vrot.slane %v4026, %v4033
  %v4036 = vunpack.c.l.s4 1983009808
  %v4037 = vunpack.c.0.s8 %v4036
  %v4038 = vlaneseq
  %v4039 = vshrl.u32 %v4038, 7
  %v4040 = vsub.s32 %v4037, %v4039
  %v4041 = vrot.slane %v4027, %v4040
  %v4042 = vcombine.low %v3834, %v3838
  %v4043 = vcombine.high %v3834, %v3838
  %v4045 = vunpack.c.l.s4 1983009808
  %v4046 = vunpack.c.0.s8 %v4045
  %v4047 = vlaneseq
  %v4048 = vshrl.u32 %v4047, 7
  %v4049 = vsub.s32 %v4046, %v4048
  %v4050 = vrot.slane %v4042, %v4049
  %v4052 = vunpack.c.l.s4 1983009808
  %v4053 = vunpack.c.0.s8 %v4052
  %v4054 = vlaneseq
  %v4055 = vshrl.u32 %v4054, 7
  %v4056 = vsub.s32 %v4053, %v4055
  %v4057 = vrot.slane %v4043, %v4056
  %v4058 = vcombine.low %v3836, %v3840
  %v4059 = vcombine.high %v3836, %v3840
  %v4061 = vunpack.c.l.s4 1983009808
  %v4062 = vunpack.c.0.s8 %v4061
  %v4063 = vlaneseq
  %v4064 = vshrl.u32 %v4063, 7
  %v4065 = vsub.s32 %v4062, %v4064
  %v4066 = vrot.slane %v4058, %v4065
  %v4068 = vunpack.c.l.s4 1983009808
  %v4069 = vunpack.c.0.s8 %v4068
  %v4070 = vlaneseq
  %v4071 = vshrl.u32 %v4070, 7
  %v4072 = vsub.s32 %v4069, %v4071
  %v4073 = vrot.slane %v4059, %v4072
  %v4074 = vcombine.low %v4018, %v4034
  %v4075 = vcombine.high %v4018, %v4034
  %v4077 = vunpack.c.l.s4 1934713408
  %v4078 = vunpack.c.0.s8 %v4077
  %v4079 = vlaneseq
  %v4080 = vshrl.u32 %v4079, 7
  %v4081 = vsub.s32 %v4078, %v4080
  %v4082 = vrot.slane %v4074, %v4081
  %v4084 = vunpack.c.l.s4 1934713408
  %v4085 = vunpack.c.0.s8 %v4084
  %v4086 = vlaneseq
  %v4087 = vshrl.u32 %v4086, 7
  %v4088 = vsub.s32 %v4085, %v4087
  %v4089 = vrot.slane %v4075, %v4088
  %v4090 = vcombine.low %v4025, %v4041
  %v4091 = vcombine.high %v4025, %v4041
  %v4093 = vunpack.c.l.s4 1934713408
  %v4094 = vunpack.c.0.s8 %v4093
  %v4095 = vlaneseq
  %v4096 = vshrl.u32 %v4095, 7
  %v4097 = vsub.s32 %v4094, %v4096
  %v4098 = vrot.slane %v4090, %v4097
  %v4100 = vunpack.c.l.s4 1934713408
  %v4101 = vunpack.c.0.s8 %v4100
  %v4102 = vlaneseq
  %v4103 = vshrl.u32 %v4102, 7
  %v4104 = vsub.s32 %v4101, %v4103
  %v4105 = vrot.slane %v4091, %v4104
  %v4106 = vcombine.low %v4050, %v4066
  %v4107 = vcombine.high %v4050, %v4066
  %v4109 = vunpack.c.l.s4 1934713408
  %v4110 = vunpack.c.0.s8 %v4109
  %v4111 = vlaneseq
  %v4112 = vshrl.u32 %v4111, 7
  %v4113 = vsub.s32 %v4110, %v4112
  %v4114 = vrot.slane %v4106, %v4113
  %v4116 = vunpack.c.l.s4 1934713408
  %v4117 = vunpack.c.0.s8 %v4116
  %v4118 = vlaneseq
  %v4119 = vshrl.u32 %v4118, 7
  %v4120 = vsub.s32 %v4117, %v4119
  %v4121 = vrot.slane %v4107, %v4120
  %v4122 = vcombine.low %v4057, %v4073
  %v4123 = vcombine.high %v4057, %v4073
  %v4125 = vunpack.c.l.s4 1934713408
  %v4126 = vunpack.c.0.s8 %v4125
  %v4127 = vlaneseq
  %v4128 = vshrl.u32 %v4127, 7
  %v4129 = vsub.s32 %v4126, %v4128
  %v4130 = vrot.slane %v4122, %v4129
  %v4132 = vunpack.c.l.s4 1934713408
  %v4133 = vunpack.c.0.s8 %v4132
  %v4134 = vlaneseq
  %v4135 = vshrl.u32 %v4134, 7
  %v4136 = vsub.s32 %v4133, %v4135
  %v4137 = vrot.slane %v4123, %v4136
  %v4138 = vcombine.low %v4082, %v4114
  %v4139 = vcombine.high %v4082, %v4114
  %v4140 = vcombine.low %v4089, %v4121
  %v4141 = vcombine.high %v4089, %v4121
  %v4142 = vcombine.low %v4098, %v4130
  %v4143 = vcombine.high %v4098, %v4130
  %v4144 = vcombine.low %v4105, %v4137
  %v4145 = vcombine.high %v4105, %v4137
  %v4146 = vcombine.low %v3811, %v3815
  %v4147 = vcombine.high %v3811, %v3815
  %v4149 = vunpack.c.l.s4 1983009808
  %v4150 = vunpack.c.0.s8 %v4149
  %v4151 = vlaneseq
  %v4152 = vshrl.u32 %v4151, 7
  %v4153 = vsub.s32 %v4150, %v4152
  %v4154 = vrot.slane %v4146, %v4153
  %v4156 = vunpack.c.l.s4 1983009808
  %v4157 = vunpack.c.0.s8 %v4156
  %v4158 = vlaneseq
  %v4159 = vshrl.u32 %v4158, 7
  %v4160 = vsub.s32 %v4157, %v4159
  %v4161 = vrot.slane %v4147, %v4160
  %v4162 = vcombine.low %v3813, %v3817
  %v4163 = vcombine.high %v3813, %v3817
  %v4165 = vunpack.c.l.s4 1983009808
  %v4166 = vunpack.c.0.s8 %v4165
  %v4167 = vlaneseq
  %v4168 = vshrl.u32 %v4167, 7
  %v4169 = vsub.s32 %v4166, %v4168
  %v4170 = vrot.slane %v4162, %v4169
  %v4172 = vunpack.c.l.s4 1983009808
  %v4173 = vunpack.c.0.s8 %v4172
  %v4174 = vlaneseq
  %v4175 = vshrl.u32 %v4174, 7
  %v4176 = vsub.s32 %v4173, %v4175
  %v4177 = vrot.slane %v4163, %v4176
  %v4178 = vcombine.low %v3819, %v3823
  %v4179 = vcombine.high %v3819, %v3823
  %v4181 = vunpack.c.l.s4 1983009808
  %v4182 = vunpack.c.0.s8 %v4181
  %v4183 = vlaneseq
  %v4184 = vshrl.u32 %v4183, 7
  %v4185 = vsub.s32 %v4182, %v4184
  %v4186 = vrot.slane %v4178, %v4185
  %v4188 = vunpack.c.l.s4 1983009808
  %v4189 = vunpack.c.0.s8 %v4188
  %v4190 = vlaneseq
  %v4191 = vshrl.u32 %v4190, 7
  %v4192 = vsub.s32 %v4189, %v4191
  %v4193 = vrot.slane %v4179, %v4192
  %v4194 = vcombine.low %v3821, %v3825
  %v4195 = vcombine.high %v3821, %v3825
  %v4197 = vunpack.c.l.s4 1983009808
  %v4198 = vunpack.c.0.s8 %v4197
  %v4199 = vlaneseq
  %v4200 = vshrl.u32 %v4199, 7
  %v4201 = vsub.s32 %v4198, %v4200
  %v4202 = vrot.slane %v4194, %v4201
  %v4204 = vunpack.c.l.s4 1983009808
  %v4205 = vunpack.c.0.s8 %v4204
  %v4206 = vlaneseq
  %v4207 = vshrl.u32 %v4206, 7
  %v4208 = vsub.s32 %v4205, %v4207
  %v4209 = vrot.slane %v4195, %v4208
  %v4210 = vcombine.low %v4154, %v4170
  %v4211 = vcombine.high %v4154, %v4170
  %v4213 = vunpack.c.l.s4 1934713408
  %v4214 = vunpack.c.0.s8 %v4213
  %v4215 = vlaneseq
  %v4216 = vshrl.u32 %v4215, 7
  %v4217 = vsub.s32 %v4214, %v4216
  %v4218 = vrot.slane %v4210, %v4217
  %v4220 = vunpack.c.l.s4 1934713408
  %v4221 = vunpack.c.0.s8 %v4220
  %v4222 = vlaneseq
  %v4223 = vshrl.u32 %v4222, 7
  %v4224 = vsub.s32 %v4221, %v4223
  %v4225 = vrot.slane %v4211, %v4224
  %v4226 = vcombine.low %v4161, %v4177
  %v4227 = vcombine.high %v4161, %v4177
  %v4229 = vunpack.c.l.s4 1934713408
  %v4230 = vunpack.c.0.s8 %v4229
  %v4231 = vlaneseq
  %v4232 = vshrl.u32 %v4231, 7
  %v4233 = vsub.s32 %v4230, %v4232
  %v4234 = vrot.slane %v4226, %v4233
  %v4236 = vunpack.c.l.s4 1934713408
  %v4237 = vunpack.c.0.s8 %v4236
  %v4238 = vlaneseq
  %v4239 = vshrl.u32 %v4238, 7
  %v4240 = vsub.s32 %v4237, %v4239
  %v4241 = vrot.slane %v4227, %v4240
  %v4242 = vcombine.low %v4186, %v4202
  %v4243 = vcombine.high %v4186, %v4202
  %v4245 = vunpack.c.l.s4 1934713408
  %v4246 = vunpack.c.0.s8 %v4245
  %v4247 = vlaneseq
  %v4248 = vshrl.u32 %v4247, 7
  %v4249 = vsub.s32 %v4246, %v4248
  %v4250 = vrot.slane %v4242, %v4249
  %v4252 = vunpack.c.l.s4 1934713408
  %v4253 = vunpack.c.0.s8 %v4252
  %v4254 = vlaneseq
  %v4255 = vshrl.u32 %v4254, 7
  %v4256 = vsub.s32 %v4253, %v4255
  %v4257 = vrot.slane %v4243, %v4256
  %v4258 = vcombine.low %v4193, %v4209
  %v4259 = vcombine.high %v4193, %v4209
  %v4261 = vunpack.c.l.s4 1934713408
  %v4262 = vunpack.c.0.s8 %v4261
  %v4263 = vlaneseq
  %v4264 = vshrl.u32 %v4263, 7
  %v4265 = vsub.s32 %v4262, %v4264
  %v4266 = vrot.slane %v4258, %v4265
  %v4268 = vunpack.c.l.s4 1934713408
  %v4269 = vunpack.c.0.s8 %v4268
  %v4270 = vlaneseq
  %v4271 = vshrl.u32 %v4270, 7
  %v4272 = vsub.s32 %v4269, %v4271
  %v4273 = vrot.slane %v4259, %v4272
  %v4274 = vcombine.low %v4218, %v4250
  %v4275 = vcombine.high %v4218, %v4250
  %v4276 = vcombine.low %v4225, %v4257
  %v4277 = vcombine.high %v4225, %v4257
  %v4278 = vcombine.low %v4234, %v4266
  %v4279 = vcombine.high %v4234, %v4266
  %v4280 = vcombine.low %v4241, %v4273
  %v4281 = vcombine.high %v4241, %v4273
  %v4282 = vcombine.low %v3827, %v3831
  %v4283 = vcombine.high %v3827, %v3831
  %v4285 = vunpack.c.l.s4 1983009808
  %v4286 = vunpack.c.0.s8 %v4285
  %v4287 = vlaneseq
  %v4288 = vshrl.u32 %v4287, 7
  %v4289 = vsub.s32 %v4286, %v4288
  %v4290 = vrot.slane %v4282, %v4289
  %v4292 = vunpack.c.l.s4 1983009808
  %v4293 = vunpack.c.0.s8 %v4292
  %v4294 = vlaneseq
  %v4295 = vshrl.u32 %v4294, 7
  %v4296 = vsub.s32 %v4293, %v4295
  %v4297 = vrot.slane %v4283, %v4296
  %v4298 = vcombine.low %v3829, %v3833
  %v4299 = vcombine.high %v3829, %v3833
  %v4301 = vunpack.c.l.s4 1983009808
  %v4302 = vunpack.c.0.s8 %v4301
  %v4303 = vlaneseq
  %v4304 = vshrl.u32 %v4303, 7
  %v4305 = vsub.s32 %v4302, %v4304
  %v4306 = vrot.slane %v4298, %v4305
  %v4308 = vunpack.c.l.s4 1983009808
  %v4309 = vunpack.c.0.s8 %v4308
  %v4310 = vlaneseq
  %v4311 = vshrl.u32 %v4310, 7
  %v4312 = vsub.s32 %v4309, %v4311
  %v4313 = vrot.slane %v4299, %v4312
  %v4314 = vcombine.low %v3835, %v3839
  %v4315 = vcombine.high %v3835, %v3839
  %v4317 = vunpack.c.l.s4 1983009808
  %v4318 = vunpack.c.0.s8 %v4317
  %v4319 = vlaneseq
  %v4320 = vshrl.u32 %v4319, 7
  %v4321 = vsub.s32 %v4318, %v4320
  %v4322 = vrot.slane %v4314, %v4321
  %v4324 = vunpack.c.l.s4 1983009808
  %v4325 = vunpack.c.0.s8 %v4324
  %v4326 = vlaneseq
  %v4327 = vshrl.u32 %v4326, 7
  %v4328 = vsub.s32 %v4325, %v4327
  %v4329 = vrot.slane %v4315, %v4328
  %v4330 = vcombine.low %v3837, %v3841
  %v4331 = vcombine.high %v3837, %v3841
  %v4333 = vunpack.c.l.s4 1983009808
  %v4334 = vunpack.c.0.s8 %v4333
  %v4335 = vlaneseq
  %v4336 = vshrl.u32 %v4335, 7
  %v4337 = vsub.s32 %v4334, %v4336
  %v4338 = vrot.slane %v4330, %v4337
  %v4340 = vunpack.c.l.s4 1983009808
  %v4341 = vunpack.c.0.s8 %v4340
  %v4342 = vlaneseq
  %v4343 = vshrl.u32 %v4342, 7
  %v4344 = vsub.s32 %v4341, %v4343
  %v4345 = vrot.slane %v4331, %v4344
  %v4346 = vcombine.low %v4290, %v4306
  %v4347 = vcombine.high %v4290, %v4306
  %v4349 = vunpack.c.l.s4 1934713408
  %v4350 = vunpack.c.0.s8 %v4349
  %v4351 = vlaneseq
  %v4352 = vshrl.u32 %v4351, 7
  %v4353 = vsub.s32 %v4350, %v4352
  %v4354 = vrot.slane %v4346, %v4353
  %v4356 = vunpack.c.l.s4 1934713408
  %v4357 = vunpack.c.0.s8 %v4356
  %v4358 = vlaneseq
  %v4359 = vshrl.u32 %v4358, 7
  %v4360 = vsub.s32 %v4357, %v4359
  %v4361 = vrot.slane %v4347, %v4360
  %v4362 = vcombine.low %v4297, %v4313
  %v4363 = vcombine.high %v4297, %v4313
  %v4365 = vunpack.c.l.s4 1934713408
  %v4366 = vunpack.c.0.s8 %v4365
  %v4367 = vlaneseq
  %v4368 = vshrl.u32 %v4367, 7
  %v4369 = vsub.s32 %v4366, %v4368
  %v4370 = vrot.slane %v4362, %v4369
  %v4372 = vunpack.c.l.s4 1934713408
  %v4373 = vunpack.c.0.s8 %v4372
  %v4374 = vlaneseq
  %v4375 = vshrl.u32 %v4374, 7
  %v4376 = vsub.s32 %v4373, %v4375
  %v4377 = vrot.slane %v4363, %v4376
  %v4378 = vcombine.low %v4322, %v4338
  %v4379 = vcombine.high %v4322, %v4338
  %v4381 = vunpack.c.l.s4 1934713408
  %v4382 = vunpack.c.0.s8 %v4381
  %v4383 = vlaneseq
  %v4384 = vshrl.u32 %v4383, 7
  %v4385 = vsub.s32 %v4382, %v4384
  %v4386 = vrot.slane %v4378, %v4385
  %v4388 = vunpack.c.l.s4 1934713408
  %v4389 = vunpack.c.0.s8 %v4388
  %v4390 = vlaneseq
  %v4391 = vshrl.u32 %v4390, 7
  %v4392 = vsub.s32 %v4389, %v4391
  %v4393 = vrot.slane %v4379, %v4392
  %v4394 = vcombine.low %v4329, %v4345
  %v4395 = vcombine.high %v4329, %v4345
  %v4397 = vunpack.c.l.s4 1934713408
  %v4398 = vunpack.c.0.s8 %v4397
  %v4399 = vlaneseq
  %v4400 = vshrl.u32 %v4399, 7
  %v4401 = vsub.s32 %v4398, %v4400
  %v4402 = vrot.slane %v4394, %v4401
  %v4404 = vunpack.c.l.s4 1934713408
  %v4405 = vunpack.c.0.s8 %v4404
  %v4406 = vlaneseq
  %v4407 = vshrl.u32 %v4406, 7
  %v4408 = vsub.s32 %v4405, %v4407
  %v4409 = vrot.slane %v4395, %v4408
  %v4410 = vcombine.low %v4354, %v4386
  %v4411 = vcombine.high %v4354, %v4386
  %v4412 = vcombine.low %v4361, %v4393
  %v4413 = vcombine.high %v4361, %v4393
  %v4414 = vcombine.low %v4370, %v4402
  %v4415 = vcombine.high %v4370, %v4402
  %v4416 = vcombine.low %v4377, %v4409
  %v4417 = vcombine.high %v4377, %v4409
  %v4418 = vcombine.low %v3842, %v3846
  %v4419 = vcombine.high %v3842, %v3846
  %v4421 = vunpack.c.l.s4 1983009808
  %v4422 = vunpack.c.0.s8 %v4421
  %v4423 = vlaneseq
  %v4424 = vshrl.u32 %v4423, 7
  %v4425 = vsub.s32 %v4422, %v4424
  %v4426 = vrot.slane %v4418, %v4425
  %v4428 = vunpack.c.l.s4 1983009808
  %v4429 = vunpack.c.0.s8 %v4428
  %v4430 = vlaneseq
  %v4431 = vshrl.u32 %v4430, 7
  %v4432 = vsub.s32 %v4429, %v4431
  %v4433 = vrot.slane %v4419, %v4432
  %v4434 = vcombine.low %v3844, %v3848
  %v4435 = vcombine.high %v3844, %v3848
  %v4437 = vunpack.c.l.s4 1983009808
  %v4438 = vunpack.c.0.s8 %v4437
  %v4439 = vlaneseq
  %v4440 = vshrl.u32 %v4439, 7
  %v4441 = vsub.s32 %v4438, %v4440
  %v4442 = vrot.slane %v4434, %v4441
  %v4444 = vunpack.c.l.s4 1983009808
  %v4445 = vunpack.c.0.s8 %v4444
  %v4446 = vlaneseq
  %v4447 = vshrl.u32 %v4446, 7
  %v4448 = vsub.s32 %v4445, %v4447
  %v4449 = vrot.slane %v4435, %v4448
  %v4450 = vcombine.low %v3850, %v3854
  %v4451 = vcombine.high %v3850, %v3854
  %v4453 = vunpack.c.l.s4 1983009808
  %v4454 = vunpack.c.0.s8 %v4453
  %v4455 = vlaneseq
  %v4456 = vshrl.u32 %v4455, 7
  %v4457 = vsub.s32 %v4454, %v4456
  %v4458 = vrot.slane %v4450, %v4457
  %v4460 = vunpack.c.l.s4 1983009808
  %v4461 = vunpack.c.0.s8 %v4460
  %v4462 = vlaneseq
  %v4463 = vshrl.u32 %v4462, 7
  %v4464 = vsub.s32 %v4461, %v4463
  %v4465 = vrot.slane %v4451, %v4464
  %v4466 = vcombine.low %v3852, %v3856
  %v4467 = vcombine.high %v3852, %v3856
  %v4469 = vunpack.c.l.s4 1983009808
  %v4470 = vunpack.c.0.s8 %v4469
  %v4471 = vlaneseq
  %v4472 = vshrl.u32 %v4471, 7
  %v4473 = vsub.s32 %v4470, %v4472
  %v4474 = vrot.slane %v4466, %v4473
  %v4476 = vunpack.c.l.s4 1983009808
  %v4477 = vunpack.c.0.s8 %v4476
  %v4478 = vlaneseq
  %v4479 = vshrl.u32 %v4478, 7
  %v4480 = vsub.s32 %v4477, %v4479
  %v4481 = vrot.slane %v4467, %v4480
  %v4482 = vcombine.low %v4426, %v4442
  %v4483 = vcombine.high %v4426, %v4442
  %v4485 = vunpack.c.l.s4 1934713408
  %v4486 = vunpack.c.0.s8 %v4485
  %v4487 = vlaneseq
  %v4488 = vshrl.u32 %v4487, 7
  %v4489 = vsub.s32 %v4486, %v4488
  %v4490 = vrot.slane %v4482, %v4489
  %v4492 = vunpack.c.l.s4 1934713408
  %v4493 = vunpack.c.0.s8 %v4492
  %v4494 = vlaneseq
  %v4495 = vshrl.u32 %v4494, 7
  %v4496 = vsub.s32 %v4493, %v4495
  %v4497 = vrot.slane %v4483, %v4496
  %v4498 = vcombine.low %v4433, %v4449
  %v4499 = vcombine.high %v4433, %v4449
  %v4501 = vunpack.c.l.s4 1934713408
  %v4502 = vunpack.c.0.s8 %v4501
  %v4503 = vlaneseq
  %v4504 = vshrl.u32 %v4503, 7
  %v4505 = vsub.s32 %v4502, %v4504
  %v4506 = vrot.slane %v4498, %v4505
  %v4508 = vunpack.c.l.s4 1934713408
  %v4509 = vunpack.c.0.s8 %v4508
  %v4510 = vlaneseq
  %v4511 = vshrl.u32 %v4510, 7
  %v4512 = vsub.s32 %v4509, %v4511
  %v4513 = vrot.slane %v4499, %v4512
  %v4514 = vcombine.low %v4458, %v4474
  %v4515 = vcombine.high %v4458, %v4474
  %v4517 = vunpack.c.l.s4 1934713408
  %v4518 = vunpack.c.0.s8 %v4517
  %v4519 = vlaneseq
  %v4520 = vshrl.u32 %v4519, 7
  %v4521 = vsub.s32 %v4518, %v4520
  %v4522 = vrot.slane %v4514, %v4521
  %v4524 = vunpack.c.l.s4 1934713408
  %v4525 = vunpack.c.0.s8 %v4524
  %v4526 = vlaneseq
  %v4527 = vshrl.u32 %v4526, 7
  %v4528 = vsub.s32 %v4525, %v4527
  %v4529 = vrot.slane %v4515, %v4528
  %v4530 = vcombine.low %v4465, %v4481
  %v4531 = vcombine.high %v4465, %v4481
  %v4533 = vunpack.c.l.s4 1934713408
  %v4534 = vunpack.c.0.s8 %v4533
  %v4535 = vlaneseq
  %v4536 = vshrl.u32 %v4535, 7
  %v4537 = vsub.s32 %v4534, %v4536
  %v4538 = vrot.slane %v4530, %v4537
  %v4540 = vunpack.c.l.s4 1934713408
  %v4541 = vunpack.c.0.s8 %v4540
  %v4542 = vlaneseq
  %v4543 = vshrl.u32 %v4542, 7
  %v4544 = vsub.s32 %v4541, %v4543
  %v4545 = vrot.slane %v4531, %v4544
  %v4546 = vcombine.low %v4490, %v4522
  %v4547 = vcombine.high %v4490, %v4522
  %v4548 = vcombine.low %v4497, %v4529
  %v4549 = vcombine.high %v4497, %v4529
  %v4550 = vcombine.low %v4506, %v4538
  %v4551 = vcombine.high %v4506, %v4538
  %v4552 = vcombine.low %v4513, %v4545
  %v4553 = vcombine.high %v4513, %v4545
  %v4554 = vcombine.low %v3858, %v3862
  %v4555 = vcombine.high %v3858, %v3862
  %v4557 = vunpack.c.l.s4 1983009808
  %v4558 = vunpack.c.0.s8 %v4557
  %v4559 = vlaneseq
  %v4560 = vshrl.u32 %v4559, 7
  %v4561 = vsub.s32 %v4558, %v4560
  %v4562 = vrot.slane %v4554, %v4561
  %v4564 = vunpack.c.l.s4 1983009808
  %v4565 = vunpack.c.0.s8 %v4564
  %v4566 = vlaneseq
  %v4567 = vshrl.u32 %v4566, 7
  %v4568 = vsub.s32 %v4565, %v4567
  %v4569 = vrot.slane %v4555, %v4568
  %v4570 = vcombine.low %v3860, %v3864
  %v4571 = vcombine.high %v3860, %v3864
  %v4573 = vunpack.c.l.s4 1983009808
  %v4574 = vunpack.c.0.s8 %v4573
  %v4575 = vlaneseq
  %v4576 = vshrl.u32 %v4575, 7
  %v4577 = vsub.s32 %v4574, %v4576
  %v4578 = vrot.slane %v4570, %v4577
  %v4580 = vunpack.c.l.s4 1983009808
  %v4581 = vunpack.c.0.s8 %v4580
  %v4582 = vlaneseq
  %v4583 = vshrl.u32 %v4582, 7
  %v4584 = vsub.s32 %v4581, %v4583
  %v4585 = vrot.slane %v4571, %v4584
  %v4586 = vcombine.low %v3866, %v3870
  %v4587 = vcombine.high %v3866, %v3870
  %v4589 = vunpack.c.l.s4 1983009808
  %v4590 = vunpack.c.0.s8 %v4589
  %v4591 = vlaneseq
  %v4592 = vshrl.u32 %v4591, 7
  %v4593 = vsub.s32 %v4590, %v4592
  %v4594 = vrot.slane %v4586, %v4593
  %v4596 = vunpack.c.l.s4 1983009808
  %v4597 = vunpack.c.0.s8 %v4596
  %v4598 = vlaneseq
  %v4599 = vshrl.u32 %v4598, 7
  %v4600 = vsub.s32 %v4597, %v4599
  %v4601 = vrot.slane %v4587, %v4600
  %v4602 = vcombine.low %v3868, %v3872
  %v4603 = vcombine.high %v3868, %v3872
  %v4605 = vunpack.c.l.s4 1983009808
  %v4606 = vunpack.c.0.s8 %v4605
  %v4607 = vlaneseq
  %v4608 = vshrl.u32 %v4607, 7
  %v4609 = vsub.s32 %v4606, %v4608
  %v4610 = vrot.slane %v4602, %v4609
  %v4612 = vunpack.c.l.s4 1983009808
  %v4613 = vunpack.c.0.s8 %v4612
  %v4614 = vlaneseq
  %v4615 = vshrl.u32 %v4614, 7
  %v4616 = vsub.s32 %v4613, %v4615
  %v4617 = vrot.slane %v4603, %v4616
  %v4618 = vcombine.low %v4562, %v4578
  %v4619 = vcombine.high %v4562, %v4578
  %v4621 = vunpack.c.l.s4 1934713408
  %v4622 = vunpack.c.0.s8 %v4621
  %v4623 = vlaneseq
  %v4624 = vshrl.u32 %v4623, 7
  %v4625 = vsub.s32 %v4622, %v4624
  %v4626 = vrot.slane %v4618, %v4625
  %v4628 = vunpack.c.l.s4 1934713408
  %v4629 = vunpack.c.0.s8 %v4628
  %v4630 = vlaneseq
  %v4631 = vshrl.u32 %v4630, 7
  %v4632 = vsub.s32 %v4629, %v4631
  %v4633 = vrot.slane %v4619, %v4632
  %v4634 = vcombine.low %v4569, %v4585
  %v4635 = vcombine.high %v4569, %v4585
  %v4637 = vunpack.c.l.s4 1934713408
  %v4638 = vunpack.c.0.s8 %v4637
  %v4639 = vlaneseq
  %v4640 = vshrl.u32 %v4639, 7
  %v4641 = vsub.s32 %v4638, %v4640
  %v4642 = vrot.slane %v4634, %v4641
  %v4644 = vunpack.c.l.s4 1934713408
  %v4645 = vunpack.c.0.s8 %v4644
  %v4646 = vlaneseq
  %v4647 = vshrl.u32 %v4646, 7
  %v4648 = vsub.s32 %v4645, %v4647
  %v4649 = vrot.slane %v4635, %v4648
  %v4650 = vcombine.low %v4594, %v4610
  %v4651 = vcombine.high %v4594, %v4610
  %v4653 = vunpack.c.l.s4 1934713408
  %v4654 = vunpack.c.0.s8 %v4653
  %v4655 = vlaneseq
  %v4656 = vshrl.u32 %v4655, 7
  %v4657 = vsub.s32 %v4654, %v4656
  %v4658 = vrot.slane %v4650, %v4657
  %v4660 = vunpack.c.l.s4 1934713408
  %v4661 = vunpack.c.0.s8 %v4660
  %v4662 = vlaneseq
  %v4663 = vshrl.u32 %v4662, 7
  %v4664 = vsub.s32 %v4661, %v4663
  %v4665 = vrot.slane %v4651, %v4664
  %v4666 = vcombine.low %v4601, %v4617
  %v4667 = vcombine.high %v4601, %v4617
  %v4669 = vunpack.c.l.s4 1934713408
  %v4670 = vunpack.c.0.s8 %v4669
  %v4671 = vlaneseq
  %v4672 = vshrl.u32 %v4671, 7
  %v4673 = vsub.s32 %v4670, %v4672
  %v4674 = vrot.slane %v4666, %v4673
  %v4676 = vunpack.c.l.s4 1934713408
  %v4677 = vunpack.c.0.s8 %v4676
  %v4678 = vlaneseq
  %v4679 = vshrl.u32 %v4678, 7
  %v4680 = vsub.s32 %v4677, %v4679
  %v4681 = vrot.slane %v4667, %v4680
  %v4682 = vcombine.low %v4626, %v4658
  %v4683 = vcombine.high %v4626, %v4658
  %v4684 = vcombine.low %v4633, %v4665
  %v4685 = vcombine.high %v4633, %v4665
  %v4686 = vcombine.low %v4642, %v4674
  %v4687 = vcombine.high %v4642, %v4674
  %v4688 = vcombine.low %v4649, %v4681
  %v4689 = vcombine.high %v4649, %v4681
  %v4690 = vcombine.low %v3843, %v3847
  %v4691 = vcombine.high %v3843, %v3847
  %v4693 = vunpack.c.l.s4 1983009808
  %v4694 = vunpack.c.0.s8 %v4693
  %v4695 = vlaneseq
  %v4696 = vshrl.u32 %v4695, 7
  %v4697 = vsub.s32 %v4694, %v4696
  %v4698 = vrot.slane %v4690, %v4697
  %v4700 = vunpack.c.l.s4 1983009808
  %v4701 = vunpack.c.0.s8 %v4700
  %v4702 = vlaneseq
  %v4703 = vshrl.u32 %v4702, 7
  %v4704 = vsub.s32 %v4701, %v4703
  %v4705 = vrot.slane %v4691, %v4704
  %v4706 = vcombine.low %v3845, %v3849
  %v4707 = vcombine.high %v3845, %v3849
  %v4709 = vunpack.c.l.s4 1983009808
  %v4710 = vunpack.c.0.s8 %v4709
  %v4711 = vlaneseq
  %v4712 = vshrl.u32 %v4711, 7
  %v4713 = vsub.s32 %v4710, %v4712
  %v4714 = vrot.slane %v4706, %v4713
  %v4716 = vunpack.c.l.s4 1983009808
  %v4717 = vunpack.c.0.s8 %v4716
  %v4718 = vlaneseq
  %v4719 = vshrl.u32 %v4718, 7
  %v4720 = vsub.s32 %v4717, %v4719
  %v4721 = vrot.slane %v4707, %v4720
  %v4722 = vcombine.low %v3851, %v3855
  %v4723 = vcombine.high %v3851, %v3855
  %v4725 = vunpack.c.l.s4 1983009808
  %v4726 = vunpack.c.0.s8 %v4725
  %v4727 = vlaneseq
  %v4728 = vshrl.u32 %v4727, 7
  %v4729 = vsub.s32 %v4726, %v4728
  %v4730 = vrot.slane %v4722, %v4729
  %v4732 = vunpack.c.l.s4 1983009808
  %v4733 = vunpack.c.0.s8 %v4732
  %v4734 = vlaneseq
  %v4735 = vshrl.u32 %v4734, 7
  %v4736 = vsub.s32 %v4733, %v4735
  %v4737 = vrot.slane %v4723, %v4736
  %v4738 = vcombine.low %v3853, %v3857
  %v4739 = vcombine.high %v3853, %v3857
  %v4741 = vunpack.c.l.s4 1983009808
  %v4742 = vunpack.c.0.s8 %v4741
  %v4743 = vlaneseq
  %v4744 = vshrl.u32 %v4743, 7
  %v4745 = vsub.s32 %v4742, %v4744
  %v4746 = vrot.slane %v4738, %v4745
  %v4748 = vunpack.c.l.s4 1983009808
  %v4749 = vunpack.c.0.s8 %v4748
  %v4750 = vlaneseq
  %v4751 = vshrl.u32 %v4750, 7
  %v4752 = vsub.s32 %v4749, %v4751
  %v4753 = vrot.slane %v4739, %v4752
  %v4754 = vcombine.low %v4698, %v4714
  %v4755 = vcombine.high %v4698, %v4714
  %v4757 = vunpack.c.l.s4 1934713408
  %v4758 = vunpack.c.0.s8 %v4757
  %v4759 = vlaneseq
  %v4760 = vshrl.u32 %v4759, 7
  %v4761 = vsub.s32 %v4758, %v4760
  %v4762 = vrot.slane %v4754, %v4761
  %v4764 = vunpack.c.l.s4 1934713408
  %v4765 = vunpack.c.0.s8 %v4764
  %v4766 = vlaneseq
  %v4767 = vshrl.u32 %v4766, 7
  %v4768 = vsub.s32 %v4765, %v4767
  %v4769 = vrot.slane %v4755, %v4768
  %v4770 = vcombine.low %v4705, %v4721
  %v4771 = vcombine.high %v4705, %v4721
  %v4773 = vunpack.c.l.s4 1934713408
  %v4774 = vunpack.c.0.s8 %v4773
  %v4775 = vlaneseq
  %v4776 = vshrl.u32 %v4775, 7
  %v4777 = vsub.s32 %v4774, %v4776
  %v4778 = vrot.slane %v4770, %v4777
  %v4780 = vunpack.c.l.s4 1934713408
  %v4781 = vunpack.c.0.s8 %v4780
  %v4782 = vlaneseq
  %v4783 = vshrl.u32 %v4782, 7
  %v4784 = vsub.s32 %v4781, %v4783
  %v4785 = vrot.slane %v4771, %v4784
  %v4786 = vcombine.low %v4730, %v4746
  %v4787 = vcombine.high %v4730, %v4746
  %v4789 = vunpack.c.l.s4 1934713408
  %v4790 = vunpack.c.0.s8 %v4789
  %v4791 = vlaneseq
  %v4792 = vshrl.u32 %v4791, 7
  %v4793 = vsub.s32 %v4790, %v4792
  %v4794 = vrot.slane %v4786, %v4793
  %v4796 = vunpack.c.l.s4 1934713408
  %v4797 = vunpack.c.0.s8 %v4796
  %v4798 = vlaneseq
  %v4799 = vshrl.u32 %v4798, 7
  %v4800 = vsub.s32 %v4797, %v4799
  %v4801 = vrot.slane %v4787, %v4800
  %v4802 = vcombine.low %v4737, %v4753
  %v4803 = vcombine.high %v4737, %v4753
  %v4805 = vunpack.c.l.s4 1934713408
  %v4806 = vunpack.c.0.s8 %v4805
  %v4807 = vlaneseq
  %v4808 = vshrl.u32 %v4807, 7
  %v4809 = vsub.s32 %v4806, %v4808
  %v4810 = vrot.slane %v4802, %v4809
  %v4812 = vunpack.c.l.s4 1934713408
  %v4813 = vunpack.c.0.s8 %v4812
  %v4814 = vlaneseq
  %v4815 = vshrl.u32 %v4814, 7
  %v4816 = vsub.s32 %v4813, %v4815
  %v4817 = vrot.slane %v4803, %v4816
  %v4818 = vcombine.low %v4762, %v4794
  %v4819 = vcombine.high %v4762, %v4794
  %v4820 = vcombine.low %v4769, %v4801
  %v4821 = vcombine.high %v4769, %v4801
  %v4822 = vcombine.low %v4778, %v4810
  %v4823 = vcombine.high %v4778, %v4810
  %v4824 = vcombine.low %v4785, %v4817
  %v4825 = vcombine.high %v4785, %v4817
  %v4826 = vcombine.low %v3859, %v3863
  %v4827 = vcombine.high %v3859, %v3863
  %v4829 = vunpack.c.l.s4 1983009808
  %v4830 = vunpack.c.0.s8 %v4829
  %v4831 = vlaneseq
  %v4832 = vshrl.u32 %v4831, 7
  %v4833 = vsub.s32 %v4830, %v4832
  %v4834 = vrot.slane %v4826, %v4833
  %v4836 = vunpack.c.l.s4 1983009808
  %v4837 = vunpack.c.0.s8 %v4836
  %v4838 = vlaneseq
  %v4839 = vshrl.u32 %v4838, 7
  %v4840 = vsub.s32 %v4837, %v4839
  %v4841 = vrot.slane %v4827, %v4840
  %v4842 = vcombine.low %v3861, %v3865
  %v4843 = vcombine.high %v3861, %v3865
  %v4845 = vunpack.c.l.s4 1983009808
  %v4846 = vunpack.c.0.s8 %v4845
  %v4847 = vlaneseq
  %v4848 = vshrl.u32 %v4847, 7
  %v4849 = vsub.s32 %v4846, %v4848
  %v4850 = vrot.slane %v4842, %v4849
  %v4852 = vunpack.c.l.s4 1983009808
  %v4853 = vunpack.c.0.s8 %v4852
  %v4854 = vlaneseq
  %v4855 = vshrl.u32 %v4854, 7
  %v4856 = vsub.s32 %v4853, %v4855
  %v4857 = vrot.slane %v4843, %v4856
  %v4858 = vcombine.low %v3867, %v3871
  %v4859 = vcombine.high %v3867, %v3871
  %v4861 = vunpack.c.l.s4 1983009808
  %v4862 = vunpack.c.0.s8 %v4861
  %v4863 = vlaneseq
  %v4864 = vshrl.u32 %v4863, 7
  %v4865 = vsub.s32 %v4862, %v4864
  %v4866 = vrot.slane %v4858, %v4865
  %v4868 = vunpack.c.l.s4 1983009808
  %v4869 = vunpack.c.0.s8 %v4868
  %v4870 = vlaneseq
  %v4871 = vshrl.u32 %v4870, 7
  %v4872 = vsub.s32 %v4869, %v4871
  %v4873 = vrot.slane %v4859, %v4872
  %v4874 = vcombine.low %v3869, %v3873
  %v4875 = vcombine.high %v3869, %v3873
  %v4877 = vunpack.c.l.s4 1983009808
  %v4878 = vunpack.c.0.s8 %v4877
  %v4879 = vlaneseq
  %v4880 = vshrl.u32 %v4879, 7
  %v4881 = vsub.s32 %v4878, %v4880
  %v4882 = vrot.slane %v4874, %v4881
  %v4884 = vunpack.c.l.s4 1983009808
  %v4885 = vunpack.c.0.s8 %v4884
  %v4886 = vlaneseq
  %v4887 = vshrl.u32 %v4886, 7
  %v4888 = vsub.s32 %v4885, %v4887
  %v4889 = vrot.slane %v4875, %v4888
  %v4890 = vcombine.low %v4834, %v4850
  %v4891 = vcombine.high %v4834, %v4850
  %v4893 = vunpack.c.l.s4 1934713408
  %v4894 = vunpack.c.0.s8 %v4893
  %v4895 = vlaneseq
  %v4896 = vshrl.u32 %v4895, 7
  %v4897 = vsub.s32 %v4894, %v4896
  %v4898 = vrot.slane %v4890, %v4897
  %v4900 = vunpack.c.l.s4 1934713408
  %v4901 = vunpack.c.0.s8 %v4900
  %v4902 = vlaneseq
  %v4903 = vshrl.u32 %v4902, 7
  %v4904 = vsub.s32 %v4901, %v4903
  %v4905 = vrot.slane %v4891, %v4904
  %v4906 = vcombine.low %v4841, %v4857
  %v4907 = vcombine.high %v4841, %v4857
  %v4909 = vunpack.c.l.s4 1934713408
  %v4910 = vunpack.c.0.s8 %v4909
  %v4911 = vlaneseq
  %v4912 = vshrl.u32 %v4911, 7
  %v4913 = vsub.s32 %v4910, %v4912
  %v4914 = vrot.slane %v4906, %v4913
  %v4916 = vunpack.c.l.s4 1934713408
  %v4917 = vunpack.c.0.s8 %v4916
  %v4918 = vlaneseq
  %v4919 = vshrl.u32 %v4918, 7
  %v4920 = vsub.s32 %v4917, %v4919
  %v4921 = vrot.slane %v4907, %v4920
  %v4922 = vcombine.low %v4866, %v4882
  %v4923 = vcombine.high %v4866, %v4882
  %v4925 = vunpack.c.l.s4 1934713408
  %v4926 = vunpack.c.0.s8 %v4925
  %v4927 = vlaneseq
  %v4928 = vshrl.u32 %v4927, 7
  %v4929 = vsub.s32 %v4926, %v4928
  %v4930 = vrot.slane %v4922, %v4929
  %v4932 = vunpack.c.l.s4 1934713408
  %v4933 = vunpack.c.0.s8 %v4932
  %v4934 = vlaneseq
  %v4935 = vshrl.u32 %v4934, 7
  %v4936 = vsub.s32 %v4933, %v4935
  %v4937 = vrot.slane %v4923, %v4936
  %v4938 = vcombine.low %v4873, %v4889
  %v4939 = vcombine.high %v4873, %v4889
  %v4941 = vunpack.c.l.s4 1934713408
  %v4942 = vunpack.c.0.s8 %v4941
  %v4943 = vlaneseq
  %v4944 = vshrl.u32 %v4943, 7
  %v4945 = vsub.s32 %v4942, %v4944
  %v4946 = vrot.slane %v4938, %v4945
  %v4948 = vunpack.c.l.s4 1934713408
  %v4949 = vunpack.c.0.s8 %v4948
  %v4950 = vlaneseq
  %v4951 = vshrl.u32 %v4950, 7
  %v4952 = vsub.s32 %v4949, %v4951
  %v4953 = vrot.slane %v4939, %v4952
  %v4954 = vcombine.low %v4898, %v4930
  %v4955 = vcombine.high %v4898, %v4930
  %v4956 = vcombine.low %v4905, %v4937
  %v4957 = vcombine.high %v4905, %v4937
  %v4958 = vcombine.low %v4914, %v4946
  %v4959 = vcombine.high %v4914, %v4946
  %v4960 = vcombine.low %v4921, %v4953
  %v4961 = vcombine.high %v4921, %v4953
  %v4962 = vcombine.low %v4002, %v4004
  %v4963 = vcombine.high %v4002, %v4004
  %v4965 = vunpack.c.l.s4 1983009808
  %v4966 = vunpack.c.0.s8 %v4965
  %v4967 = vlaneseq
  %v4968 = vshrl.u32 %v4967, 7
  %v4969 = vsub.s32 %v4966, %v4968
  %v4970 = vrot.slane %v4962, %v4969
  %v4972 = vunpack.c.l.s4 1983009808
  %v4973 = vunpack.c.0.s8 %v4972
  %v4974 = vlaneseq
  %v4975 = vshrl.u32 %v4974, 7
  %v4976 = vsub.s32 %v4973, %v4975
  %v4977 = vrot.slane %v4963, %v4976
  %v4978 = vcombine.low %v4003, %v4005
  %v4979 = vcombine.high %v4003, %v4005
  %v4981 = vunpack.c.l.s4 1983009808
  %v4982 = vunpack.c.0.s8 %v4981
  %v4983 = vlaneseq
  %v4984 = vshrl.u32 %v4983, 7
  %v4985 = vsub.s32 %v4982, %v4984
  %v4986 = vrot.slane %v4978, %v4985
  %v4988 = vunpack.c.l.s4 1983009808
  %v4989 = vunpack.c.0.s8 %v4988
  %v4990 = vlaneseq
  %v4991 = vshrl.u32 %v4990, 7
  %v4992 = vsub.s32 %v4989, %v4991
  %v4993 = vrot.slane %v4979, %v4992
  %v4994 = vcombine.low %v4006, %v4008
  %v4995 = vcombine.high %v4006, %v4008
  %v4997 = vunpack.c.l.s4 1983009808
  %v4998 = vunpack.c.0.s8 %v4997
  %v4999 = vlaneseq
  %v5000 = vshrl.u32 %v4999, 7
  %v5001 = vsub.s32 %v4998, %v5000
  %v5002 = vrot.slane %v4994, %v5001
  %v5004 = vunpack.c.l.s4 1983009808
  %v5005 = vunpack.c.0.s8 %v5004
  %v5006 = vlaneseq
  %v5007 = vshrl.u32 %v5006, 7
  %v5008 = vsub.s32 %v5005, %v5007
  %v5009 = vrot.slane %v4995, %v5008
  %v5010 = vcombine.low %v4007, %v4009
  %v5011 = vcombine.high %v4007, %v4009
  %v5013 = vunpack.c.l.s4 1983009808
  %v5014 = vunpack.c.0.s8 %v5013
  %v5015 = vlaneseq
  %v5016 = vshrl.u32 %v5015, 7
  %v5017 = vsub.s32 %v5014, %v5016
  %v5018 = vrot.slane %v5010, %v5017
  %v5020 = vunpack.c.l.s4 1983009808
  %v5021 = vunpack.c.0.s8 %v5020
  %v5022 = vlaneseq
  %v5023 = vshrl.u32 %v5022, 7
  %v5024 = vsub.s32 %v5021, %v5023
  %v5025 = vrot.slane %v5011, %v5024
  %v5026 = vcombine.low %v4970, %v4986
  %v5027 = vcombine.high %v4970, %v4986
  %v5029 = vunpack.c.l.s4 1934713408
  %v5030 = vunpack.c.0.s8 %v5029
  %v5031 = vlaneseq
  %v5032 = vshrl.u32 %v5031, 7
  %v5033 = vsub.s32 %v5030, %v5032
  %v5034 = vrot.slane %v5026, %v5033
  %v5036 = vunpack.c.l.s4 1934713408
  %v5037 = vunpack.c.0.s8 %v5036
  %v5038 = vlaneseq
  %v5039 = vshrl.u32 %v5038, 7
  %v5040 = vsub.s32 %v5037, %v5039
  %v5041 = vrot.slane %v5027, %v5040
  %v5042 = vcombine.low %v4977, %v4993
  %v5043 = vcombine.high %v4977, %v4993
  %v5045 = vunpack.c.l.s4 1934713408
  %v5046 = vunpack.c.0.s8 %v5045
  %v5047 = vlaneseq
  %v5048 = vshrl.u32 %v5047, 7
  %v5049 = vsub.s32 %v5046, %v5048
  %v5050 = vrot.slane %v5042, %v5049
  %v5052 = vunpack.c.l.s4 1934713408
  %v5053 = vunpack.c.0.s8 %v5052
  %v5054 = vlaneseq
  %v5055 = vshrl.u32 %v5054, 7
  %v5056 = vsub.s32 %v5053, %v5055
  %v5057 = vrot.slane %v5043, %v5056
  %v5058 = vcombine.low %v5002, %v5018
  %v5059 = vcombine.high %v5002, %v5018
  %v5061 = vunpack.c.l.s4 1934713408
  %v5062 = vunpack.c.0.s8 %v5061
  %v5063 = vlaneseq
  %v5064 = vshrl.u32 %v5063, 7
  %v5065 = vsub.s32 %v5062, %v5064
  %v5066 = vrot.slane %v5058, %v5065
  %v5068 = vunpack.c.l.s4 1934713408
  %v5069 = vunpack.c.0.s8 %v5068
  %v5070 = vlaneseq
  %v5071 = vshrl.u32 %v5070, 7
  %v5072 = vsub.s32 %v5069, %v5071
  %v5073 = vrot.slane %v5059, %v5072
  %v5074 = vcombine.low %v5009, %v5025
  %v5075 = vcombine.high %v5009, %v5025
  %v5077 = vunpack.c.l.s4 1934713408
  %v5078 = vunpack.c.0.s8 %v5077
  %v5079 = vlaneseq
  %v5080 = vshrl.u32 %v5079, 7
  %v5081 = vsub.s32 %v5078, %v5080
  %v5082 = vrot.slane %v5074, %v5081
  %v5084 = vunpack.c.l.s4 1934713408
  %v5085 = vunpack.c.0.s8 %v5084
  %v5086 = vlaneseq
  %v5087 = vshrl.u32 %v5086, 7
  %v5088 = vsub.s32 %v5085, %v5087
  %v5089 = vrot.slane %v5075, %v5088
  %v5090 = vcombine.low %v5034, %v5066
  %v5091 = vcombine.high %v5034, %v5066
  %v5092 = vcombine.low %v5041, %v5073
  %v5093 = vcombine.high %v5041, %v5073
  %v5094 = vcombine.low %v5050, %v5082
  %v5095 = vcombine.high %v5050, %v5082
  %v5096 = vcombine.low %v5057, %v5089
  %v5097 = vcombine.high %v5057, %v5089
  %v5098 = vcombine.low %v4274, %v4276
  %v5099 = vcombine.high %v4274, %v4276
  %v5101 = vunpack.c.l.s4 1983009808
  %v5102 = vunpack.c.0.s8 %v5101
  %v5103 = vlaneseq
  %v5104 = vshrl.u32 %v5103, 7
  %v5105 = vsub.s32 %v5102, %v5104
  %v5106 = vrot.slane %v5098, %v5105
  %v5108 = vunpack.c.l.s4 1983009808
  %v5109 = vunpack.c.0.s8 %v5108
  %v5110 = vlaneseq
  %v5111 = vshrl.u32 %v5110, 7
  %v5112 = vsub.s32 %v5109, %v5111
  %v5113 = vrot.slane %v5099, %v5112
  %v5114 = vcombine.low %v4275, %v4277
  %v5115 = vcombine.high %v4275, %v4277
  %v5117 = vunpack.c.l.s4 1983009808
  %v5118 = vunpack.c.0.s8 %v5117
  %v5119 = vlaneseq
  %v5120 = vshrl.u32 %v5119, 7
  %v5121 = vsub.s32 %v5118, %v5120
  %v5122 = vrot.slane %v5114, %v5121
  %v5124 = vunpack.c.l.s4 1983009808
  %v5125 = vunpack.c.0.s8 %v5124
  %v5126 = vlaneseq
  %v5127 = vshrl.u32 %v5126, 7
  %v5128 = vsub.s32 %v5125, %v5127
  %v5129 = vrot.slane %v5115, %v5128
  %v5130 = vcombine.low %v4278, %v4280
  %v5131 = vcombine.high %v4278, %v4280
  %v5133 = vunpack.c.l.s4 1983009808
  %v5134 = vunpack.c.0.s8 %v5133
  %v5135 = vlaneseq
  %v5136 = vshrl.u32 %v5135, 7
  %v5137 = vsub.s32 %v5134, %v5136
  %v5138 = vrot.slane %v5130, %v5137
  %v5140 = vunpack.c.l.s4 1983009808
  %v5141 = vunpack.c.0.s8 %v5140
  %v5142 = vlaneseq
  %v5143 = vshrl.u32 %v5142, 7
  %v5144 = vsub.s32 %v5141, %v5143
  %v5145 = vrot.slane %v5131, %v5144
  %v5146 = vcombine.low %v4279, %v4281
  %v5147 = vcombine.high %v4279, %v4281
  %v5149 = vunpack.c.l.s4 1983009808
  %v5150 = vunpack.c.0.s8 %v5149
  %v5151 = vlaneseq
  %v5152 = vshrl.u32 %v5151, 7
  %v5153 = vsub.s32 %v5150, %v5152
  %v5154 = vrot.slane %v5146, %v5153
  %v5156 = vunpack.c.l.s4 1983009808
  %v5157 = vunpack.c.0.s8 %v5156
  %v5158 = vlaneseq
  %v5159 = vshrl.u32 %v5158, 7
  %v5160 = vsub.s32 %v5157, %v5159
  %v5161 = vrot.slane %v5147, %v5160
  %v5162 = vcombine.low %v5106, %v5122
  %v5163 = vcombine.high %v5106, %v5122
  %v5165 = vunpack.c.l.s4 1934713408
  %v5166 = vunpack.c.0.s8 %v5165
  %v5167 = vlaneseq
  %v5168 = vshrl.u32 %v5167, 7
  %v5169 = vsub.s32 %v5166, %v5168
  %v5170 = vrot.slane %v5162, %v5169
  %v5172 = vunpack.c.l.s4 1934713408
  %v5173 = vunpack.c.0.s8 %v5172
  %v5174 = vlaneseq
  %v5175 = vshrl.u32 %v5174, 7
  %v5176 = vsub.s32 %v5173, %v5175
  %v5177 = vrot.slane %v5163, %v5176
  %v5178 = vcombine.low %v5113, %v5129
  %v5179 = vcombine.high %v5113, %v5129
  %v5181 = vunpack.c.l.s4 1934713408
  %v5182 = vunpack.c.0.s8 %v5181
  %v5183 = vlaneseq
  %v5184 = vshrl.u32 %v5183, 7
  %v5185 = vsub.s32 %v5182, %v5184
  %v5186 = vrot.slane %v5178, %v5185
  %v5188 = vunpack.c.l.s4 1934713408
  %v5189 = vunpack.c.0.s8 %v5188
  %v5190 = vlaneseq
  %v5191 = vshrl.u32 %v5190, 7
  %v5192 = vsub.s32 %v5189, %v5191
  %v5193 = vrot.slane %v5179, %v5192
  %v5194 = vcombine.low %v5138, %v5154
  %v5195 = vcombine.high %v5138, %v5154
  %v5197 = vunpack.c.l.s4 1934713408
  %v5198 = vunpack.c.0.s8 %v5197
  %v5199 = vlaneseq
  %v5200 = vshrl.u32 %v5199, 7
  %v5201 = vsub.s32 %v5198, %v5200
  %v5202 = vrot.slane %v5194, %v5201
  %v5204 = vunpack.c.l.s4 1934713408
  %v5205 = vunpack.c.0.s8 %v5204
  %v5206 = vlaneseq
  %v5207 = vshrl.u32 %v5206, 7
  %v5208 = vsub.s32 %v5205, %v5207
  %v5209 = vrot.slane %v5195, %v5208
  %v5210 = vcombine.low %v5145, %v5161
  %v5211 = vcombine.high %v5145, %v5161
  %v5213 = vunpack.c.l.s4 1934713408
  %v5214 = vunpack.c.0.s8 %v5213
  %v5215 = vlaneseq
  %v5216 = vshrl.u32 %v5215, 7
  %v5217 = vsub.s32 %v5214, %v5216
  %v5218 = vrot.slane %v5210, %v5217
  %v5220 = vunpack.c.l.s4 1934713408
  %v5221 = vunpack.c.0.s8 %v5220
  %v5222 = vlaneseq
  %v5223 = vshrl.u32 %v5222, 7
  %v5224 = vsub.s32 %v5221, %v5223
  %v5225 = vrot.slane %v5211, %v5224
  %v5226 = vcombine.low %v5170, %v5202
  %v5227 = vcombine.high %v5170, %v5202
  %v5228 = vcombine.low %v5177, %v5209
  %v5229 = vcombine.high %v5177, %v5209
  %v5230 = vcombine.low %v5186, %v5218
  %v5231 = vcombine.high %v5186, %v5218
  %v5232 = vcombine.low %v5193, %v5225
  %v5233 = vcombine.high %v5193, %v5225
  %v5234 = vcombine.low %v4138, %v4140
  %v5235 = vcombine.high %v4138, %v4140
  %v5237 = vunpack.c.l.s4 1983009808
  %v5238 = vunpack.c.0.s8 %v5237
  %v5239 = vlaneseq
  %v5240 = vshrl.u32 %v5239, 7
  %v5241 = vsub.s32 %v5238, %v5240
  %v5242 = vrot.slane %v5234, %v5241
  %v5244 = vunpack.c.l.s4 1983009808
  %v5245 = vunpack.c.0.s8 %v5244
  %v5246 = vlaneseq
  %v5247 = vshrl.u32 %v5246, 7
  %v5248 = vsub.s32 %v5245, %v5247
  %v5249 = vrot.slane %v5235, %v5248
  %v5250 = vcombine.low %v4139, %v4141
  %v5251 = vcombine.high %v4139, %v4141
  %v5253 = vunpack.c.l.s4 1983009808
  %v5254 = vunpack.c.0.s8 %v5253
  %v5255 = vlaneseq
  %v5256 = vshrl.u32 %v5255, 7
  %v5257 = vsub.s32 %v5254, %v5256
  %v5258 = vrot.slane %v5250, %v5257
  %v5260 = vunpack.c.l.s4 1983009808
  %v5261 = vunpack.c.0.s8 %v5260
  %v5262 = vlaneseq
  %v5263 = vshrl.u32 %v5262, 7
  %v5264 = vsub.s32 %v5261, %v5263
  %v5265 = vrot.slane %v5251, %v5264
  %v5266 = vcombine.low %v4142, %v4144
  %v5267 = vcombine.high %v4142, %v4144
  %v5269 = vunpack.c.l.s4 1983009808
  %v5270 = vunpack.c.0.s8 %v5269
  %v5271 = vlaneseq
  %v5272 = vshrl.u32 %v5271, 7
  %v5273 = vsub.s32 %v5270, %v5272
  %v5274 = vrot.slane %v5266, %v5273
  %v5276 = vunpack.c.l.s4 1983009808
  %v5277 = vunpack.c.0.s8 %v5276
  %v5278 = vlaneseq
  %v5279 = vshrl.u32 %v5278, 7
  %v5280 = vsub.s32 %v5277, %v5279
  %v5281 = vrot.slane %v5267, %v5280
  %v5282 = vcombine.low %v4143, %v4145
  %v5283 = vcombine.high %v4143, %v4145
  %v5285 = vunpack.c.l.s4 1983009808
  %v5286 = vunpack.c.0.s8 %v5285
  %v5287 = vlaneseq
  %v5288 = vshrl.u32 %v5287, 7
  %v5289 = vsub.s32 %v5286, %v5288
  %v5290 = vrot.slane %v5282, %v5289
  %v5292 = vunpack.c.l.s4 1983009808
  %v5293 = vunpack.c.0.s8 %v5292
  %v5294 = vlaneseq
  %v5295 = vshrl.u32 %v5294, 7
  %v5296 = vsub.s32 %v5293, %v5295
  %v5297 = vrot.slane %v5283, %v5296
  %v5298 = vcombine.low %v5242, %v5258
  %v5299 = vcombine.high %v5242, %v5258
  %v5301 = vunpack.c.l.s4 1934713408
  %v5302 = vunpack.c.0.s8 %v5301
  %v5303 = vlaneseq
  %v5304 = vshrl.u32 %v5303, 7
  %v5305 = vsub.s32 %v5302, %v5304
  %v5306 = vrot.slane %v5298, %v5305
  %v5308 = vunpack.c.l.s4 1934713408
  %v5309 = vunpack.c.0.s8 %v5308
  %v5310 = vlaneseq
  %v5311 = vshrl.u32 %v5310, 7
  %v5312 = vsub.s32 %v5309, %v5311
  %v5313 = vrot.slane %v5299, %v5312
  %v5314 = vcombine.low %v5249, %v5265
  %v5315 = vcombine.high %v5249, %v5265
  %v5317 = vunpack.c.l.s4 1934713408
  %v5318 = vunpack.c.0.s8 %v5317
  %v5319 = vlaneseq
  %v5320 = vshrl.u32 %v5319, 7
  %v5321 = vsub.s32 %v5318, %v5320
  %v5322 = vrot.slane %v5314, %v5321
  %v5324 = vunpack.c.l.s4 1934713408
  %v5325 = vunpack.c.0.s8 %v5324
  %v5326 = vlaneseq
  %v5327 = vshrl.u32 %v5326, 7
  %v5328 = vsub.s32 %v5325, %v5327
  %v5329 = vrot.slane %v5315, %v5328
  %v5330 = vcombine.low %v5274, %v5290
  %v5331 = vcombine.high %v5274, %v5290
  %v5333 = vunpack.c.l.s4 1934713408
  %v5334 = vunpack.c.0.s8 %v5333
  %v5335 = vlaneseq
  %v5336 = vshrl.u32 %v5335, 7
  %v5337 = vsub.s32 %v5334, %v5336
  %v5338 = vrot.slane %v5330, %v5337
  %v5340 = vunpack.c.l.s4 1934713408
  %v5341 = vunpack.c.0.s8 %v5340
  %v5342 = vlaneseq
  %v5343 = vshrl.u32 %v5342, 7
  %v5344 = vsub.s32 %v5341, %v5343
  %v5345 = vrot.slane %v5331, %v5344
  %v5346 = vcombine.low %v5281, %v5297
  %v5347 = vcombine.high %v5281, %v5297
  %v5349 = vunpack.c.l.s4 1934713408
  %v5350 = vunpack.c.0.s8 %v5349
  %v5351 = vlaneseq
  %v5352 = vshrl.u32 %v5351, 7
  %v5353 = vsub.s32 %v5350, %v5352
  %v5354 = vrot.slane %v5346, %v5353
  %v5356 = vunpack.c.l.s4 1934713408
  %v5357 = vunpack.c.0.s8 %v5356
  %v5358 = vlaneseq
  %v5359 = vshrl.u32 %v5358, 7
  %v5360 = vsub.s32 %v5357, %v5359
  %v5361 = vrot.slane %v5347, %v5360
  %v5362 = vcombine.low %v5306, %v5338
  %v5363 = vcombine.high %v5306, %v5338
  %v5364 = vcombine.low %v5313, %v5345
  %v5365 = vcombine.high %v5313, %v5345
  %v5366 = vcombine.low %v5322, %v5354
  %v5367 = vcombine.high %v5322, %v5354
  %v5368 = vcombine.low %v5329, %v5361
  %v5369 = vcombine.high %v5329, %v5361
  %v5370 = vcombine.low %v4410, %v4412
  %v5371 = vcombine.high %v4410, %v4412
  %v5373 = vunpack.c.l.s4 1983009808
  %v5374 = vunpack.c.0.s8 %v5373
  %v5375 = vlaneseq
  %v5376 = vshrl.u32 %v5375, 7
  %v5377 = vsub.s32 %v5374, %v5376
  %v5378 = vrot.slane %v5370, %v5377
  %v5380 = vunpack.c.l.s4 1983009808
  %v5381 = vunpack.c.0.s8 %v5380
  %v5382 = vlaneseq
  %v5383 = vshrl.u32 %v5382, 7
  %v5384 = vsub.s32 %v5381, %v5383
  %v5385 = vrot.slane %v5371, %v5384
  %v5386 = vcombine.low %v4411, %v4413
  %v5387 = vcombine.high %v4411, %v4413
  %v5389 = vunpack.c.l.s4 1983009808
  %v5390 = vunpack.c.0.s8 %v5389
  %v5391 = vlaneseq
  %v5392 = vshrl.u32 %v5391, 7
  %v5393 = vsub.s32 %v5390, %v5392
  %v5394 = vrot.slane %v5386, %v5393
  %v5396 = vunpack.c.l.s4 1983009808
  %v5397 = vunpack.c.0.s8 %v5396
  %v5398 = vlaneseq
  %v5399 = vshrl.u32 %v5398, 7
  %v5400 = vsub.s32 %v5397, %v5399
  %v5401 = vrot.slane %v5387, %v5400
  %v5402 = vcombine.low %v4414, %v4416
  %v5403 = vcombine.high %v4414, %v4416
  %v5405 = vunpack.c.l.s4 1983009808
  %v5406 = vunpack.c.0.s8 %v5405
  %v5407 = vlaneseq
  %v5408 = vshrl.u32 %v5407, 7
  %v5409 = vsub.s32 %v5406, %v5408
  %v5410 = vrot.slane %v5402, %v5409
  %v5412 = vunpack.c.l.s4 1983009808
  %v5413 = vunpack.c.0.s8 %v5412
  %v5414 = vlaneseq
  %v5415 = vshrl.u32 %v5414, 7
  %v5416 = vsub.s32 %v5413, %v5415
  %v5417 = vrot.slane %v5403, %v5416
  %v5418 = vcombine.low %v4415, %v4417
  %v5419 = vcombine.high %v4415, %v4417
  %v5421 = vunpack.c.l.s4 1983009808
  %v5422 = vunpack.c.0.s8 %v5421
  %v5423 = vlaneseq
  %v5424 = vshrl.u32 %v5423, 7
  %v5425 = vsub.s32 %v5422, %v5424
  %v5426 = vrot.slane %v5418, %v5425
  %v5428 = vunpack.c.l.s4 1983009808
  %v5429 = vunpack.c.0.s8 %v5428
  %v5430 = vlaneseq
  %v5431 = vshrl.u32 %v5430, 7
  %v5432 = vsub.s32 %v5429, %v5431
  %v5433 = vrot.slane %v5419, %v5432
  %v5434 = vcombine.low %v5378, %v5394
  %v5435 = vcombine.high %v5378, %v5394
  %v5437 = vunpack.c.l.s4 1934713408
  %v5438 = vunpack.c.0.s8 %v5437
  %v5439 = vlaneseq
  %v5440 = vshrl.u32 %v5439, 7
  %v5441 = vsub.s32 %v5438, %v5440
  %v5442 = vrot.slane %v5434, %v5441
  %v5444 = vunpack.c.l.s4 1934713408
  %v5445 = vunpack.c.0.s8 %v5444
  %v5446 = vlaneseq
  %v5447 = vshrl.u32 %v5446, 7
  %v5448 = vsub.s32 %v5445, %v5447
  %v5449 = vrot.slane %v5435, %v5448
  %v5450 = vcombine.low %v5385, %v5401
  %v5451 = vcombine.high %v5385, %v5401
  %v5453 = vunpack.c.l.s4 1934713408
  %v5454 = vunpack.c.0.s8 %v5453
  %v5455 = vlaneseq
  %v5456 = vshrl.u32 %v5455, 7
  %v5457 = vsub.s32 %v5454, %v5456
  %v5458 = vrot.slane %v5450, %v5457
  %v5460 = vunpack.c.l.s4 1934713408
  %v5461 = vunpack.c.0.s8 %v5460
  %v5462 = vlaneseq
  %v5463 = vshrl.u32 %v5462, 7
  %v5464 = vsub.s32 %v5461, %v5463
  %v5465 = vrot.slane %v5451, %v5464
  %v5466 = vcombine.low %v5410, %v5426
  %v5467 = vcombine.high %v5410, %v5426
  %v5469 = vunpack.c.l.s4 1934713408
  %v5470 = vunpack.c.0.s8 %v5469
  %v5471 = vlaneseq
  %v5472 = vshrl.u32 %v5471, 7
  %v5473 = vsub.s32 %v5470, %v5472
  %v5474 = vrot.slane %v5466, %v5473
  %v5476 = vunpack.c.l.s4 1934713408
  %v5477 = vunpack.c.0.s8 %v5476
  %v5478 = vlaneseq
  %v5479 = vshrl.u32 %v5478, 7
  %v5480 = vsub.s32 %v5477, %v5479
  %v5481 = vrot.slane %v5467, %v5480
  %v5482 = vcombine.low %v5417, %v5433
  %v5483 = vcombine.high %v5417, %v5433
  %v5485 = vunpack.c.l.s4 1934713408
  %v5486 = vunpack.c.0.s8 %v5485
  %v5487 = vlaneseq
  %v5488 = vshrl.u32 %v5487, 7
  %v5489 = vsub.s32 %v5486, %v5488
  %v5490 = vrot.slane %v5482, %v5489
  %v5492 = vunpack.c.l.s4 1934713408
  %v5493 = vunpack.c.0.s8 %v5492
  %v5494 = vlaneseq
  %v5495 = vshrl.u32 %v5494, 7
  %v5496 = vsub.s32 %v5493, %v5495
  %v5497 = vrot.slane %v5483, %v5496
  %v5498 = vcombine.low %v5442, %v5474
  %v5499 = vcombine.high %v5442, %v5474
  %v5500 = vcombine.low %v5449, %v5481
  %v5501 = vcombine.high %v5449, %v5481
  %v5502 = vcombine.low %v5458, %v5490
  %v5503 = vcombine.high %v5458, %v5490
  %v5504 = vcombine.low %v5465, %v5497
  %v5505 = vcombine.high %v5465, %v5497
  %v5506 = vcombine.low %v4546, %v4548
  %v5507 = vcombine.high %v4546, %v4548
  %v5509 = vunpack.c.l.s4 1983009808
  %v5510 = vunpack.c.0.s8 %v5509
  %v5511 = vlaneseq
  %v5512 = vshrl.u32 %v5511, 7
  %v5513 = vsub.s32 %v5510, %v5512
  %v5514 = vrot.slane %v5506, %v5513
  %v5516 = vunpack.c.l.s4 1983009808
  %v5517 = vunpack.c.0.s8 %v5516
  %v5518 = vlaneseq
  %v5519 = vshrl.u32 %v5518, 7
  %v5520 = vsub.s32 %v5517, %v5519
  %v5521 = vrot.slane %v5507, %v5520
  %v5522 = vcombine.low %v4547, %v4549
  %v5523 = vcombine.high %v4547, %v4549
  %v5525 = vunpack.c.l.s4 1983009808
  %v5526 = vunpack.c.0.s8 %v5525
  %v5527 = vlaneseq
  %v5528 = vshrl.u32 %v5527, 7
  %v5529 = vsub.s32 %v5526, %v5528
  %v5530 = vrot.slane %v5522, %v5529
  %v5532 = vunpack.c.l.s4 1983009808
  %v5533 = vunpack.c.0.s8 %v5532
  %v5534 = vlaneseq
  %v5535 = vshrl.u32 %v5534, 7
  %v5536 = vsub.s32 %v5533, %v5535
  %v5537 = vrot.slane %v5523, %v5536
  %v5538 = vcombine.low %v4550, %v4552
  %v5539 = vcombine.high %v4550, %v4552
  %v5541 = vunpack.c.l.s4 1983009808
  %v5542 = vunpack.c.0.s8 %v5541
  %v5543 = vlaneseq
  %v5544 = vshrl.u32 %v5543, 7
  %v5545 = vsub.s32 %v5542, %v5544
  %v5546 = vrot.slane %v5538, %v5545
  %v5548 = vunpack.c.l.s4 1983009808
  %v5549 = vunpack.c.0.s8 %v5548
  %v5550 = vlaneseq
  %v5551 = vshrl.u32 %v5550, 7
  %v5552 = vsub.s32 %v5549, %v5551
  %v5553 = vrot.slane %v5539, %v5552
  %v5554 = vcombine.low %v4551, %v4553
  %v5555 = vcombine.high %v4551, %v4553
  %v5557 = vunpack.c.l.s4 1983009808
  %v5558 = vunpack.c.0.s8 %v5557
  %v5559 = vlaneseq
  %v5560 = vshrl.u32 %v5559, 7
  %v5561 = vsub.s32 %v5558, %v5560
  %v5562 = vrot.slane %v5554, %v5561
  %v5564 = vunpack.c.l.s4 1983009808
  %v5565 = vunpack.c.0.s8 %v5564
  %v5566 = vlaneseq
  %v5567 = vshrl.u32 %v5566, 7
  %v5568 = vsub.s32 %v5565, %v5567
  %v5569 = vrot.slane %v5555, %v5568
  %v5570 = vcombine.low %v5514, %v5530
  %v5571 = vcombine.high %v5514, %v5530
  %v5573 = vunpack.c.l.s4 1934713408
  %v5574 = vunpack.c.0.s8 %v5573
  %v5575 = vlaneseq
  %v5576 = vshrl.u32 %v5575, 7
  %v5577 = vsub.s32 %v5574, %v5576
  %v5578 = vrot.slane %v5570, %v5577
  %v5580 = vunpack.c.l.s4 1934713408
  %v5581 = vunpack.c.0.s8 %v5580
  %v5582 = vlaneseq
  %v5583 = vshrl.u32 %v5582, 7
  %v5584 = vsub.s32 %v5581, %v5583
  %v5585 = vrot.slane %v5571, %v5584
  %v5586 = vcombine.low %v5521, %v5537
  %v5587 = vcombine.high %v5521, %v5537
  %v5589 = vunpack.c.l.s4 1934713408
  %v5590 = vunpack.c.0.s8 %v5589
  %v5591 = vlaneseq
  %v5592 = vshrl.u32 %v5591, 7
  %v5593 = vsub.s32 %v5590, %v5592
  %v5594 = vrot.slane %v5586, %v5593
  %v5596 = vunpack.c.l.s4 1934713408
  %v5597 = vunpack.c.0.s8 %v5596
  %v5598 = vlaneseq
  %v5599 = vshrl.u32 %v5598, 7
  %v5600 = vsub.s32 %v5597, %v5599
  %v5601 = vrot.slane %v5587, %v5600
  %v5602 = vcombine.low %v5546, %v5562
  %v5603 = vcombine.high %v5546, %v5562
  %v5605 = vunpack.c.l.s4 1934713408
  %v5606 = vunpack.c.0.s8 %v5605
  %v5607 = vlaneseq
  %v5608 = vshrl.u32 %v5607, 7
  %v5609 = vsub.s32 %v5606, %v5608
  %v5610 = vrot.slane %v5602, %v5609
  %v5612 = vunpack.c.l.s4 1934713408
  %v5613 = vunpack.c.0.s8 %v5612
  %v5614 = vlaneseq
  %v5615 = vshrl.u32 %v5614, 7
  %v5616 = vsub.s32 %v5613, %v5615
  %v5617 = vrot.slane %v5603, %v5616
  %v5618 = vcombine.low %v5553, %v5569
  %v5619 = vcombine.high %v5553, %v5569
  %v5621 = vunpack.c.l.s4 1934713408
  %v5622 = vunpack.c.0.s8 %v5621
  %v5623 = vlaneseq
  %v5624 = vshrl.u32 %v5623, 7
  %v5625 = vsub.s32 %v5622, %v5624
  %v5626 = vrot.slane %v5618, %v5625
  %v5628 = vunpack.c.l.s4 1934713408
  %v5629 = vunpack.c.0.s8 %v5628
  %v5630 = vlaneseq
  %v5631 = vshrl.u32 %v5630, 7
  %v5632 = vsub.s32 %v5629, %v5631
  %v5633 = vrot.slane %v5619, %v5632
  %v5634 = vcombine.low %v5578, %v5610
  %v5635 = vcombine.high %v5578, %v5610
  %v5636 = vcombine.low %v5585, %v5617
  %v5637 = vcombine.high %v5585, %v5617
  %v5638 = vcombine.low %v5594, %v5626
  %v5639 = vcombine.high %v5594, %v5626
  %v5640 = vcombine.low %v5601, %v5633
  %v5641 = vcombine.high %v5601, %v5633
  %v5642 = vcombine.low %v4818, %v4820
  %v5643 = vcombine.high %v4818, %v4820
  %v5645 = vunpack.c.l.s4 1983009808
  %v5646 = vunpack.c.0.s8 %v5645
  %v5647 = vlaneseq
  %v5648 = vshrl.u32 %v5647, 7
  %v5649 = vsub.s32 %v5646, %v5648
  %v5650 = vrot.slane %v5642, %v5649
  %v5652 = vunpack.c.l.s4 1983009808
  %v5653 = vunpack.c.0.s8 %v5652
  %v5654 = vlaneseq
  %v5655 = vshrl.u32 %v5654, 7
  %v5656 = vsub.s32 %v5653, %v5655
  %v5657 = vrot.slane %v5643, %v5656
  %v5658 = vcombine.low %v4819, %v4821
  %v5659 = vcombine.high %v4819, %v4821
  %v5661 = vunpack.c.l.s4 1983009808
  %v5662 = vunpack.c.0.s8 %v5661
  %v5663 = vlaneseq
  %v5664 = vshrl.u32 %v5663, 7
  %v5665 = vsub.s32 %v5662, %v5664
  %v5666 = vrot.slane %v5658, %v5665
  %v5668 = vunpack.c.l.s4 1983009808
  %v5669 = vunpack.c.0.s8 %v5668
  %v5670 = vlaneseq
  %v5671 = vshrl.u32 %v5670, 7
  %v5672 = vsub.s32 %v5669, %v5671
  %v5673 = vrot.slane %v5659, %v5672
  %v5674 = vcombine.low %v4822, %v4824
  %v5675 = vcombine.high %v4822, %v4824
  %v5677 = vunpack.c.l.s4 1983009808
  %v5678 = vunpack.c.0.s8 %v5677
  %v5679 = vlaneseq
  %v5680 = vshrl.u32 %v5679, 7
  %v5681 = vsub.s32 %v5678, %v5680
  %v5682 = vrot.slane %v5674, %v5681
  %v5684 = vunpack.c.l.s4 1983009808
  %v5685 = vunpack.c.0.s8 %v5684
  %v5686 = vlaneseq
  %v5687 = vshrl.u32 %v5686, 7
  %v5688 = vsub.s32 %v5685, %v5687
  %v5689 = vrot.slane %v5675, %v5688
  %v5690 = vcombine.low %v4823, %v4825
  %v5691 = vcombine.high %v4823, %v4825
  %v5693 = vunpack.c.l.s4 1983009808
  %v5694 = vunpack.c.0.s8 %v5693
  %v5695 = vlaneseq
  %v5696 = vshrl.u32 %v5695, 7
  %v5697 = vsub.s32 %v5694, %v5696
  %v5698 = vrot.slane %v5690, %v5697
  %v5700 = vunpack.c.l.s4 1983009808
  %v5701 = vunpack.c.0.s8 %v5700
  %v5702 = vlaneseq
  %v5703 = vshrl.u32 %v5702, 7
  %v5704 = vsub.s32 %v5701, %v5703
  %v5705 = vrot.slane %v5691, %v5704
  %v5706 = vcombine.low %v5650, %v5666
  %v5707 = vcombine.high %v5650, %v5666
  %v5709 = vunpack.c.l.s4 1934713408
  %v5710 = vunpack.c.0.s8 %v5709
  %v5711 = vlaneseq
  %v5712 = vshrl.u32 %v5711, 7
  %v5713 = vsub.s32 %v5710, %v5712
  %v5714 = vrot.slane %v5706, %v5713
  %v5716 = vunpack.c.l.s4 1934713408
  %v5717 = vunpack.c.0.s8 %v5716
  %v5718 = vlaneseq
  %v5719 = vshrl.u32 %v5718, 7
  %v5720 = vsub.s32 %v5717, %v5719
  %v5721 = vrot.slane %v5707, %v5720
  %v5722 = vcombine.low %v5657, %v5673
  %v5723 = vcombine.high %v5657, %v5673
  %v5725 = vunpack.c.l.s4 1934713408
  %v5726 = vunpack.c.0.s8 %v5725
  %v5727 = vlaneseq
  %v5728 = vshrl.u32 %v5727, 7
  %v5729 = vsub.s32 %v5726, %v5728
  %v5730 = vrot.slane %v5722, %v5729
  %v5732 = vunpack.c.l.s4 1934713408
  %v5733 = vunpack.c.0.s8 %v5732
  %v5734 = vlaneseq
  %v5735 = vshrl.u32 %v5734, 7
  %v5736 = vsub.s32 %v5733, %v5735
  %v5737 = vrot.slane %v5723, %v5736
  %v5738 = vcombine.low %v5682, %v5698
  %v5739 = vcombine.high %v5682, %v5698
  %v5741 = vunpack.c.l.s4 1934713408
  %v5742 = vunpack.c.0.s8 %v5741
  %v5743 = vlaneseq
  %v5744 = vshrl.u32 %v5743, 7
  %v5745 = vsub.s32 %v5742, %v5744
  %v5746 = vrot.slane %v5738, %v5745
  %v5748 = vunpack.c.l.s4 1934713408
  %v5749 = vunpack.c.0.s8 %v5748
  %v5750 = vlaneseq
  %v5751 = vshrl.u32 %v5750, 7
  %v5752 = vsub.s32 %v5749, %v5751
  %v5753 = vrot.slane %v5739, %v5752
  %v5754 = vcombine.low %v5689, %v5705
  %v5755 = vcombine.high %v5689, %v5705
  %v5757 = vunpack.c.l.s4 1934713408
  %v5758 = vunpack.c.0.s8 %v5757
  %v5759 = vlaneseq
  %v5760 = vshrl.u32 %v5759, 7
  %v5761 = vsub.s32 %v5758, %v5760
  %v5762 = vrot.slane %v5754, %v5761
  %v5764 = vunpack.c.l.s4 1934713408
  %v5765 = vunpack.c.0.s8 %v5764
  %v5766 = vlaneseq
  %v5767 = vshrl.u32 %v5766, 7
  %v5768 = vsub.s32 %v5765, %v5767
  %v5769 = vrot.slane %v5755, %v5768
  %v5770 = vcombine.low %v5714, %v5746
  %v5771 = vcombine.high %v5714, %v5746
  %v5772 = vcombine.low %v5721, %v5753
  %v5773 = vcombine.high %v5721, %v5753
  %v5774 = vcombine.low %v5730, %v5762
  %v5775 = vcombine.high %v5730, %v5762
  %v5776 = vcombine.low %v5737, %v5769
  %v5777 = vcombine.high %v5737, %v5769
  %v5778 = vcombine.low %v4682, %v4684
  %v5779 = vcombine.high %v4682, %v4684
  %v5781 = vunpack.c.l.s4 1983009808
  %v5782 = vunpack.c.0.s8 %v5781
  %v5783 = vlaneseq
  %v5784 = vshrl.u32 %v5783, 7
  %v5785 = vsub.s32 %v5782, %v5784
  %v5786 = vrot.slane %v5778, %v5785
  %v5788 = vunpack.c.l.s4 1983009808
  %v5789 = vunpack.c.0.s8 %v5788
  %v5790 = vlaneseq
  %v5791 = vshrl.u32 %v5790, 7
  %v5792 = vsub.s32 %v5789, %v5791
  %v5793 = vrot.slane %v5779, %v5792
  %v5794 = vcombine.low %v4683, %v4685
  %v5795 = vcombine.high %v4683, %v4685
  %v5797 = vunpack.c.l.s4 1983009808
  %v5798 = vunpack.c.0.s8 %v5797
  %v5799 = vlaneseq
  %v5800 = vshrl.u32 %v5799, 7
  %v5801 = vsub.s32 %v5798, %v5800
  %v5802 = vrot.slane %v5794, %v5801
  %v5804 = vunpack.c.l.s4 1983009808
  %v5805 = vunpack.c.0.s8 %v5804
  %v5806 = vlaneseq
  %v5807 = vshrl.u32 %v5806, 7
  %v5808 = vsub.s32 %v5805, %v5807
  %v5809 = vrot.slane %v5795, %v5808
  %v5810 = vcombine.low %v4686, %v4688
  %v5811 = vcombine.high %v4686, %v4688
  %v5813 = vunpack.c.l.s4 1983009808
  %v5814 = vunpack.c.0.s8 %v5813
  %v5815 = vlaneseq
  %v5816 = vshrl.u32 %v5815, 7
  %v5817 = vsub.s32 %v5814, %v5816
  %v5818 = vrot.slane %v5810, %v5817
  %v5820 = vunpack.c.l.s4 1983009808
  %v5821 = vunpack.c.0.s8 %v5820
  %v5822 = vlaneseq
  %v5823 = vshrl.u32 %v5822, 7
  %v5824 = vsub.s32 %v5821, %v5823
  %v5825 = vrot.slane %v5811, %v5824
  %v5826 = vcombine.low %v4687, %v4689
  %v5827 = vcombine.high %v4687, %v4689
  %v5829 = vunpack.c.l.s4 1983009808
  %v5830 = vunpack.c.0.s8 %v5829
  %v5831 = vlaneseq
  %v5832 = vshrl.u32 %v5831, 7
  %v5833 = vsub.s32 %v5830, %v5832
  %v5834 = vrot.slane %v5826, %v5833
  %v5836 = vunpack.c.l.s4 1983009808
  %v5837 = vunpack.c.0.s8 %v5836
  %v5838 = vlaneseq
  %v5839 = vshrl.u32 %v5838, 7
  %v5840 = vsub.s32 %v5837, %v5839
  %v5841 = vrot.slane %v5827, %v5840
  %v5842 = vcombine.low %v5786, %v5802
  %v5843 = vcombine.high %v5786, %v5802
  %v5845 = vunpack.c.l.s4 1934713408
  %v5846 = vunpack.c.0.s8 %v5845
  %v5847 = vlaneseq
  %v5848 = vshrl.u32 %v5847, 7
  %v5849 = vsub.s32 %v5846, %v5848
  %v5850 = vrot.slane %v5842, %v5849
  %v5852 = vunpack.c.l.s4 1934713408
  %v5853 = vunpack.c.0.s8 %v5852
  %v5854 = vlaneseq
  %v5855 = vshrl.u32 %v5854, 7
  %v5856 = vsub.s32 %v5853, %v5855
  %v5857 = vrot.slane %v5843, %v5856
  %v5858 = vcombine.low %v5793, %v5809
  %v5859 = vcombine.high %v5793, %v5809
  %v5861 = vunpack.c.l.s4 1934713408
  %v5862 = vunpack.c.0.s8 %v5861
  %v5863 = vlaneseq
  %v5864 = vshrl.u32 %v5863, 7
  %v5865 = vsub.s32 %v5862, %v5864
  %v5866 = vrot.slane %v5858, %v5865
  %v5868 = vunpack.c.l.s4 1934713408
  %v5869 = vunpack.c.0.s8 %v5868
  %v5870 = vlaneseq
  %v5871 = vshrl.u32 %v5870, 7
  %v5872 = vsub.s32 %v5869, %v5871
  %v5873 = vrot.slane %v5859, %v5872
  %v5874 = vcombine.low %v5818, %v5834
  %v5875 = vcombine.high %v5818, %v5834
  %v5877 = vunpack.c.l.s4 1934713408
  %v5878 = vunpack.c.0.s8 %v5877
  %v5879 = vlaneseq
  %v5880 = vshrl.u32 %v5879, 7
  %v5881 = vsub.s32 %v5878, %v5880
  %v5882 = vrot.slane %v5874, %v5881
  %v5884 = vunpack.c.l.s4 1934713408
  %v5885 = vunpack.c.0.s8 %v5884
  %v5886 = vlaneseq
  %v5887 = vshrl.u32 %v5886, 7
  %v5888 = vsub.s32 %v5885, %v5887
  %v5889 = vrot.slane %v5875, %v5888
  %v5890 = vcombine.low %v5825, %v5841
  %v5891 = vcombine.high %v5825, %v5841
  %v5893 = vunpack.c.l.s4 1934713408
  %v5894 = vunpack.c.0.s8 %v5893
  %v5895 = vlaneseq
  %v5896 = vshrl.u32 %v5895, 7
  %v5897 = vsub.s32 %v5894, %v5896
  %v5898 = vrot.slane %v5890, %v5897
  %v5900 = vunpack.c.l.s4 1934713408
  %v5901 = vunpack.c.0.s8 %v5900
  %v5902 = vlaneseq
  %v5903 = vshrl.u32 %v5902, 7
  %v5904 = vsub.s32 %v5901, %v5903
  %v5905 = vrot.slane %v5891, %v5904
  %v5906 = vcombine.low %v5850, %v5882
  %v5907 = vcombine.high %v5850, %v5882
  %v5908 = vcombine.low %v5857, %v5889
  %v5909 = vcombine.high %v5857, %v5889
  %v5910 = vcombine.low %v5866, %v5898
  %v5911 = vcombine.high %v5866, %v5898
  %v5912 = vcombine.low %v5873, %v5905
  %v5913 = vcombine.high %v5873, %v5905
  %v5914 = vcombine.low %v4954, %v4956
  %v5915 = vcombine.high %v4954, %v4956
  %v5917 = vunpack.c.l.s4 1983009808
  %v5918 = vunpack.c.0.s8 %v5917
  %v5919 = vlaneseq
  %v5920 = vshrl.u32 %v5919, 7
  %v5921 = vsub.s32 %v5918, %v5920
  %v5922 = vrot.slane %v5914, %v5921
  %v5924 = vunpack.c.l.s4 1983009808
  %v5925 = vunpack.c.0.s8 %v5924
  %v5926 = vlaneseq
  %v5927 = vshrl.u32 %v5926, 7
  %v5928 = vsub.s32 %v5925, %v5927
  %v5929 = vrot.slane %v5915, %v5928
  %v5930 = vcombine.low %v4955, %v4957
  %v5931 = vcombine.high %v4955, %v4957
  %v5933 = vunpack.c.l.s4 1983009808
  %v5934 = vunpack.c.0.s8 %v5933
  %v5935 = vlaneseq
  %v5936 = vshrl.u32 %v5935, 7
  %v5937 = vsub.s32 %v5934, %v5936
  %v5938 = vrot.slane %v5930, %v5937
  %v5940 = vunpack.c.l.s4 1983009808
  %v5941 = vunpack.c.0.s8 %v5940
  %v5942 = vlaneseq
  %v5943 = vshrl.u32 %v5942, 7
  %v5944 = vsub.s32 %v5941, %v5943
  %v5945 = vrot.slane %v5931, %v5944
  %v5946 = vcombine.low %v4958, %v4960
  %v5947 = vcombine.high %v4958, %v4960
  %v5949 = vunpack.c.l.s4 1983009808
  %v5950 = vunpack.c.0.s8 %v5949
  %v5951 = vlaneseq
  %v5952 = vshrl.u32 %v5951, 7
  %v5953 = vsub.s32 %v5950, %v5952
  %v5954 = vrot.slane %v5946, %v5953
  %v5956 = vunpack.c.l.s4 1983009808
  %v5957 = vunpack.c.0.s8 %v5956
  %v5958 = vlaneseq
  %v5959 = vshrl.u32 %v5958, 7
  %v5960 = vsub.s32 %v5957, %v5959
  %v5961 = vrot.slane %v5947, %v5960
  %v5962 = vcombine.low %v4959, %v4961
  %v5963 = vcombine.high %v4959, %v4961
  %v5965 = vunpack.c.l.s4 1983009808
  %v5966 = vunpack.c.0.s8 %v5965
  %v5967 = vlaneseq
  %v5968 = vshrl.u32 %v5967, 7
  %v5969 = vsub.s32 %v5966, %v5968
  %v5970 = vrot.slane %v5962, %v5969
  %v5972 = vunpack.c.l.s4 1983009808
  %v5973 = vunpack.c.0.s8 %v5972
  %v5974 = vlaneseq
  %v5975 = vshrl.u32 %v5974, 7
  %v5976 = vsub.s32 %v5973, %v5975
  %v5977 = vrot.slane %v5963, %v5976
  %v5978 = vcombine.low %v5922, %v5938
  %v5979 = vcombine.high %v5922, %v5938
  %v5981 = vunpack.c.l.s4 1934713408
  %v5982 = vunpack.c.0.s8 %v5981
  %v5983 = vlaneseq
  %v5984 = vshrl.u32 %v5983, 7
  %v5985 = vsub.s32 %v5982, %v5984
  %v5986 = vrot.slane %v5978, %v5985
  %v5988 = vunpack.c.l.s4 1934713408
  %v5989 = vunpack.c.0.s8 %v5988
  %v5990 = vlaneseq
  %v5991 = vshrl.u32 %v5990, 7
  %v5992 = vsub.s32 %v5989, %v5991
  %v5993 = vrot.slane %v5979, %v5992
  %v5994 = vcombine.low %v5929, %v5945
  %v5995 = vcombine.high %v5929, %v5945
  %v5997 = vunpack.c.l.s4 1934713408
  %v5998 = vunpack.c.0.s8 %v5997
  %v5999 = vlaneseq
  %v6000 = vshrl.u32 %v5999, 7
  %v6001 = vsub.s32 %v5998, %v6000
  %v6002 = vrot.slane %v5994, %v6001
  %v6004 = vunpack.c.l.s4 1934713408
  %v6005 = vunpack.c.0.s8 %v6004
  %v6006 = vlaneseq
  %v6007 = vshrl.u32 %v6006, 7
  %v6008 = vsub.s32 %v6005, %v6007
  %v6009 = vrot.slane %v5995, %v6008
  %v6010 = vcombine.low %v5954, %v5970
  %v6011 = vcombine.high %v5954, %v5970
  %v6013 = vunpack.c.l.s4 1934713408
  %v6014 = vunpack.c.0.s8 %v6013
  %v6015 = vlaneseq
  %v6016 = vshrl.u32 %v6015, 7
  %v6017 = vsub.s32 %v6014, %v6016
  %v6018 = vrot.slane %v6010, %v6017
  %v6020 = vunpack.c.l.s4 1934713408
  %v6021 = vunpack.c.0.s8 %v6020
  %v6022 = vlaneseq
  %v6023 = vshrl.u32 %v6022, 7
  %v6024 = vsub.s32 %v6021, %v6023
  %v6025 = vrot.slane %v6011, %v6024
  %v6026 = vcombine.low %v5961, %v5977
  %v6027 = vcombine.high %v5961, %v5977
  %v6029 = vunpack.c.l.s4 1934713408
  %v6030 = vunpack.c.0.s8 %v6029
  %v6031 = vlaneseq
  %v6032 = vshrl.u32 %v6031, 7
  %v6033 = vsub.s32 %v6030, %v6032
  %v6034 = vrot.slane %v6026, %v6033
  %v6036 = vunpack.c.l.s4 1934713408
  %v6037 = vunpack.c.0.s8 %v6036
  %v6038 = vlaneseq
  %v6039 = vshrl.u32 %v6038, 7
  %v6040 = vsub.s32 %v6037, %v6039
  %v6041 = vrot.slane %v6027, %v6040
  %v6042 = vcombine.low %v5986, %v6018
  %v6043 = vcombine.high %v5986, %v6018
  %v6044 = vcombine.low %v5993, %v6025
  %v6045 = vcombine.high %v5993, %v6025
  %v6046 = vcombine.low %v6002, %v6034
  %v6047 = vcombine.high %v6002, %v6034
  %v6048 = vcombine.low %v6009, %v6041
  %v6049 = vcombine.high %v6009, %v6041
  %6054 = vrot.lane.b32.xlu0 %v5091, 8
  %v6055 = vpop.permute.xlu0 %6054
  %6056 = vrot.lane.b32.xlu0 %v5227, 8
  %v6057 = vpop.permute.xlu0 %6056
  %6058 = vrot.lane.b32.xlu0 %v5635, 8
  %v6059 = vpop.permute.xlu0 %6058
  %6060 = vrot.lane.b32.xlu0 %v5771, 8
  %v6061 = vpop.permute.xlu0 %6060
  %6070 = vrot.lane.b32.xlu0 %v5092, 16
  %v6071 = vpop.permute.xlu0 %6070
  %6072 = vrot.lane.b32.xlu0 %v5228, 16
  %v6073 = vpop.permute.xlu0 %6072
  %6074 = vrot.lane.b32.xlu0 %v5636, 16
  %v6075 = vpop.permute.xlu0 %6074
  %6076 = vrot.lane.b32.xlu0 %v5772, 16
  %v6077 = vpop.permute.xlu0 %6076
  %6086 = vrot.lane.b32.xlu0 %v5093, 24
  %v6087 = vpop.permute.xlu0 %6086
  %6088 = vrot.lane.b32.xlu0 %v5229, 24
  %v6089 = vpop.permute.xlu0 %6088
  %6090 = vrot.lane.b32.xlu0 %v5637, 24
  %v6091 = vpop.permute.xlu0 %6090
  %6092 = vrot.lane.b32.xlu0 %v5773, 24
  %v6093 = vpop.permute.xlu0 %6092
  %6102 = vrot.lane.b32.xlu0 %v5094, 32
  %v6103 = vpop.permute.xlu0 %6102
  %6104 = vrot.lane.b32.xlu0 %v5230, 32
  %v6105 = vpop.permute.xlu0 %6104
  %6106 = vrot.lane.b32.xlu0 %v5638, 32
  %v6107 = vpop.permute.xlu0 %6106
  %6108 = vrot.lane.b32.xlu0 %v5774, 32
  %v6109 = vpop.permute.xlu0 %6108
  %6118 = vrot.lane.b32.xlu0 %v5095, 40
  %v6119 = vpop.permute.xlu0 %6118
  %6120 = vrot.lane.b32.xlu0 %v5231, 40
  %v6121 = vpop.permute.xlu0 %6120
  %6122 = vrot.lane.b32.xlu0 %v5639, 40
  %v6123 = vpop.permute.xlu0 %6122
  %6124 = vrot.lane.b32.xlu0 %v5775, 40
  %v6125 = vpop.permute.xlu0 %6124
  %6134 = vrot.lane.b32.xlu0 %v5096, 48
  %v6135 = vpop.permute.xlu0 %6134
  %6136 = vrot.lane.b32.xlu0 %v5232, 48
  %v6137 = vpop.permute.xlu0 %6136
  %6138 = vrot.lane.b32.xlu0 %v5640, 48
  %v6139 = vpop.permute.xlu0 %6138
  %6140 = vrot.lane.b32.xlu0 %v5776, 48
  %v6141 = vpop.permute.xlu0 %6140
  %6150 = vrot.lane.b32.xlu0 %v5097, 56
  %v6151 = vpop.permute.xlu0 %6150
  %6152 = vrot.lane.b32.xlu0 %v5233, 56
  %v6153 = vpop.permute.xlu0 %6152
  %6154 = vrot.lane.b32.xlu0 %v5641, 56
  %v6155 = vpop.permute.xlu0 %6154
  %6156 = vrot.lane.b32.xlu0 %v5777, 56
  %v6157 = vpop.permute.xlu0 %6156
  %6166 = vrot.lane.b32.xlu0 %v5362, 64
  %v6167 = vpop.permute.xlu0 %6166
  %6168 = vrot.lane.b32.xlu0 %v5498, 64
  %v6169 = vpop.permute.xlu0 %6168
  %6170 = vrot.lane.b32.xlu0 %v5906, 64
  %v6171 = vpop.permute.xlu0 %6170
  %6172 = vrot.lane.b32.xlu0 %v6042, 64
  %v6173 = vpop.permute.xlu0 %6172
  %6182 = vrot.lane.b32.xlu0 %v5363, 72
  %v6183 = vpop.permute.xlu0 %6182
  %6184 = vrot.lane.b32.xlu0 %v5499, 72
  %v6185 = vpop.permute.xlu0 %6184
  %6186 = vrot.lane.b32.xlu0 %v5907, 72
  %v6187 = vpop.permute.xlu0 %6186
  %6188 = vrot.lane.b32.xlu0 %v6043, 72
  %v6189 = vpop.permute.xlu0 %6188
  %6198 = vrot.lane.b32.xlu0 %v5364, 80
  %v6199 = vpop.permute.xlu0 %6198
  %6200 = vrot.lane.b32.xlu0 %v5500, 80
  %v6201 = vpop.permute.xlu0 %6200
  %6202 = vrot.lane.b32.xlu0 %v5908, 80
  %v6203 = vpop.permute.xlu0 %6202
  %6204 = vrot.lane.b32.xlu0 %v6044, 80
  %v6205 = vpop.permute.xlu0 %6204
  %6214 = vrot.lane.b32.xlu0 %v5365, 88
  %v6215 = vpop.permute.xlu0 %6214
  %6216 = vrot.lane.b32.xlu0 %v5501, 88
  %v6217 = vpop.permute.xlu0 %6216
  %6218 = vrot.lane.b32.xlu0 %v5909, 88
  %v6219 = vpop.permute.xlu0 %6218
  %6220 = vrot.lane.b32.xlu0 %v6045, 88
  %v6221 = vpop.permute.xlu0 %6220
  %6230 = vrot.lane.b32.xlu0 %v5366, 96
  %v6231 = vpop.permute.xlu0 %6230
  %6232 = vrot.lane.b32.xlu0 %v5502, 96
  %v6233 = vpop.permute.xlu0 %6232
  %6234 = vrot.lane.b32.xlu0 %v5910, 96
  %v6235 = vpop.permute.xlu0 %6234
  %6236 = vrot.lane.b32.xlu0 %v6046, 96
  %v6237 = vpop.permute.xlu0 %6236
  %6246 = vrot.lane.b32.xlu0 %v5367, 104
  %v6247 = vpop.permute.xlu0 %6246
  %6248 = vrot.lane.b32.xlu0 %v5503, 104
  %v6249 = vpop.permute.xlu0 %6248
  %6250 = vrot.lane.b32.xlu0 %v5911, 104
  %v6251 = vpop.permute.xlu0 %6250
  %6252 = vrot.lane.b32.xlu0 %v6047, 104
  %v6253 = vpop.permute.xlu0 %6252
  %6262 = vrot.lane.b32.xlu0 %v5368, 112
  %v6263 = vpop.permute.xlu0 %6262
  %6264 = vrot.lane.b32.xlu0 %v5504, 112
  %v6265 = vpop.permute.xlu0 %6264
  %6266 = vrot.lane.b32.xlu0 %v5912, 112
  %v6267 = vpop.permute.xlu0 %6266
  %6268 = vrot.lane.b32.xlu0 %v6048, 112
  %v6269 = vpop.permute.xlu0 %6268
  %6278 = vrot.lane.b32.xlu0 %v5369, 120
  %v6279 = vpop.permute.xlu0 %6278
  %6280 = vrot.lane.b32.xlu0 %v5505, 120
  %v6281 = vpop.permute.xlu0 %6280
  %6282 = vrot.lane.b32.xlu0 %v5913, 120
  %v6283 = vpop.permute.xlu0 %6282
  %6284 = vrot.lane.b32.xlu0 %v6049, 120
  %v6285 = vpop.permute.xlu0 %6284
  %v6290 = vsel %vm2706, %v5090, %v6055
  %v6291 = vsel %vm2706, %v5226, %v6057
  %v6292 = vsel %vm2706, %v5634, %v6059
  %v6293 = vsel %vm2706, %v5770, %v6061
  %vm6294 = vcmask 130048
  %v6295 = vsel %vm6294, %v6290, %v6071
  %v6296 = vsel %vm6294, %v6291, %v6073
  %v6297 = vsel %vm6294, %v6292, %v6075
  %v6298 = vsel %vm6294, %v6293, %v6077
  %vm6299 = vcmask 195584
  %v6300 = vsel %vm6299, %v6295, %v6087
  %v6301 = vsel %vm6299, %v6296, %v6089
  %v6302 = vsel %vm6299, %v6297, %v6091
  %v6303 = vsel %vm6299, %v6298, %v6093
  %vm6304 = vcmask 261120
  %v6305 = vsel %vm6304, %v6300, %v6103
  %v6306 = vsel %vm6304, %v6301, %v6105
  %v6307 = vsel %vm6304, %v6302, %v6107
  %v6308 = vsel %vm6304, %v6303, %v6109
  %vm6309 = vcmask 326656
  %v6310 = vsel %vm6309, %v6305, %v6119
  %v6311 = vsel %vm6309, %v6306, %v6121
  %v6312 = vsel %vm6309, %v6307, %v6123
  %v6313 = vsel %vm6309, %v6308, %v6125
  %vm6314 = vcmask 392192
  %v6315 = vsel %vm6314, %v6310, %v6135
  %v6316 = vsel %vm6314, %v6311, %v6137
  %v6317 = vsel %vm6314, %v6312, %v6139
  %v6318 = vsel %vm6314, %v6313, %v6141
  %vm6319 = vcmask 457728
  %v6320 = vsel %vm6319, %v6315, %v6151
  %v6321 = vsel %vm6319, %v6316, %v6153
  %v6322 = vsel %vm6319, %v6317, %v6155
  %v6323 = vsel %vm6319, %v6318, %v6157
  %vm6324 = vcmask 523264
  %v6325 = vsel %vm6324, %v6320, %v6167
  %v6326 = vsel %vm6324, %v6321, %v6169
  %v6327 = vsel %vm6324, %v6322, %v6171
  %v6328 = vsel %vm6324, %v6323, %v6173
  %vm6329 = vcmask 588800
  %v6330 = vsel %vm6329, %v6325, %v6183
  %v6331 = vsel %vm6329, %v6326, %v6185
  %v6332 = vsel %vm6329, %v6327, %v6187
  %v6333 = vsel %vm6329, %v6328, %v6189
  %vm6334 = vcmask 654336
  %v6335 = vsel %vm6334, %v6330, %v6199
  %v6336 = vsel %vm6334, %v6331, %v6201
  %v6337 = vsel %vm6334, %v6332, %v6203
  %v6338 = vsel %vm6334, %v6333, %v6205
  %vm6339 = vcmask 719872
  %v6340 = vsel %vm6339, %v6335, %v6215
  %v6341 = vsel %vm6339, %v6336, %v6217
  %v6342 = vsel %vm6339, %v6337, %v6219
  %v6343 = vsel %vm6339, %v6338, %v6221
  %vm6344 = vcmask 785408
  %v6345 = vsel %vm6344, %v6340, %v6231
  %v6346 = vsel %vm6344, %v6341, %v6233
  %v6347 = vsel %vm6344, %v6342, %v6235
  %v6348 = vsel %vm6344, %v6343, %v6237
  %vm6349 = vcmask 850944
  %v6350 = vsel %vm6349, %v6345, %v6247
  %v6351 = vsel %vm6349, %v6346, %v6249
  %v6352 = vsel %vm6349, %v6347, %v6251
  %v6353 = vsel %vm6349, %v6348, %v6253
  %vm6354 = vcmask 916480
  %v6355 = vsel %vm6354, %v6350, %v6263
  %v6356 = vsel %vm6354, %v6351, %v6265
  %v6357 = vsel %vm6354, %v6352, %v6267
  %v6358 = vsel %vm6354, %v6353, %v6269
  %vm6359 = vcmask 982016
  %v6360 = vsel %vm6359, %v6355, %v6279
  %v6361 = vsel %vm6359, %v6356, %v6281
  %v6362 = vsel %vm6359, %v6357, %v6283
  %v6363 = vsel %vm6359, %v6358, %v6285
  %6364 = vst [vmem:[%s3] sm:$0xff] %v6360
  %6365 = vst [vmem:[%s3 + $0x8] sm:$0xff] %v6361
  %6366 = vst [vmem:[%s3 + $0x10] sm:$0xff] %v6362
  %6367 = vst [vmem:[%s3 + $0x18] sm:$0xff] %v6363
  // Predicated region
  $region14: #{blurpool_conv2d.1} parent=0 // pred_check
    _
  $region15: #{blurpool_conv2d.1} parent=0 // pred_check_branch
    %6369 = sbr.rel (0) target = $region17
  $region16: #{blurpool_conv2d.1} parent=0 // pred_region
    _
  $region17: #{blurpool_conv2d.1} parent=0 // pred_fallthru
    _
  // Predicated region
  $region18: #{blurpool_conv2d.1} parent=0 // pred_check
    _
  $region19: #{blurpool_conv2d.1} parent=0 // pred_check_branch
    %6371 = sbr.rel (0) target = $region21
  $region20: #{blurpool_conv2d.1} parent=0 // pred_region
    _
  $region21: #{blurpool_conv2d.1} parent=0 // pred_fallthru
    _

</llo_original>
